<compile_context>
chip_gen: v5e
topology: v5e:2x2
jax: 0.10.0
libtpu: 0.0.40
codegen_flags: <defaults>
</compile_context>

<pallas_src>
import functools

import jax
import jax.numpy as jnp
from jax.experimental import pallas as pl
from jax.experimental.pallas import tpu as pltpu

VMEM = pltpu.MemorySpace.VMEM


def _vspecs(n):
    return [pl.BlockSpec(memory_space=VMEM) for _ in range(n)]


# ---------------------------------------------------------------------------
# Small synthetic config (stands in for bert-base-uncased + Config.args)
# ---------------------------------------------------------------------------
class Config:
    vocab_size = 100
    type_vocab_size = 2
    max_position = 16
    hidden = 32            # stands in for 768
    heads = 2
    inter = 128            # 4 * hidden
    bert_layers = 2        # stands in for 12
    rnn_hidden_size = 32
    bidirectional = True
    num_layers = 1         # LSTM layers


# ---------------------------------------------------------------------------
# In-kernel helpers (f32 math)
# ---------------------------------------------------------------------------
def _layernorm(x, g, b, eps):
    mean = jnp.mean(x, axis=-1, keepdims=True)
    var = jnp.mean((x - mean) ** 2, axis=-1, keepdims=True)
    return (x - mean) * jax.lax.rsqrt(var + eps) * g + b


def _gelu(x):
    # TODO(synk): HF BERT uses erf-gelu; tanh approximation used here for
    # guaranteed Mosaic lowering of the transcendental (~1e-3 difference).
    c = 0.7978845608028654  # sqrt(2/pi)
    return 0.5 * x * (1.0 + jnp.tanh(c * (x + 0.044715 * x * x * x)))


# ---------------------------------------------------------------------------
# Kernel 1: embedding LayerNorm
# ---------------------------------------------------------------------------
def _embed_ln_kernel(x_ref, g_ref, b_ref, o_ref, *, eps):
    o_ref[...] = _layernorm(x_ref[...], g_ref[...], b_ref[...], eps)


def embed_layernorm(x, g, b, eps=1e-12):
    return pl.pallas_call(
        functools.partial(_embed_ln_kernel, eps=eps),
        out_shape=jax.ShapeDtypeStruct(x.shape, jnp.float32),
        in_specs=_vspecs(3),
        out_specs=pl.BlockSpec(memory_space=VMEM),
    )(x, g, b)


# ---------------------------------------------------------------------------
# Kernel 2: one fully fused BERT encoder layer
#   (QKV proj + attention + output proj + LN1 + FFN + LN2, all VMEM resident)
# ---------------------------------------------------------------------------
def _bert_layer_kernel(x_ref, mask_ref,
                       qkv_w_ref, qkv_b_ref, ao_w_ref, ao_b_ref,
                       ln1_g_ref, ln1_b_ref,
                       i_w_ref, i_b_ref, fo_w_ref, fo_b_ref,
                       ln2_g_ref, ln2_b_ref,
                       o_ref, *, B, S, H, dh, eps):
    D = H * dh
    x = x_ref[...]                                   # (B*S, D) f32
    x_bf = x.astype(jnp.bfloat16)

    # Fused Q|K|V projection on the MXU (bf16 in, f32 accumulate).
    qkv = jnp.dot(x_bf, qkv_w_ref[...], preferred_element_type=jnp.float32)
    qkv = qkv + qkv_b_ref[...]                       # (B*S, 3D) f32

    # Additive attention-mask bias built in-kernel from the (B, S) mask.
    neg_bias = (1.0 - mask_ref[...]) * -1e9          # (B, S)

    scale = dh ** -0.5                               # folded into Q
    q_all = (qkv[:, 0 * D:1 * D] * scale).reshape(B, S, D)
    k_all = qkv[:, 1 * D:2 * D].reshape(B, S, D)
    v_all = qkv[:, 2 * D:3 * D].reshape(B, S, D)

    ctx_heads = []
    for h in range(H):                               # static, tiny head count
        sl = slice(h * dh, (h + 1) * dh)
        q_h = q_all[:, :, sl].astype(jnp.bfloat16)
        k_h = k_all[:, :, sl].astype(jnp.bfloat16)
        v_h = v_all[:, :, sl].astype(jnp.bfloat16)
        s_h = jnp.einsum('bqd,bkd->bqk', q_h, k_h,
                         preferred_element_type=jnp.float32)   # (B,S,S) f32
        s_h = s_h + neg_bias[:, None, :]
        m = jnp.max(s_h, axis=-1, keepdims=True)
        p = jnp.exp(s_h - m)
        p = p * pl.reciprocal(jnp.sum(p, axis=-1, keepdims=True), approx=True)
        ctx_heads.append(
            jnp.einsum('bqk,bkd->bqd', p.astype(jnp.bfloat16), v_h,
                       preferred_element_type=jnp.float32))
    ctx = jnp.concatenate(ctx_heads, axis=-1).reshape(B * S, D)

    ao = jnp.dot(ctx.astype(jnp.bfloat16), ao_w_ref[...],
                 preferred_element_type=jnp.float32) + ao_b_ref[...]
    h1 = _layernorm(ao + x, ln1_g_ref[...], ln1_b_ref[...], eps)

    inter = jnp.dot(h1.astype(jnp.bfloat16), i_w_ref[...],
                    preferred_element_type=jnp.float32) + i_b_ref[...]
    inter = _gelu(inter)
    fo = jnp.dot(inter.astype(jnp.bfloat16), fo_w_ref[...],
                 preferred_element_type=jnp.float32) + fo_b_ref[...]
    o_ref[...] = _layernorm(fo + h1, ln2_g_ref[...], ln2_b_ref[...], eps)


def bert_layer(x, mask_f32, lp, B, S, H):
    D = x.shape[1]
    dh = D // H
    # TODO(synk): at real BERT scale (D=768, S=512) this kernel should take a
    # grid over the token axis with dimension_semantics=("parallel",) and a
    # vmem_limit_bytes budget (v7x 64 MiB VMEM, 2 TCs); at these demo shapes a
    # single whole-array VMEM block is optimal.
    return pl.pallas_call(
        functools.partial(_bert_layer_kernel, B=B, S=S, H=H, dh=dh, eps=1e-12),
        out_shape=jax.ShapeDtypeStruct((B * S, D), jnp.float32),
        in_specs=_vspecs(14),
        out_specs=pl.BlockSpec(memory_space=VMEM),
    )(x, mask_f32, lp["qkv_w"], lp["qkv_b"], lp["ao_w"], lp["ao_b"],
      lp["ln1_g"], lp["ln1_b"], lp["i_w"], lp["i_b"], lp["fo_w"], lp["fo_b"],
      lp["ln2_g"], lp["ln2_b"])


# ---------------------------------------------------------------------------
# Kernel 3: fused bidirectional LSTM (whole time loop) + Linear(2R, 1)
# ---------------------------------------------------------------------------
def _lstm_cls_kernel(x_ref, wih_f_ref, whh_f_ref, b_f_ref,
                     wih_b_ref, whh_b_ref, b_b_ref,
                     cls_w_ref, cls_b_ref, o_ref, *, S, R):
    B = x_ref.shape[1]
    # Weights are VMEM-resident for the whole recurrence (loaded once).
    wih_f = wih_f_ref[...]
    whh_f = whh_f_ref[...]
    b_f = b_f_ref[...]
    wih_b = wih_b_ref[...]
    whh_b = whh_b_ref[...]
    b_b = b_b_ref[...]

    def cell(x_t, h, c, wih, whh, b):
        gates = (jnp.dot(x_t.astype(jnp.bfloat16), wih,
                         preferred_element_type=jnp.float32)
                 + jnp.dot(h.astype(jnp.bfloat16), whh,
                           preferred_element_type=jnp.float32)
                 + b)                                  # (B, 4R) f32
        # PyTorch gate order i, f, g, o; 4R == 128 so each gate is a quarter
        # of one lane-aligned vreg row.
        i = jax.nn.sigmoid(gates[:, 0 * R:1 * R])
        f = jax.nn.sigmoid(gates[:, 1 * R:2 * R])
        g = jnp.tanh(gates[:, 2 * R:3 * R])
        o = jax.nn.sigmoid(gates[:, 3 * R:4 * R])
        c_new = f * c + i * g                          # cell state kept f32
        h_new = o * jnp.tanh(c_new)
        return h_new, c_new

    def step(t, carry):
        h_f, c_f, h_b, c_b = carry
        h_f, c_f = cell(x_ref[t], h_f, c_f, wih_f, whh_f, b_f)
        h_b, c_b = cell(x_ref[S - 1 - t], h_b, c_b, wih_b, whh_b, b_b)
        return (h_f, c_f, h_b, c_b)

    z = jnp.zeros((B, R), jnp.float32)
    h_f, _, h_b, _ = jax.lax.fori_loop(0, S, step, (z, z, z, z), unroll=True)

    # torch: cat((last_hidden[0], last_hidden[1]), dim=-1); dropout = identity
    last = jnp.concatenate([h_f, h_b], axis=-1)        # (B, 2R)
    # Classifier folded in as a VPU multiply + lane reduction (no N=1 matmul).
    o_ref[...] = (jnp.sum(last * cls_w_ref[...], axis=-1, keepdims=True)
                  + cls_b_ref[...])


def lstm_classifier(hidden_sbd, lstm, cls_w, cls_b):
    S, B, _ = hidden_sbd.shape
    R = lstm["whh_f"].shape[0]
    return pl.pallas_call(
        functools.partial(_lstm_cls_kernel, S=S, R=R),
        out_shape=jax.ShapeDtypeStruct((B, 1), jnp.float32),
        in_specs=_vspecs(9),
        out_specs=pl.BlockSpec(memory_space=VMEM),
    )(hidden_sbd, lstm["wih_f"], lstm["whh_f"], lstm["b_f"],
      lstm["wih_b"], lstm["whh_b"], lstm["b_b"], cls_w, cls_b)


# ---------------------------------------------------------------------------
# Model forward (embedding gathers in plain JAX, hot paths in 4 Pallas calls)
# ---------------------------------------------------------------------------
def model_forward(params, source, mask, token_type):
    B, S = source.shape
    D = Config.hidden

    emb = (params["word_emb"][source]
           + params["pos_emb"][jnp.arange(S)][None, :, :]
           + params["type_emb"][token_type])            # (B, S, D) f32
    x = embed_layernorm(emb.reshape(B * S, D),
                        params["emb_ln_g"], params["emb_ln_b"])

    mask_f32 = mask.astype(jnp.float32)                 # (B, S); bias built in-kernel
    for lp in params["layers"]:
        x = bert_layer(x, mask_f32, lp, B, S, Config.heads)

    hidden = x.reshape(B, S, D).transpose(1, 0, 2)      # (S, B, D) for in-kernel time loop
    # nn.Dropout in eval mode -> identity
    return lstm_classifier(hidden, params["lstm"],
                           params["cls_w"], params["cls_b"])   # (B, 1)


# ---------------------------------------------------------------------------
# Deterministic parameter init (synthetic, stands in for pretrained BERT)
# ---------------------------------------------------------------------------
def init_params(key):
    D, I, R = Config.hidden, Config.inter, Config.rnn_hidden_size
    keys = iter(jax.random.split(key, 64))
    bf = jnp.bfloat16

    def nrm(shape, scale=0.02, dtype=jnp.float32):
        return (scale * jax.random.normal(next(keys), shape)).astype(dtype)

    params = {
        "word_emb": nrm((Config.vocab_size, D)),
        "pos_emb": nrm((Config.max_position, D)),
        "type_emb": nrm((Config.type_vocab_size, D)),
        "emb_ln_g": jnp.ones((1, D), jnp.float32),
        "emb_ln_b": jnp.zeros((1, D), jnp.float32),
        "layers": [],
    }
    for _ in range(Config.bert_layers):
        params["layers"].append({
            # fused Q|K|V projection weight, bf16 for the MXU
            "qkv_w": nrm((D, 3 * D), dtype=bf),
            "qkv_b": jnp.zeros((1, 3 * D), jnp.float32),
            "ao_w": nrm((D, D), dtype=bf),
            "ao_b": jnp.zeros((1, D), jnp.float32),
            "ln1_g": jnp.ones((1, D), jnp.float32),
            "ln1_b": jnp.zeros((1, D), jnp.float32),
            "i_w": nrm((D, I), dtype=bf),
            "i_b": jnp.zeros((1, I), jnp.float32),
            "fo_w": nrm((I, D), dtype=bf),
            "fo_b": jnp.zeros((1, D), jnp.float32),
            "ln2_g": jnp.ones((1, D), jnp.float32),
            "ln2_b": jnp.zeros((1, D), jnp.float32),
        })
    # LSTM weights stored transposed vs torch: (in, 4R) / (R, 4R); b = b_ih + b_hh
    params["lstm"] = {
        "wih_f": nrm((D, 4 * R), 0.1, bf), "whh_f": nrm((R, 4 * R), 0.1, bf),
        "b_f": nrm((1, 4 * R), 0.1),
        "wih_b": nrm((D, 4 * R), 0.1, bf), "whh_b": nrm((R, 4 * R), 0.1, bf),
        "b_b": nrm((1, 4 * R), 0.1),
    }
    params["cls_w"] = nrm((1, 2 * R), 0.1)   # row vector for in-kernel VPU reduce
    params["cls_b"] = jnp.zeros((1, 1), jnp.float32)
    return params


if __name__ == "__main__":
    key = jax.random.PRNGKey(0)
    pkey, skey = jax.random.split(key)
    params = init_params(pkey)

    B, S = 2, 8
    source = jax.random.randint(skey, (B, S), 0, Config.vocab_size, dtype=jnp.int32)
    mask = jnp.ones((B, S), jnp.int32).at[1, 6:].set(0)   # pad last 2 tokens of row 1
    token_type = jnp.zeros((B, S), jnp.int32)

    out = jax.jit(model_forward)(params, source, mask, token_type)
    out = jax.block_until_ready(out)
    assert out.shape == (B, 1) and out.dtype == jnp.float32
    print("KERNEL_OK")
</pallas_src>

<mosaic_0001>
module attributes {stable_mosaic.version = 11 : i64} {
  func.func @_embed_ln_kernel(%arg0: memref<16x32xf32, #tpu.memory_space<vmem>>, %arg1: memref<1x32xf32, #tpu.memory_space<vmem>>, %arg2: memref<1x32xf32, #tpu.memory_space<vmem>>, %arg3: memref<16x32xf32, #tpu.memory_space<vmem>>) attributes {dimension_semantics = [], scalar_prefetch = 0 : i64, scratch_operands = 0 : i64, tpu.core_type = #tpu.core_type<tc>} {
    %c0 = arith.constant 0 : index
    %c0_0 = arith.constant 0 : index
    %0 = vector.load %arg0[%c0, %c0_0] : memref<16x32xf32, #tpu.memory_space<vmem>>, vector<16x32xf32>
    %c0_1 = arith.constant 0 : index
    %c0_2 = arith.constant 0 : index
    %1 = vector.load %arg1[%c0_1, %c0_2] : memref<1x32xf32, #tpu.memory_space<vmem>>, vector<1x32xf32>
    %c0_3 = arith.constant 0 : index
    %c0_4 = arith.constant 0 : index
    %2 = vector.load %arg2[%c0_3, %c0_4] : memref<1x32xf32, #tpu.memory_space<vmem>>, vector<1x32xf32>
    %cst = arith.constant dense<0.000000e+00> : vector<16xf32>
    %3 = vector.multi_reduction <add>, %0, %cst [1] : vector<16x32xf32> to vector<16xf32>
    %4 = vector.shape_cast %3 : vector<16xf32> to vector<16x1xf32>
    %cst_5 = arith.constant 3.200000e+01 : f32
    %5 = vector.broadcast %cst_5 : f32 to vector<16x1xf32>
    %6 = arith.divf %4, %5 : vector<16x1xf32>
    %7 = vector.broadcast %6 : vector<16x1xf32> to vector<16x32xf32>
    %8 = arith.subf %0, %7 : vector<16x32xf32>
    %9 = arith.mulf %8, %8 : vector<16x32xf32>
    %cst_6 = arith.constant dense<0.000000e+00> : vector<16xf32>
    %10 = vector.multi_reduction <add>, %9, %cst_6 [1] : vector<16x32xf32> to vector<16xf32>
    %11 = vector.shape_cast %10 : vector<16xf32> to vector<16x1xf32>
    %cst_7 = arith.constant 3.200000e+01 : f32
    %12 = vector.broadcast %cst_7 : f32 to vector<16x1xf32>
    %13 = arith.divf %11, %12 : vector<16x1xf32>
    %14 = vector.broadcast %6 : vector<16x1xf32> to vector<16x32xf32>
    %15 = arith.subf %0, %14 : vector<16x32xf32>
    %cst_8 = arith.constant 9.99999996E-13 : f32
    %16 = vector.broadcast %cst_8 : f32 to vector<16x1xf32>
    %17 = arith.addf %13, %16 : vector<16x1xf32>
    %18 = math.rsqrt %17 : vector<16x1xf32>
    %19 = vector.broadcast %18 : vector<16x1xf32> to vector<16x32xf32>
    %20 = arith.mulf %15, %19 : vector<16x32xf32>
    %21 = vector.broadcast %1 : vector<1x32xf32> to vector<16x32xf32>
    %22 = arith.mulf %20, %21 : vector<16x32xf32>
    %23 = vector.broadcast %2 : vector<1x32xf32> to vector<16x32xf32>
    %24 = arith.addf %22, %23 : vector<16x32xf32>
    %c0_9 = arith.constant 0 : index
    %c0_10 = arith.constant 0 : index
    %25 = vector.load %arg3[%c0_9, %c0_10] : memref<16x32xf32, #tpu.memory_space<vmem>>, vector<16x32xf32>
    tpu.vector_store %arg3[%c0_9, %c0_10], %24 {strides = array<i32>} : memref<16x32xf32, #tpu.memory_space<vmem>>, vector<16x32xf32>,
    return
  }
}

module attributes {stable_mosaic.version = 11 : i64} {
  func.func @_lstm_cls_kernel(%arg0: memref<8x2x32xf32, #tpu.memory_space<vmem>>, %arg1: memref<32x128xbf16, #tpu.memory_space<vmem>>, %arg2: memref<32x128xbf16, #tpu.memory_space<vmem>>, %arg3: memref<1x128xf32, #tpu.memory_space<vmem>>, %arg4: memref<32x128xbf16, #tpu.memory_space<vmem>>, %arg5: memref<32x128xbf16, #tpu.memory_space<vmem>>, %arg6: memref<1x128xf32, #tpu.memory_space<vmem>>, %arg7: memref<1x64xf32, #tpu.memory_space<vmem>>, %arg8: memref<1x1xf32, #tpu.memory_space<vmem>>, %arg9: memref<2x1xf32, #tpu.memory_space<vmem>>) attributes {dimension_semantics = [], scalar_prefetch = 0 : i64, scratch_operands = 0 : i64, tpu.core_type = #tpu.core_type<tc>} {
    %c0 = arith.constant 0 : index
    %c0_0 = arith.constant 0 : index
    %0 = vector.load %arg1[%c0, %c0_0] : memref<32x128xbf16, #tpu.memory_space<vmem>>, vector<32x128xbf16>
    %c0_1 = arith.constant 0 : index
    %c0_2 = arith.constant 0 : index
    %1 = vector.load %arg2[%c0_1, %c0_2] : memref<32x128xbf16, #tpu.memory_space<vmem>>, vector<32x128xbf16>
    %c0_3 = arith.constant 0 : index
    %c0_4 = arith.constant 0 : index
    %2 = vector.load %arg3[%c0_3, %c0_4] : memref<1x128xf32, #tpu.memory_space<vmem>>, vector<1x128xf32>
    %c0_5 = arith.constant 0 : index
    %c0_6 = arith.constant 0 : index
    %3 = vector.load %arg4[%c0_5, %c0_6] : memref<32x128xbf16, #tpu.memory_space<vmem>>, vector<32x128xbf16>
    %c0_7 = arith.constant 0 : index
    %c0_8 = arith.constant 0 : index
    %4 = vector.load %arg5[%c0_7, %c0_8] : memref<32x128xbf16, #tpu.memory_space<vmem>>, vector<32x128xbf16>
    %c0_9 = arith.constant 0 : index
    %c0_10 = arith.constant 0 : index
    %5 = vector.load %arg6[%c0_9, %c0_10] : memref<1x128xf32, #tpu.memory_space<vmem>>, vector<1x128xf32>
    %cst = arith.constant 0.000000e+00 : f32
    %6 = vector.broadcast %cst : f32 to vector<2x32xf32>
    %c0_i32 = arith.constant 0 : i32
    %7 = arith.index_cast %c0_i32 : i32 to index
    %c0_11 = arith.constant 0 : index
    %c0_12 = arith.constant 0 : index
    %8 = vector.load %arg0[%7, %c0_11, %c0_12] : memref<8x2x32xf32, #tpu.memory_space<vmem>>, vector<1x2x32xf32>
    %9 = vector.shape_cast %8 : vector<1x2x32xf32> to vector<2x32xf32>
    %10 = arith.truncf %9 : vector<2x32xf32> to vector<2x32xbf16>
    %cst_13 = arith.constant dense<0.000000e+00> : vector<2x128xf32>
    %11 = tpu.matmul %10, %0, %cst_13 {dimension_numbers = #tpu.dot_dimension_numbers<[1], [0], [0], [1], [0, 0, 1, 1], [], []>} : vector<2x32xbf16>, vector<32x128xbf16>, vector<2x128xf32> -> vector<2x128xf32>
    %12 = arith.truncf %6 : vector<2x32xf32> to vector<2x32xbf16>
    %cst_14 = arith.constant dense<0.000000e+00> : vector<2x128xf32>
    %13 = tpu.matmul %12, %1, %cst_14 {dimension_numbers = #tpu.dot_dimension_numbers<[1], [0], [0], [1], [0, 0, 1, 1], [], []>} : vector<2x32xbf16>, vector<32x128xbf16>, vector<2x128xf32> -> vector<2x128xf32>
    %14 = arith.addf %11, %13 : vector<2x128xf32>
    %15 = vector.broadcast %2 : vector<1x128xf32> to vector<2x128xf32>
    %16 = arith.addf %14, %15 : vector<2x128xf32>
    %17 = vector.extract_strided_slice %16 {offsets = [0, 0], sizes = [2, 32], strides = [1, 1]} : vector<2x128xf32> to vector<2x32xf32>
    %18 = arith.negf %17 : vector<2x32xf32>
    %19 = math.exp %18 : vector<2x32xf32>
    %cst_15 = arith.constant 1.000000e+00 : f32
    %20 = vector.broadcast %cst_15 : f32 to vector<2x32xf32>
    %21 = arith.addf %20, %19 : vector<2x32xf32>
    %22 = arith.divf %20, %21 : vector<2x32xf32>
    %23 = vector.extract_strided_slice %16 {offsets = [0, 32], sizes = [2, 32], strides = [1, 1]} : vector<2x128xf32> to vector<2x32xf32>
    %24 = arith.negf %23 : vector<2x32xf32>
    %25 = math.exp %24 : vector<2x32xf32>
    %cst_16 = arith.constant 1.000000e+00 : f32
    %26 = vector.broadcast %cst_16 : f32 to vector<2x32xf32>
    %27 = arith.addf %26, %25 : vector<2x32xf32>
    %28 = arith.divf %26, %27 : vector<2x32xf32>
    %29 = vector.extract_strided_slice %16 {offsets = [0, 64], sizes = [2, 32], strides = [1, 1]} : vector<2x128xf32> to vector<2x32xf32>
    %30 = math.tanh %29 : vector<2x32xf32>
    %31 = vector.extract_strided_slice %16 {offsets = [0, 96], sizes = [2, 32], strides = [1, 1]} : vector<2x128xf32> to vector<2x32xf32>
    %32 = arith.negf %31 : vector<2x32xf32>
    %33 = math.exp %32 : vector<2x32xf32>
    %cst_17 = arith.constant 1.000000e+00 : f32
    %34 = vector.broadcast %cst_17 : f32 to vector<2x32xf32>
    %35 = arith.addf %34, %33 : vector<2x32xf32>
    %36 = arith.divf %34, %35 : vector<2x32xf32>
    %37 = arith.mulf %28, %6 : vector<2x32xf32>
    %38 = arith.mulf %22, %30 : vector<2x32xf32>
    %39 = arith.addf %37, %38 : vector<2x32xf32>
    %40 = math.tanh %39 : vector<2x32xf32>
    %41 = arith.mulf %36, %40 : vector<2x32xf32>
    %c7_i32 = arith.constant 7 : i32
    %42 = arith.subi %c7_i32, %c0_i32 : i32
    %43 = arith.index_cast %42 : i32 to index
    %c0_18 = arith.constant 0 : index
    %c0_19 = arith.constant 0 : index
    %44 = vector.load %arg0[%43, %c0_18, %c0_19] : memref<8x2x32xf32, #tpu.memory_space<vmem>>, vector<1x2x32xf32>
    %45 = vector.shape_cast %44 : vector<1x2x32xf32> to vector<2x32xf32>
    %46 = arith.truncf %45 : vector<2x32xf32> to vector<2x32xbf16>
    %cst_20 = arith.constant dense<0.000000e+00> : vector<2x128xf32>
    %47 = tpu.matmul %46, %3, %cst_20 {dimension_numbers = #tpu.dot_dimension_numbers<[1], [0], [0], [1], [0, 0, 1, 1], [], []>} : vector<2x32xbf16>, vector<32x128xbf16>, vector<2x128xf32> -> vector<2x128xf32>
    %48 = arith.truncf %6 : vector<2x32xf32> to vector<2x32xbf16>
    %cst_21 = arith.constant dense<0.000000e+00> : vector<2x128xf32>
    %49 = tpu.matmul %48, %4, %cst_21 {dimension_numbers = #tpu.dot_dimension_numbers<[1], [0], [0], [1], [0, 0, 1, 1], [], []>} : vector<2x32xbf16>, vector<32x128xbf16>, vector<2x128xf32> -> vector<2x128xf32>
    %50 = arith.addf %47, %49 : vector<2x128xf32>
    %51 = vector.broadcast %5 : vector<1x128xf32> to vector<2x128xf32>
    %52 = arith.addf %50, %51 : vector<2x128xf32>
    %53 = vector.extract_strided_slice %52 {offsets = [0, 0], sizes = [2, 32], strides = [1, 1]} : vector<2x128xf32> to vector<2x32xf32>
    %54 = arith.negf %53 : vector<2x32xf32>
    %55 = math.exp %54 : vector<2x32xf32>
    %cst_22 = arith.constant 1.000000e+00 : f32
    %56 = vector.broadcast %cst_22 : f32 to vector<2x32xf32>
    %57 = arith.addf %56, %55 : vector<2x32xf32>
    %58 = arith.divf %56, %57 : vector<2x32xf32>
    %59 = vector.extract_strided_slice %52 {offsets = [0, 32], sizes = [2, 32], strides = [1, 1]} : vector<2x128xf32> to vector<2x32xf32>
    %60 = arith.negf %59 : vector<2x32xf32>
    %61 = math.exp %60 : vector<2x32xf32>
    %cst_23 = arith.constant 1.000000e+00 : f32
    %62 = vector.broadcast %cst_23 : f32 to vector<2x32xf32>
    %63 = arith.addf %62, %61 : vector<2x32xf32>
    %64 = arith.divf %62, %63 : vector<2x32xf32>
    %65 = vector.extract_strided_slice %52 {offsets = [0, 64], sizes = [2, 32], strides = [1, 1]} : vector<2x128xf32> to vector<2x32xf32>
    %66 = math.tanh %65 : vector<2x32xf32>
    %67 = vector.extract_strided_slice %52 {offsets = [0, 96], sizes = [2, 32], strides = [1, 1]} : vector<2x128xf32> to vector<2x32xf32>
    %68 = arith.negf %67 : vector<2x32xf32>
    %69 = math.exp %68 : vector<2x32xf32>
    %cst_24 = arith.constant 1.000000e+00 : f32
    %70 = vector.broadcast %cst_24 : f32 to vector<2x32xf32>
    %71 = arith.addf %70, %69 : vector<2x32xf32>
    %72 = arith.divf %70, %71 : vector<2x32xf32>
    %73 = arith.mulf %64, %6 : vector<2x32xf32>
    %74 = arith.mulf %58, %66 : vector<2x32xf32>
    %75 = arith.addf %73, %74 : vector<2x32xf32>
    %76 = math.tanh %75 : vector<2x32xf32>
    %77 = arith.mulf %72, %76 : vector<2x32xf32>
    %c1_i32 = arith.constant 1 : i32
    %78 = arith.index_cast %c1_i32 : i32 to index
    %c0_25 = arith.constant 0 : index
    %c0_26 = arith.constant 0 : index
    %79 = vector.load %arg0[%78, %c0_25, %c0_26] : memref<8x2x32xf32, #tpu.memory_space<vmem>>, vector<1x2x32xf32>
    %80 = vector.shape_cast %79 : vector<1x2x32xf32> to vector<2x32xf32>
    %81 = arith.truncf %80 : vector<2x32xf32> to vector<2x32xbf16>
    %cst_27 = arith.constant dense<0.000000e+00> : vector<2x128xf32>
    %82 = tpu.matmul %81, %0, %cst_27 {dimension_numbers = #tpu.dot_dimension_numbers<[1], [0], [0], [1], [0, 0, 1, 1], [], []>} : vector<2x32xbf16>, vector<32x128xbf16>, vector<2x128xf32> -> vector<2x128xf32>
    %83 = arith.truncf %41 : vector<2x32xf32> to vector<2x32xbf16>
    %cst_28 = arith.constant dense<0.000000e+00> : vector<2x128xf32>
    %84 = tpu.matmul %83, %1, %cst_28 {dimension_numbers = #tpu.dot_dimension_numbers<[1], [0], [0], [1], [0, 0, 1, 1], [], []>} : vector<2x32xbf16>, vector<32x128xbf16>, vector<2x128xf32> -> vector<2x128xf32>
    %85 = arith.addf %82, %84 : vector<2x128xf32>
    %86 = vector.broadcast %2 : vector<1x128xf32> to vector<2x128xf32>
    %87 = arith.addf %85, %86 : vector<2x128xf32>
    %88 = vector.extract_strided_slice %87 {offsets = [0, 0], sizes = [2, 32], strides = [1, 1]} : vector<2x128xf32> to vector<2x32xf32>
    %89 = arith.negf %88 : vector<2x32xf32>
    %90 = math.exp %89 : vector<2x32xf32>
    %cst_29 = arith.constant 1.000000e+00 : f32
    %91 = vector.broadcast %cst_29 : f32 to vector<2x32xf32>
    %92 = arith.addf %91, %90 : vector<2x32xf32>
    %93 = arith.divf %91, %92 : vector<2x32xf32>
    %94 = vector.extract_strided_slice %87 {offsets = [0, 32], sizes = [2, 32], strides = [1, 1]} : vector<2x128xf32> to vector<2x32xf32>
    %95 = arith.negf %94 : vector<2x32xf32>
    %96 = math.exp %95 : vector<2x32xf32>
    %cst_30 = arith.constant 1.000000e+00 : f32
    %97 = vector.broadcast %cst_30 : f32 to vector<2x32xf32>
    %98 = arith.addf %97, %96 : vector<2x32xf32>
    %99 = arith.divf %97, %98 : vector<2x32xf32>
    %100 = vector.extract_strided_slice %87 {offsets = [0, 64], sizes = [2, 32], strides = [1, 1]} : vector<2x128xf32> to vector<2x32xf32>
    %101 = math.tanh %100 : vector<2x32xf32>
    %102 = vector.extract_strided_slice %87 {offsets = [0, 96], sizes = [2, 32], strides = [1, 1]} : vector<2x128xf32> to vector<2x32xf32>
    %103 = arith.negf %102 : vector<2x32xf32>
    %104 = math.exp %103 : vector<2x32xf32>
    %cst_31 = arith.constant 1.000000e+00 : f32
    %105 = vector.broadcast %cst_31 : f32 to vector<2x32xf32>
    %106 = arith.addf %105, %104 : vector<2x32xf32>
    %107 = arith.divf %105, %106 : vector<2x32xf32>
    %108 = arith.mulf %99, %39 : vector<2x32xf32>
    %109 = arith.mulf %93, %101 : vector<2x32xf32>
    %110 = arith.addf %108, %109 : vector<2x32xf32>
    %111 = math.tanh %110 : vector<2x32xf32>
    %112 = arith.mulf %107, %111 : vector<2x32xf32>
    %c7_i32_32 = arith.constant 7 : i32
    %113 = arith.subi %c7_i32_32, %c1_i32 : i32
    %114 = arith.index_cast %113 : i32 to index
    %c0_33 = arith.constant 0 : index
    %c0_34 = arith.constant 0 : index
    %115 = vector.load %arg0[%114, %c0_33, %c0_34] : memref<8x2x32xf32, #tpu.memory_space<vmem>>, vector<1x2x32xf32>
    %116 = vector.shape_cast %115 : vector<1x2x32xf32> to vector<2x32xf32>
    %117 = arith.truncf %116 : vector<2x32xf32> to vector<2x32xbf16>
    %cst_35 = arith.constant dense<0.000000e+00> : vector<2x128xf32>
    %118 = tpu.matmul %117, %3, %cst_35 {dimension_numbers = #tpu.dot_dimension_numbers<[1], [0], [0], [1], [0, 0, 1, 1], [], []>} : vector<2x32xbf16>, vector<32x128xbf16>, vector<2x128xf32> -> vector<2x128xf32>
    %119 = arith.truncf %77 : vector<2x32xf32> to vector<2x32xbf16>
    %cst_36 = arith.constant dense<0.000000e+00> : vector<2x128xf32>
    %120 = tpu.matmul %119, %4, %cst_36 {dimension_numbers = #tpu.dot_dimension_numbers<[1], [0], [0], [1], [0, 0, 1, 1], [], []>} : vector<2x32xbf16>, vector<32x128xbf16>, vector<2x128xf32> -> vector<2x128xf32>
    %121 = arith.addf %118, %120 : vector<2x128xf32>
    %122 = vector.broadcast %5 : vector<1x128xf32> to vector<2x128xf32>
    %123 = arith.addf %121, %122 : vector<2x128xf32>
    %124 = vector.extract_strided_slice %123 {offsets = [0, 0], sizes = [2, 32], strides = [1, 1]} : vector<2x128xf32> to vector<2x32xf32>
    %125 = arith.negf %124 : vector<2x32xf32>
    %126 = math.exp %125 : vector<2x32xf32>
    %cst_37 = arith.constant 1.000000e+00 : f32
    %127 = vector.broadcast %cst_37 : f32 to vector<2x32xf32>
    %128 = arith.addf %127, %126 : vector<2x32xf32>
    %129 = arith.divf %127, %128 : vector<2x32xf32>
    %130 = vector.extract_strided_slice %123 {offsets = [0, 32], sizes = [2, 32], strides = [1, 1]} : vector<2x128xf32> to vector<2x32xf32>
    %131 = arith.negf %130 : vector<2x32xf32>
    %132 = math.exp %131 : vector<2x32xf32>
    %cst_38 = arith.constant 1.000000e+00 : f32
    %133 = vector.broadcast %cst_38 : f32 to vector<2x32xf32>
    %134 = arith.addf %133, %132 : vector<2x32xf32>
    %135 = arith.divf %133, %134 : vector<2x32xf32>
    %136 = vector.extract_strided_slice %123 {offsets = [0, 64], sizes = [2, 32], strides = [1, 1]} : vector<2x128xf32> to vector<2x32xf32>
    %137 = math.tanh %136 : vector<2x32xf32>
    %138 = vector.extract_strided_slice %123 {offsets = [0, 96], sizes = [2, 32], strides = [1, 1]} : vector<2x128xf32> to vector<2x32xf32>
    %139 = arith.negf %138 : vector<2x32xf32>
    %140 = math.exp %139 : vector<2x32xf32>
    %cst_39 = arith.constant 1.000000e+00 : f32
    %141 = vector.broadcast %cst_39 : f32 to vector<2x32xf32>
    %142 = arith.addf %141, %140 : vector<2x32xf32>
    %143 = arith.divf %141, %142 : vector<2x32xf32>
    %144 = arith.mulf %135, %75 : vector<2x32xf32>
    %145 = arith.mulf %129, %137 : vector<2x32xf32>
    %146 = arith.addf %144, %145 : vector<2x32xf32>
    %147 = math.tanh %146 : vector<2x32xf32>
    %148 = arith.mulf %143, %147 : vector<2x32xf32>
    %c2_i32 = arith.constant 2 : i32
    %149 = arith.index_cast %c2_i32 : i32 to index
    %c0_40 = arith.constant 0 : index
    %c0_41 = arith.constant 0 : index
    %150 = vector.load %arg0[%149, %c0_40, %c0_41] : memref<8x2x32xf32, #tpu.memory_space<vmem>>, vector<1x2x32xf32>
    %151 = vector.shape_cast %150 : vector<1x2x32xf32> to vector<2x32xf32>
    %152 = arith.truncf %151 : vector<2x32xf32> to vector<2x32xbf16>
    %cst_42 = arith.constant dense<0.000000e+00> : vector<2x128xf32>
    %153 = tpu.matmul %152, %0, %cst_42 {dimension_numbers = #tpu.dot_dimension_numbers<[1], [0], [0], [1], [0, 0, 1, 1], [], []>} : vector<2x32xbf16>, vector<32x128xbf16>, vector<2x128xf32> -> vector<2x128xf32>
    %154 = arith.truncf %112 : vector<2x32xf32> to vector<2x32xbf16>
    %cst_43 = arith.constant dense<0.000000e+00> : vector<2x128xf32>
    %155 = tpu.matmul %154, %1, %cst_43 {dimension_numbers = #tpu.dot_dimension_numbers<[1], [0], [0], [1], [0, 0, 1, 1], [], []>} : vector<2x32xbf16>, vector<32x128xbf16>, vector<2x128xf32> -> vector<2x128xf32>
    %156 = arith.addf %153, %155 : vector<2x128xf32>
    %157 = vector.broadcast %2 : vector<1x128xf32> to vector<2x128xf32>
    %158 = arith.addf %156, %157 : vector<2x128xf32>
    %159 = vector.extract_strided_slice %158 {offsets = [0, 0], sizes = [2, 32], strides = [1, 1]} : vector<2x128xf32> to vector<2x32xf32>
    %160 = arith.negf %159 : vector<2x32xf32>
    %161 = math.exp %160 : vector<2x32xf32>
    %cst_44 = arith.constant 1.000000e+00 : f32
    %162 = vector.broadcast %cst_44 : f32 to vector<2x32xf32>
    %163 = arith.addf %162, %161 : vector<2x32xf32>
    %164 = arith.divf %162, %163 : vector<2x32xf32>
    %165 = vector.extract_strided_slice %158 {offsets = [0, 32], sizes = [2, 32], strides = [1, 1]} : vector<2x128xf32> to vector<2x32xf32>
    %166 = arith.negf %165 : vector<2x32xf32>
    %167 = math.exp %166 : vector<2x32xf32>
    %cst_45 = arith.constant 1.000000e+00 : f32
    %168 = vector.broadcast %cst_45 : f32 to vector<2x32xf32>
    %169 = arith.addf %168, %167 : vector<2x32xf32>
    %170 = arith.divf %168, %169 : vector<2x32xf32>
    %171 = vector.extract_strided_slice %158 {offsets = [0, 64], sizes = [2, 32], strides = [1, 1]} : vector<2x128xf32> to vector<2x32xf32>
    %172 = math.tanh %171 : vector<2x32xf32>
    %173 = vector.extract_strided_slice %158 {offsets = [0, 96], sizes = [2, 32], strides = [1, 1]} : vector<2x128xf32> to vector<2x32xf32>
    %174 = arith.negf %173 : vector<2x32xf32>
    %175 = math.exp %174 : vector<2x32xf32>
    %cst_46 = arith.constant 1.000000e+00 : f32
    %176 = vector.broadcast %cst_46 : f32 to vector<2x32xf32>
    %177 = arith.addf %176, %175 : vector<2x32xf32>
    %178 = arith.divf %176, %177 : vector<2x32xf32>
    %179 = arith.mulf %170, %110 : vector<2x32xf32>
    %180 = arith.mulf %164, %172 : vector<2x32xf32>
    %181 = arith.addf %179, %180 : vector<2x32xf32>
    %182 = math.tanh %181 : vector<2x32xf32>
    %183 = arith.mulf %178, %182 : vector<2x32xf32>
    %c7_i32_47 = arith.constant 7 : i32
    %184 = arith.subi %c7_i32_47, %c2_i32 : i32
    %185 = arith.index_cast %184 : i32 to index
    %c0_48 = arith.constant 0 : index
    %c0_49 = arith.constant 0 : index
    %186 = vector.load %arg0[%185, %c0_48, %c0_49] : memref<8x2x32xf32, #tpu.memory_space<vmem>>, vector<1x2x32xf32>
    %187 = vector.shape_cast %186 : vector<1x2x32xf32> to vector<2x32xf32>
    %188 = arith.truncf %187 : vector<2x32xf32> to vector<2x32xbf16>
    %cst_50 = arith.constant dense<0.000000e+00> : vector<2x128xf32>
    %189 = tpu.matmul %188, %3, %cst_50 {dimension_numbers = #tpu.dot_dimension_numbers<[1], [0], [0], [1], [0, 0, 1, 1], [], []>} : vector<2x32xbf16>, vector<32x128xbf16>, vector<2x128xf32> -> vector<2x128xf32>
    %190 = arith.truncf %148 : vector<2x32xf32> to vector<2x32xbf16>
    %cst_51 = arith.constant dense<0.000000e+00> : vector<2x128xf32>
    %191 = tpu.matmul %190, %4, %cst_51 {dimension_numbers = #tpu.dot_dimension_numbers<[1], [0], [0], [1], [0, 0, 1, 1], [], []>} : vector<2x32xbf16>, vector<32x128xbf16>, vector<2x128xf32> -> vector<2x128xf32>
    %192 = arith.addf %189, %191 : vector<2x128xf32>
    %193 = vector.broadcast %5 : vector<1x128xf32> to vector<2x128xf32>
    %194 = arith.addf %192, %193 : vector<2x128xf32>
    %195 = vector.extract_strided_slice %194 {offsets = [0, 0], sizes = [2, 32], strides = [1, 1]} : vector<2x128xf32> to vector<2x32xf32>
    %196 = arith.negf %195 : vector<2x32xf32>
    %197 = math.exp %196 : vector<2x32xf32>
    %cst_52 = arith.constant 1.000000e+00 : f32
    %198 = vector.broadcast %cst_52 : f32 to vector<2x32xf32>
    %199 = arith.addf %198, %197 : vector<2x32xf32>
    %200 = arith.divf %198, %199 : vector<2x32xf32>
    %201 = vector.extract_strided_slice %194 {offsets = [0, 32], sizes = [2, 32], strides = [1, 1]} : vector<2x128xf32> to vector<2x32xf32>
    %202 = arith.negf %201 : vector<2x32xf32>
    %203 = math.exp %202 : vector<2x32xf32>
    %cst_53 = arith.constant 1.000000e+00 : f32
    %204 = vector.broadcast %cst_53 : f32 to vector<2x32xf32>
    %205 = arith.addf %204, %203 : vector<2x32xf32>
    %206 = arith.divf %204, %205 : vector<2x32xf32>
    %207 = vector.extract_strided_slice %194 {offsets = [0, 64], sizes = [2, 32], strides = [1, 1]} : vector<2x128xf32> to vector<2x32xf32>
    %208 = math.tanh %207 : vector<2x32xf32>
    %209 = vector.extract_strided_slice %194 {offsets = [0, 96], sizes = [2, 32], strides = [1, 1]} : vector<2x128xf32> to vector<2x32xf32>
    %210 = arith.negf %209 : vector<2x32xf32>
    %211 = math.exp %210 : vector<2x32xf32>
    %cst_54 = arith.constant 1.000000e+00 : f32
    %212 = vector.broadcast %cst_54 : f32 to vector<2x32xf32>
    %213 = arith.addf %212, %211 : vector<2x32xf32>
    %214 = arith.divf %212, %213 : vector<2x32xf32>
    %215 = arith.mulf %206, %146 : vector<2x32xf32>
    %216 = arith.mulf %200, %208 : vector<2x32xf32>
    %217 = arith.addf %215, %216 : vector<2x32xf32>
    %218 = math.tanh %217 : vector<2x32xf32>
    %219 = arith.mulf %214, %218 : vector<2x32xf32>
    %c3_i32 = arith.constant 3 : i32
    %220 = arith.index_cast %c3_i32 : i32 to index
    %c0_55 = arith.constant 0 : index
    %c0_56 = arith.constant 0 : index
    %221 = vector.load %arg0[%220, %c0_55, %c0_56] : memref<8x2x32xf32, #tpu.memory_space<vmem>>, vector<1x2x32xf32>
    %222 = vector.shape_cast %221 : vector<1x2x32xf32> to vector<2x32xf32>
    %223 = arith.truncf %222 : vector<2x32xf32> to vector<2x32xbf16>
    %cst_57 = arith.constant dense<0.000000e+00> : vector<2x128xf32>
    %224 = tpu.matmul %223, %0, %cst_57 {dimension_numbers = #tpu.dot_dimension_numbers<[1], [0], [0], [1], [0, 0, 1, 1], [], []>} : vector<2x32xbf16>, vector<32x128xbf16>, vector<2x128xf32> -> vector<2x128xf32>
    %225 = arith.truncf %183 : vector<2x32xf32> to vector<2x32xbf16>
    %cst_58 = arith.constant dense<0.000000e+00> : vector<2x128xf32>
    %226 = tpu.matmul %225, %1, %cst_58 {dimension_numbers = #tpu.dot_dimension_numbers<[1], [0], [0], [1], [0, 0, 1, 1], [], []>} : vector<2x32xbf16>, vector<32x128xbf16>, vector<2x128xf32> -> vector<2x128xf32>
    %227 = arith.addf %224, %226 : vector<2x128xf32>
    %228 = vector.broadcast %2 : vector<1x128xf32> to vector<2x128xf32>
    %229 = arith.addf %227, %228 : vector<2x128xf32>
    %230 = vector.extract_strided_slice %229 {offsets = [0, 0], sizes = [2, 32], strides = [1, 1]} : vector<2x128xf32> to vector<2x32xf32>
    %231 = arith.negf %230 : vector<2x32xf32>
    %232 = math.exp %231 : vector<2x32xf32>
    %cst_59 = arith.constant 1.000000e+00 : f32
    %233 = vector.broadcast %cst_59 : f32 to vector<2x32xf32>
    %234 = arith.addf %233, %232 : vector<2x32xf32>
    %235 = arith.divf %233, %234 : vector<2x32xf32>
    %236 = vector.extract_strided_slice %229 {offsets = [0, 32], sizes = [2, 32], strides = [1, 1]} : vector<2x128xf32> to vector<2x32xf32>
    %237 = arith.negf %236 : vector<2x32xf32>
    %238 = math.exp %237 : vector<2x32xf32>
    %cst_60 = arith.constant 1.000000e+00 : f32
    %239 = vector.broadcast %cst_60 : f32 to vector<2x32xf32>
    %240 = arith.addf %239, %238 : vector<2x32xf32>
    %241 = arith.divf %239, %240 : vector<2x32xf32>
    %242 = vector.extract_strided_slice %229 {offsets = [0, 64], sizes = [2, 32], strides = [1, 1]} : vector<2x128xf32> to vector<2x32xf32>
    %243 = math.tanh %242 : vector<2x32xf32>
    %244 = vector.extract_strided_slice %229 {offsets = [0, 96], sizes = [2, 32], strides = [1, 1]} : vector<2x128xf32> to vector<2x32xf32>
    %245 = arith.negf %244 : vector<2x32xf32>
    %246 = math.exp %245 : vector<2x32xf32>
    %cst_61 = arith.constant 1.000000e+00 : f32
    %247 = vector.broadcast %cst_61 : f32 to vector<2x32xf32>
    %248 = arith.addf %247, %246 : vector<2x32xf32>
    %249 = arith.divf %247, %248 : vector<2x32xf32>
    %250 = arith.mulf %241, %181 : vector<2x32xf32>
    %251 = arith.mulf %235, %243 : vector<2x32xf32>
    %252 = arith.addf %250, %251 : vector<2x32xf32>
    %253 = math.tanh %252 : vector<2x32xf32>
    %254 = arith.mulf %249, %253 : vector<2x32xf32>
    %c7_i32_62 = arith.constant 7 : i32
    %255 = arith.subi %c7_i32_62, %c3_i32 : i32
    %256 = arith.index_cast %255 : i32 to index
    %c0_63 = arith.constant 0 : index
    %c0_64 = arith.constant 0 : index
    %257 = vector.load %arg0[%256, %c0_63, %c0_64] : memref<8x2x32xf32, #tpu.memory_space<vmem>>, vector<1x2x32xf32>
    %258 = vector.shape_cast %257 : vector<1x2x32xf32> to vector<2x32xf32>
    %259 = arith.truncf %258 : vector<2x32xf32> to vector<2x32xbf16>
    %cst_65 = arith.constant dense<0.000000e+00> : vector<2x128xf32>
    %260 = tpu.matmul %259, %3, %cst_65 {dimension_numbers = #tpu.dot_dimension_numbers<[1], [0], [0], [1], [0, 0, 1, 1], [], []>} : vector<2x32xbf16>, vector<32x128xbf16>, vector<2x128xf32> -> vector<2x128xf32>
    %261 = arith.truncf %219 : vector<2x32xf32> to vector<2x32xbf16>
    %cst_66 = arith.constant dense<0.000000e+00> : vector<2x128xf32>
    %262 = tpu.matmul %261, %4, %cst_66 {dimension_numbers = #tpu.dot_dimension_numbers<[1], [0], [0], [1], [0, 0, 1, 1], [], []>} : vector<2x32xbf16>, vector<32x128xbf16>, vector<2x128xf32> -> vector<2x128xf32>
    %263 = arith.addf %260, %262 : vector<2x128xf32>
    %264 = vector.broadcast %5 : vector<1x128xf32> to vector<2x128xf32>
    %265 = arith.addf %263, %264 : vector<2x128xf32>
    %266 = vector.extract_strided_slice %265 {offsets = [0, 0], sizes = [2, 32], strides = [1, 1]} : vector<2x128xf32> to vector<2x32xf32>
    %267 = arith.negf %266 : vector<2x32xf32>
    %268 = math.exp %267 : vector<2x32xf32>
    %cst_67 = arith.constant 1.000000e+00 : f32
    %269 = vector.broadcast %cst_67 : f32 to vector<2x32xf32>
    %270 = arith.addf %269, %268 : vector<2x32xf32>
    %271 = arith.divf %269, %270 : vector<2x32xf32>
    %272 = vector.extract_strided_slice %265 {offsets = [0, 32], sizes = [2, 32], strides = [1, 1]} : vector<2x128xf32> to vector<2x32xf32>
    %273 = arith.negf %272 : vector<2x32xf32>
    %274 = math.exp %273 : vector<2x32xf32>
    %cst_68 = arith.constant 1.000000e+00 : f32
    %275 = vector.broadcast %cst_68 : f32 to vector<2x32xf32>
    %276 = arith.addf %275, %274 : vector<2x32xf32>
    %277 = arith.divf %275, %276 : vector<2x32xf32>
    %278 = vector.extract_strided_slice %265 {offsets = [0, 64], sizes = [2, 32], strides = [1, 1]} : vector<2x128xf32> to vector<2x32xf32>
    %279 = math.tanh %278 : vector<2x32xf32>
    %280 = vector.extract_strided_slice %265 {offsets = [0, 96], sizes = [2, 32], strides = [1, 1]} : vector<2x128xf32> to vector<2x32xf32>
    %281 = arith.negf %280 : vector<2x32xf32>
    %282 = math.exp %281 : vector<2x32xf32>
    %cst_69 = arith.constant 1.000000e+00 : f32
    %283 = vector.broadcast %cst_69 : f32 to vector<2x32xf32>
    %284 = arith.addf %283, %282 : vector<2x32xf32>
    %285 = arith.divf %283, %284 : vector<2x32xf32>
    %286 = arith.mulf %277, %217 : vector<2x32xf32>
    %287 = arith.mulf %271, %279 : vector<2x32xf32>
    %288 = arith.addf %286, %287 : vector<2x32xf32>
    %289 = math.tanh %288 : vector<2x32xf32>
    %290 = arith.mulf %285, %289 : vector<2x32xf32>
    %c4_i32 = arith.constant 4 : i32
    %291 = arith.index_cast %c4_i32 : i32 to index
    %c0_70 = arith.constant 0 : index
    %c0_71 = arith.constant 0 : index
    %292 = vector.load %arg0[%291, %c0_70, %c0_71] : memref<8x2x32xf32, #tpu.memory_space<vmem>>, vector<1x2x32xf32>
    %293 = vector.shape_cast %292 : vector<1x2x32xf32> to vector<2x32xf32>
    %294 = arith.truncf %293 : vector<2x32xf32> to vector<2x32xbf16>
    %cst_72 = arith.constant dense<0.000000e+00> : vector<2x128xf32>
    %295 = tpu.matmul %294, %0, %cst_72 {dimension_numbers = #tpu.dot_dimension_numbers<[1], [0], [0], [1], [0, 0, 1, 1], [], []>} : vector<2x32xbf16>, vector<32x128xbf16>, vector<2x128xf32> -> vector<2x128xf32>
    %296 = arith.truncf %254 : vector<2x32xf32> to vector<2x32xbf16>
    %cst_73 = arith.constant dense<0.000000e+00> : vector<2x128xf32>
    %297 = tpu.matmul %296, %1, %cst_73 {dimension_numbers = #tpu.dot_dimension_numbers<[1], [0], [0], [1], [0, 0, 1, 1], [], []>} : vector<2x32xbf16>, vector<32x128xbf16>, vector<2x128xf32> -> vector<2x128xf32>
    %298 = arith.addf %295, %297 : vector<2x128xf32>
    %299 = vector.broadcast %2 : vector<1x128xf32> to vector<2x128xf32>
    %300 = arith.addf %298, %299 : vector<2x128xf32>
    %301 = vector.extract_strided_slice %300 {offsets = [0, 0], sizes = [2, 32], strides = [1, 1]} : vector<2x128xf32> to vector<2x32xf32>
    %302 = arith.negf %301 : vector<2x32xf32>
    %303 = math.exp %302 : vector<2x32xf32>
    %cst_74 = arith.constant 1.000000e+00 : f32
    %304 = vector.broadcast %cst_74 : f32 to vector<2x32xf32>
    %305 = arith.addf %304, %303 : vector<2x32xf32>
    %306 = arith.divf %304, %305 : vector<2x32xf32>
    %307 = vector.extract_strided_slice %300 {offsets = [0, 32], sizes = [2, 32], strides = [1, 1]} : vector<2x128xf32> to vector<2x32xf32>
    %308 = arith.negf %307 : vector<2x32xf32>
    %309 = math.exp %308 : vector<2x32xf32>
    %cst_75 = arith.constant 1.000000e+00 : f32
    %310 = vector.broadcast %cst_75 : f32 to vector<2x32xf32>
    %311 = arith.addf %310, %309 : vector<2x32xf32>
    %312 = arith.divf %310, %311 : vector<2x32xf32>
    %313 = vector.extract_strided_slice %300 {offsets = [0, 64], sizes = [2, 32], strides = [1, 1]} : vector<2x128xf32> to vector<2x32xf32>
    %314 = math.tanh %313 : vector<2x32xf32>
    %315 = vector.extract_strided_slice %300 {offsets = [0, 96], sizes = [2, 32], strides = [1, 1]} : vector<2x128xf32> to vector<2x32xf32>
    %316 = arith.negf %315 : vector<2x32xf32>
    %317 = math.exp %316 : vector<2x32xf32>
    %cst_76 = arith.constant 1.000000e+00 : f32
    %318 = vector.broadcast %cst_76 : f32 to vector<2x32xf32>
    %319 = arith.addf %318, %317 : vector<2x32xf32>
    %320 = arith.divf %318, %319 : vector<2x32xf32>
    %321 = arith.mulf %312, %252 : vector<2x32xf32>
    %322 = arith.mulf %306, %314 : vector<2x32xf32>
    %323 = arith.addf %321, %322 : vector<2x32xf32>
    %324 = math.tanh %323 : vector<2x32xf32>
    %325 = arith.mulf %320, %324 : vector<2x32xf32>
    %c7_i32_77 = arith.constant 7 : i32
    %326 = arith.subi %c7_i32_77, %c4_i32 : i32
    %327 = arith.index_cast %326 : i32 to index
    %c0_78 = arith.constant 0 : index
    %c0_79 = arith.constant 0 : index
    %328 = vector.load %arg0[%327, %c0_78, %c0_79] : memref<8x2x32xf32, #tpu.memory_space<vmem>>, vector<1x2x32xf32>
    %329 = vector.shape_cast %328 : vector<1x2x32xf32> to vector<2x32xf32>
    %330 = arith.truncf %329 : vector<2x32xf32> to vector<2x32xbf16>
    %cst_80 = arith.constant dense<0.000000e+00> : vector<2x128xf32>
    %331 = tpu.matmul %330, %3, %cst_80 {dimension_numbers = #tpu.dot_dimension_numbers<[1], [0], [0], [1], [0, 0, 1, 1], [], []>} : vector<2x32xbf16>, vector<32x128xbf16>, vector<2x128xf32> -> vector<2x128xf32>
    %332 = arith.truncf %290 : vector<2x32xf32> to vector<2x32xbf16>
    %cst_81 = arith.constant dense<0.000000e+00> : vector<2x128xf32>
    %333 = tpu.matmul %332, %4, %cst_81 {dimension_numbers = #tpu.dot_dimension_numbers<[1], [0], [0], [1], [0, 0, 1, 1], [], []>} : vector<2x32xbf16>, vector<32x128xbf16>, vector<2x128xf32> -> vector<2x128xf32>
    %334 = arith.addf %331, %333 : vector<2x128xf32>
    %335 = vector.broadcast %5 : vector<1x128xf32> to vector<2x128xf32>
    %336 = arith.addf %334, %335 : vector<2x128xf32>
    %337 = vector.extract_strided_slice %336 {offsets = [0, 0], sizes = [2, 32], strides = [1, 1]} : vector<2x128xf32> to vector<2x32xf32>
    %338 = arith.negf %337 : vector<2x32xf32>
    %339 = math.exp %338 : vector<2x32xf32>
    %cst_82 = arith.constant 1.000000e+00 : f32
    %340 = vector.broadcast %cst_82 : f32 to vector<2x32xf32>
    %341 = arith.addf %340, %339 : vector<2x32xf32>
    %342 = arith.divf %340, %341 : vector<2x32xf32>
    %343 = vector.extract_strided_slice %336 {offsets = [0, 32], sizes = [2, 32], strides = [1, 1]} : vector<2x128xf32> to vector<2x32xf32>
    %344 = arith.negf %343 : vector<2x32xf32>
    %345 = math.exp %344 : vector<2x32xf32>
    %cst_83 = arith.constant 1.000000e+00 : f32
    %346 = vector.broadcast %cst_83 : f32 to vector<2x32xf32>
    %347 = arith.addf %346, %345 : vector<2x32xf32>
    %348 = arith.divf %346, %347 : vector<2x32xf32>
    %349 = vector.extract_strided_slice %336 {offsets = [0, 64], sizes = [2, 32], strides = [1, 1]} : vector<2x128xf32> to vector<2x32xf32>
    %350 = math.tanh %349 : vector<2x32xf32>
    %351 = vector.extract_strided_slice %336 {offsets = [0, 96], sizes = [2, 32], strides = [1, 1]} : vector<2x128xf32> to vector<2x32xf32>
    %352 = arith.negf %351 : vector<2x32xf32>
    %353 = math.exp %352 : vector<2x32xf32>
    %cst_84 = arith.constant 1.000000e+00 : f32
    %354 = vector.broadcast %cst_84 : f32 to vector<2x32xf32>
    %355 = arith.addf %354, %353 : vector<2x32xf32>
    %356 = arith.divf %354, %355 : vector<2x32xf32>
    %357 = arith.mulf %348, %288 : vector<2x32xf32>
    %358 = arith.mulf %342, %350 : vector<2x32xf32>
    %359 = arith.addf %357, %358 : vector<2x32xf32>
    %360 = math.tanh %359 : vector<2x32xf32>
    %361 = arith.mulf %356, %360 : vector<2x32xf32>
    %c5_i32 = arith.constant 5 : i32
    %362 = arith.index_cast %c5_i32 : i32 to index
    %c0_85 = arith.constant 0 : index
    %c0_86 = arith.constant 0 : index
    %363 = vector.load %arg0[%362, %c0_85, %c0_86] : memref<8x2x32xf32, #tpu.memory_space<vmem>>, vector<1x2x32xf32>
    %364 = vector.shape_cast %363 : vector<1x2x32xf32> to vector<2x32xf32>
    %365 = arith.truncf %364 : vector<2x32xf32> to vector<2x32xbf16>
    %cst_87 = arith.constant dense<0.000000e+00> : vector<2x128xf32>
    %366 = tpu.matmul %365, %0, %cst_87 {dimension_numbers = #tpu.dot_dimension_numbers<[1], [0], [0], [1], [0, 0, 1, 1], [], []>} : vector<2x32xbf16>, vector<32x128xbf16>, vector<2x128xf32> -> vector<2x128xf32>
    %367 = arith.truncf %325 : vector<2x32xf32> to vector<2x32xbf16>
    %cst_88 = arith.constant dense<0.000000e+00> : vector<2x128xf32>
    %368 = tpu.matmul %367, %1, %cst_88 {dimension_numbers = #tpu.dot_dimension_numbers<[1], [0], [0], [1], [0, 0, 1, 1], [], []>} : vector<2x32xbf16>, vector<32x128xbf16>, vector<2x128xf32> -> vector<2x128xf32>
    %369 = arith.addf %366, %368 : vector<2x128xf32>
    %370 = vector.broadcast %2 : vector<1x128xf32> to vector<2x128xf32>
    %371 = arith.addf %369, %370 : vector<2x128xf32>
    %372 = vector.extract_strided_slice %371 {offsets = [0, 0], sizes = [2, 32], strides = [1, 1]} : vector<2x128xf32> to vector<2x32xf32>
    %373 = arith.negf %372 : vector<2x32xf32>
    %374 = math.exp %373 : vector<2x32xf32>
    %cst_89 = arith.constant 1.000000e+00 : f32
    %375 = vector.broadcast %cst_89 : f32 to vector<2x32xf32>
    %376 = arith.addf %375, %374 : vector<2x32xf32>
    %377 = arith.divf %375, %376 : vector<2x32xf32>
    %378 = vector.extract_strided_slice %371 {offsets = [0, 32], sizes = [2, 32], strides = [1, 1]} : vector<2x128xf32> to vector<2x32xf32>
    %379 = arith.negf %378 : vector<2x32xf32>
    %380 = math.exp %379 : vector<2x32xf32>
    %cst_90 = arith.constant 1.000000e+00 : f32
    %381 = vector.broadcast %cst_90 : f32 to vector<2x32xf32>
    %382 = arith.addf %381, %380 : vector<2x32xf32>
    %383 = arith.divf %381, %382 : vector<2x32xf32>
    %384 = vector.extract_strided_slice %371 {offsets = [0, 64], sizes = [2, 32], strides = [1, 1]} : vector<2x128xf32> to vector<2x32xf32>
    %385 = math.tanh %384 : vector<2x32xf32>
    %386 = vector.extract_strided_slice %371 {offsets = [0, 96], sizes = [2, 32], strides = [1, 1]} : vector<2x128xf32> to vector<2x32xf32>
    %387 = arith.negf %386 : vector<2x32xf32>
    %388 = math.exp %387 : vector<2x32xf32>
    %cst_91 = arith.constant 1.000000e+00 : f32
    %389 = vector.broadcast %cst_91 : f32 to vector<2x32xf32>
    %390 = arith.addf %389, %388 : vector<2x32xf32>
    %391 = arith.divf %389, %390 : vector<2x32xf32>
    %392 = arith.mulf %383, %323 : vector<2x32xf32>
    %393 = arith.mulf %377, %385 : vector<2x32xf32>
    %394 = arith.addf %392, %393 : vector<2x32xf32>
    %395 = math.tanh %394 : vector<2x32xf32>
    %396 = arith.mulf %391, %395 : vector<2x32xf32>
    %c7_i32_92 = arith.constant 7 : i32
    %397 = arith.subi %c7_i32_92, %c5_i32 : i32
    %398 = arith.index_cast %397 : i32 to index
    %c0_93 = arith.constant 0 : index
    %c0_94 = arith.constant 0 : index
    %399 = vector.load %arg0[%398, %c0_93, %c0_94] : memref<8x2x32xf32, #tpu.memory_space<vmem>>, vector<1x2x32xf32>
    %400 = vector.shape_cast %399 : vector<1x2x32xf32> to vector<2x32xf32>
    %401 = arith.truncf %400 : vector<2x32xf32> to vector<2x32xbf16>
    %cst_95 = arith.constant dense<0.000000e+00> : vector<2x128xf32>
    %402 = tpu.matmul %401, %3, %cst_95 {dimension_numbers = #tpu.dot_dimension_numbers<[1], [0], [0], [1], [0, 0, 1, 1], [], []>} : vector<2x32xbf16>, vector<32x128xbf16>, vector<2x128xf32> -> vector<2x128xf32>
    %403 = arith.truncf %361 : vector<2x32xf32> to vector<2x32xbf16>
    %cst_96 = arith.constant dense<0.000000e+00> : vector<2x128xf32>
    %404 = tpu.matmul %403, %4, %cst_96 {dimension_numbers = #tpu.dot_dimension_numbers<[1], [0], [0], [1], [0, 0, 1, 1], [], []>} : vector<2x32xbf16>, vector<32x128xbf16>, vector<2x128xf32> -> vector<2x128xf32>
    %405 = arith.addf %402, %404 : vector<2x128xf32>
    %406 = vector.broadcast %5 : vector<1x128xf32> to vector<2x128xf32>
    %407 = arith.addf %405, %406 : vector<2x128xf32>
    %408 = vector.extract_strided_slice %407 {offsets = [0, 0], sizes = [2, 32], strides = [1, 1]} : vector<2x128xf32> to vector<2x32xf32>
    %409 = arith.negf %408 : vector<2x32xf32>
    %410 = math.exp %409 : vector<2x32xf32>
    %cst_97 = arith.constant 1.000000e+00 : f32
    %411 = vector.broadcast %cst_97 : f32 to vector<2x32xf32>
    %412 = arith.addf %411, %410 : vector<2x32xf32>
    %413 = arith.divf %411, %412 : vector<2x32xf32>
    %414 = vector.extract_strided_slice %407 {offsets = [0, 32], sizes = [2, 32], strides = [1, 1]} : vector<2x128xf32> to vector<2x32xf32>
    %415 = arith.negf %414 : vector<2x32xf32>
    %416 = math.exp %415 : vector<2x32xf32>
    %cst_98 = arith.constant 1.000000e+00 : f32
    %417 = vector.broadcast %cst_98 : f32 to vector<2x32xf32>
    %418 = arith.addf %417, %416 : vector<2x32xf32>
    %419 = arith.divf %417, %418 : vector<2x32xf32>
    %420 = vector.extract_strided_slice %407 {offsets = [0, 64], sizes = [2, 32], strides = [1, 1]} : vector<2x128xf32> to vector<2x32xf32>
    %421 = math.tanh %420 : vector<2x32xf32>
    %422 = vector.extract_strided_slice %407 {offsets = [0, 96], sizes = [2, 32], strides = [1, 1]} : vector<2x128xf32> to vector<2x32xf32>
    %423 = arith.negf %422 : vector<2x32xf32>
    %424 = math.exp %423 : vector<2x32xf32>
    %cst_99 = arith.constant 1.000000e+00 : f32
    %425 = vector.broadcast %cst_99 : f32 to vector<2x32xf32>
    %426 = arith.addf %425, %424 : vector<2x32xf32>
    %427 = arith.divf %425, %426 : vector<2x32xf32>
    %428 = arith.mulf %419, %359 : vector<2x32xf32>
    %429 = arith.mulf %413, %421 : vector<2x32xf32>
    %430 = arith.addf %428, %429 : vector<2x32xf32>
    %431 = math.tanh %430 : vector<2x32xf32>
    %432 = arith.mulf %427, %431 : vector<2x32xf32>
    %c6_i32 = arith.constant 6 : i32
    %433 = arith.index_cast %c6_i32 : i32 to index
    %c0_100 = arith.constant 0 : index
    %c0_101 = arith.constant 0 : index
    %434 = vector.load %arg0[%433, %c0_100, %c0_101] : memref<8x2x32xf32, #tpu.memory_space<vmem>>, vector<1x2x32xf32>
    %435 = vector.shape_cast %434 : vector<1x2x32xf32> to vector<2x32xf32>
    %436 = arith.truncf %435 : vector<2x32xf32> to vector<2x32xbf16>
    %cst_102 = arith.constant dense<0.000000e+00> : vector<2x128xf32>
    %437 = tpu.matmul %436, %0, %cst_102 {dimension_numbers = #tpu.dot_dimension_numbers<[1], [0], [0], [1], [0, 0, 1, 1], [], []>} : vector<2x32xbf16>, vector<32x128xbf16>, vector<2x128xf32> -> vector<2x128xf32>
    %438 = arith.truncf %396 : vector<2x32xf32> to vector<2x32xbf16>
    %cst_103 = arith.constant dense<0.000000e+00> : vector<2x128xf32>
    %439 = tpu.matmul %438, %1, %cst_103 {dimension_numbers = #tpu.dot_dimension_numbers<[1], [0], [0], [1], [0, 0, 1, 1], [], []>} : vector<2x32xbf16>, vector<32x128xbf16>, vector<2x128xf32> -> vector<2x128xf32>
    %440 = arith.addf %437, %439 : vector<2x128xf32>
    %441 = vector.broadcast %2 : vector<1x128xf32> to vector<2x128xf32>
    %442 = arith.addf %440, %441 : vector<2x128xf32>
    %443 = vector.extract_strided_slice %442 {offsets = [0, 0], sizes = [2, 32], strides = [1, 1]} : vector<2x128xf32> to vector<2x32xf32>
    %444 = arith.negf %443 : vector<2x32xf32>
    %445 = math.exp %444 : vector<2x32xf32>
    %cst_104 = arith.constant 1.000000e+00 : f32
    %446 = vector.broadcast %cst_104 : f32 to vector<2x32xf32>
    %447 = arith.addf %446, %445 : vector<2x32xf32>
    %448 = arith.divf %446, %447 : vector<2x32xf32>
    %449 = vector.extract_strided_slice %442 {offsets = [0, 32], sizes = [2, 32], strides = [1, 1]} : vector<2x128xf32> to vector<2x32xf32>
    %450 = arith.negf %449 : vector<2x32xf32>
    %451 = math.exp %450 : vector<2x32xf32>
    %cst_105 = arith.constant 1.000000e+00 : f32
    %452 = vector.broadcast %cst_105 : f32 to vector<2x32xf32>
    %453 = arith.addf %452, %451 : vector<2x32xf32>
    %454 = arith.divf %452, %453 : vector<2x32xf32>
    %455 = vector.extract_strided_slice %442 {offsets = [0, 64], sizes = [2, 32], strides = [1, 1]} : vector<2x128xf32> to vector<2x32xf32>
    %456 = math.tanh %455 : vector<2x32xf32>
    %457 = vector.extract_strided_slice %442 {offsets = [0, 96], sizes = [2, 32], strides = [1, 1]} : vector<2x128xf32> to vector<2x32xf32>
    %458 = arith.negf %457 : vector<2x32xf32>
    %459 = math.exp %458 : vector<2x32xf32>
    %cst_106 = arith.constant 1.000000e+00 : f32
    %460 = vector.broadcast %cst_106 : f32 to vector<2x32xf32>
    %461 = arith.addf %460, %459 : vector<2x32xf32>
    %462 = arith.divf %460, %461 : vector<2x32xf32>
    %463 = arith.mulf %454, %394 : vector<2x32xf32>
    %464 = arith.mulf %448, %456 : vector<2x32xf32>
    %465 = arith.addf %463, %464 : vector<2x32xf32>
    %466 = math.tanh %465 : vector<2x32xf32>
    %467 = arith.mulf %462, %466 : vector<2x32xf32>
    %c7_i32_107 = arith.constant 7 : i32
    %468 = arith.subi %c7_i32_107, %c6_i32 : i32
    %469 = arith.index_cast %468 : i32 to index
    %c0_108 = arith.constant 0 : index
    %c0_109 = arith.constant 0 : index
    %470 = vector.load %arg0[%469, %c0_108, %c0_109] : memref<8x2x32xf32, #tpu.memory_space<vmem>>, vector<1x2x32xf32>
    %471 = vector.shape_cast %470 : vector<1x2x32xf32> to vector<2x32xf32>
    %472 = arith.truncf %471 : vector<2x32xf32> to vector<2x32xbf16>
    %cst_110 = arith.constant dense<0.000000e+00> : vector<2x128xf32>
    %473 = tpu.matmul %472, %3, %cst_110 {dimension_numbers = #tpu.dot_dimension_numbers<[1], [0], [0], [1], [0, 0, 1, 1], [], []>} : vector<2x32xbf16>, vector<32x128xbf16>, vector<2x128xf32> -> vector<2x128xf32>
    %474 = arith.truncf %432 : vector<2x32xf32> to vector<2x32xbf16>
    %cst_111 = arith.constant dense<0.000000e+00> : vector<2x128xf32>
    %475 = tpu.matmul %474, %4, %cst_111 {dimension_numbers = #tpu.dot_dimension_numbers<[1], [0], [0], [1], [0, 0, 1, 1], [], []>} : vector<2x32xbf16>, vector<32x128xbf16>, vector<2x128xf32> -> vector<2x128xf32>
    %476 = arith.addf %473, %475 : vector<2x128xf32>
    %477 = vector.broadcast %5 : vector<1x128xf32> to vector<2x128xf32>
    %478 = arith.addf %476, %477 : vector<2x128xf32>
    %479 = vector.extract_strided_slice %478 {offsets = [0, 0], sizes = [2, 32], strides = [1, 1]} : vector<2x128xf32> to vector<2x32xf32>
    %480 = arith.negf %479 : vector<2x32xf32>
    %481 = math.exp %480 : vector<2x32xf32>
    %cst_112 = arith.constant 1.000000e+00 : f32
    %482 = vector.broadcast %cst_112 : f32 to vector<2x32xf32>
    %483 = arith.addf %482, %481 : vector<2x32xf32>
    %484 = arith.divf %482, %483 : vector<2x32xf32>
    %485 = vector.extract_strided_slice %478 {offsets = [0, 32], sizes = [2, 32], strides = [1, 1]} : vector<2x128xf32> to vector<2x32xf32>
    %486 = arith.negf %485 : vector<2x32xf32>
    %487 = math.exp %486 : vector<2x32xf32>
    %cst_113 = arith.constant 1.000000e+00 : f32
    %488 = vector.broadcast %cst_113 : f32 to vector<2x32xf32>
    %489 = arith.addf %488, %487 : vector<2x32xf32>
    %490 = arith.divf %488, %489 : vector<2x32xf32>
    %491 = vector.extract_strided_slice %478 {offsets = [0, 64], sizes = [2, 32], strides = [1, 1]} : vector<2x128xf32> to vector<2x32xf32>
    %492 = math.tanh %491 : vector<2x32xf32>
    %493 = vector.extract_strided_slice %478 {offsets = [0, 96], sizes = [2, 32], strides = [1, 1]} : vector<2x128xf32> to vector<2x32xf32>
    %494 = arith.negf %493 : vector<2x32xf32>
    %495 = math.exp %494 : vector<2x32xf32>
    %cst_114 = arith.constant 1.000000e+00 : f32
    %496 = vector.broadcast %cst_114 : f32 to vector<2x32xf32>
    %497 = arith.addf %496, %495 : vector<2x32xf32>
    %498 = arith.divf %496, %497 : vector<2x32xf32>
    %499 = arith.mulf %490, %430 : vector<2x32xf32>
    %500 = arith.mulf %484, %492 : vector<2x32xf32>
    %501 = arith.addf %499, %500 : vector<2x32xf32>
    %502 = math.tanh %501 : vector<2x32xf32>
    %503 = arith.mulf %498, %502 : vector<2x32xf32>
    %c7_i32_115 = arith.constant 7 : i32
    %504 = arith.index_cast %c7_i32_115 : i32 to index
    %c0_116 = arith.constant 0 : index
    %c0_117 = arith.constant 0 : index
    %505 = vector.load %arg0[%504, %c0_116, %c0_117] : memref<8x2x32xf32, #tpu.memory_space<vmem>>, vector<1x2x32xf32>
    %506 = vector.shape_cast %505 : vector<1x2x32xf32> to vector<2x32xf32>
    %507 = arith.truncf %506 : vector<2x32xf32> to vector<2x32xbf16>
    %cst_118 = arith.constant dense<0.000000e+00> : vector<2x128xf32>
    %508 = tpu.matmul %507, %0, %cst_118 {dimension_numbers = #tpu.dot_dimension_numbers<[1], [0], [0], [1], [0, 0, 1, 1], [], []>} : vector<2x32xbf16>, vector<32x128xbf16>, vector<2x128xf32> -> vector<2x128xf32>
    %509 = arith.truncf %467 : vector<2x32xf32> to vector<2x32xbf16>
    %cst_119 = arith.constant dense<0.000000e+00> : vector<2x128xf32>
    %510 = tpu.matmul %509, %1, %cst_119 {dimension_numbers = #tpu.dot_dimension_numbers<[1], [0], [0], [1], [0, 0, 1, 1], [], []>} : vector<2x32xbf16>, vector<32x128xbf16>, vector<2x128xf32> -> vector<2x128xf32>
    %511 = arith.addf %508, %510 : vector<2x128xf32>
    %512 = vector.broadcast %2 : vector<1x128xf32> to vector<2x128xf32>
    %513 = arith.addf %511, %512 : vector<2x128xf32>
    %514 = vector.extract_strided_slice %513 {offsets = [0, 0], sizes = [2, 32], strides = [1, 1]} : vector<2x128xf32> to vector<2x32xf32>
    %515 = arith.negf %514 : vector<2x32xf32>
    %516 = math.exp %515 : vector<2x32xf32>
    %cst_120 = arith.constant 1.000000e+00 : f32
    %517 = vector.broadcast %cst_120 : f32 to vector<2x32xf32>
    %518 = arith.addf %517, %516 : vector<2x32xf32>
    %519 = arith.divf %517, %518 : vector<2x32xf32>
    %520 = vector.extract_strided_slice %513 {offsets = [0, 32], sizes = [2, 32], strides = [1, 1]} : vector<2x128xf32> to vector<2x32xf32>
    %521 = arith.negf %520 : vector<2x32xf32>
    %522 = math.exp %521 : vector<2x32xf32>
    %cst_121 = arith.constant 1.000000e+00 : f32
    %523 = vector.broadcast %cst_121 : f32 to vector<2x32xf32>
    %524 = arith.addf %523, %522 : vector<2x32xf32>
    %525 = arith.divf %523, %524 : vector<2x32xf32>
    %526 = vector.extract_strided_slice %513 {offsets = [0, 64], sizes = [2, 32], strides = [1, 1]} : vector<2x128xf32> to vector<2x32xf32>
    %527 = math.tanh %526 : vector<2x32xf32>
    %528 = vector.extract_strided_slice %513 {offsets = [0, 96], sizes = [2, 32], strides = [1, 1]} : vector<2x128xf32> to vector<2x32xf32>
    %529 = arith.negf %528 : vector<2x32xf32>
    %530 = math.exp %529 : vector<2x32xf32>
    %cst_122 = arith.constant 1.000000e+00 : f32
    %531 = vector.broadcast %cst_122 : f32 to vector<2x32xf32>
    %532 = arith.addf %531, %530 : vector<2x32xf32>
    %533 = arith.divf %531, %532 : vector<2x32xf32>
    %534 = arith.mulf %525, %465 : vector<2x32xf32>
    %535 = arith.mulf %519, %527 : vector<2x32xf32>
    %536 = arith.addf %534, %535 : vector<2x32xf32>
    %537 = math.tanh %536 : vector<2x32xf32>
    %538 = arith.mulf %533, %537 : vector<2x32xf32>
    %c7_i32_123 = arith.constant 7 : i32
    %539 = arith.subi %c7_i32_123, %c7_i32_115 : i32
    %540 = arith.index_cast %539 : i32 to index
    %c0_124 = arith.constant 0 : index
    %c0_125 = arith.constant 0 : index
    %541 = vector.load %arg0[%540, %c0_124, %c0_125] : memref<8x2x32xf32, #tpu.memory_space<vmem>>, vector<1x2x32xf32>
    %542 = vector.shape_cast %541 : vector<1x2x32xf32> to vector<2x32xf32>
    %543 = arith.truncf %542 : vector<2x32xf32> to vector<2x32xbf16>
    %cst_126 = arith.constant dense<0.000000e+00> : vector<2x128xf32>
    %544 = tpu.matmul %543, %3, %cst_126 {dimension_numbers = #tpu.dot_dimension_numbers<[1], [0], [0], [1], [0, 0, 1, 1], [], []>} : vector<2x32xbf16>, vector<32x128xbf16>, vector<2x128xf32> -> vector<2x128xf32>
    %545 = arith.truncf %503 : vector<2x32xf32> to vector<2x32xbf16>
    %cst_127 = arith.constant dense<0.000000e+00> : vector<2x128xf32>
    %546 = tpu.matmul %545, %4, %cst_127 {dimension_numbers = #tpu.dot_dimension_numbers<[1], [0], [0], [1], [0, 0, 1, 1], [], []>} : vector<2x32xbf16>, vector<32x128xbf16>, vector<2x128xf32> -> vector<2x128xf32>
    %547 = arith.addf %544, %546 : vector<2x128xf32>
    %548 = vector.broadcast %5 : vector<1x128xf32> to vector<2x128xf32>
    %549 = arith.addf %547, %548 : vector<2x128xf32>
    %550 = vector.extract_strided_slice %549 {offsets = [0, 0], sizes = [2, 32], strides = [1, 1]} : vector<2x128xf32> to vector<2x32xf32>
    %551 = arith.negf %550 : vector<2x32xf32>
    %552 = math.exp %551 : vector<2x32xf32>
    %cst_128 = arith.constant 1.000000e+00 : f32
    %553 = vector.broadcast %cst_128 : f32 to vector<2x32xf32>
    %554 = arith.addf %553, %552 : vector<2x32xf32>
    %555 = arith.divf %553, %554 : vector<2x32xf32>
    %556 = vector.extract_strided_slice %549 {offsets = [0, 32], sizes = [2, 32], strides = [1, 1]} : vector<2x128xf32> to vector<2x32xf32>
    %557 = arith.negf %556 : vector<2x32xf32>
    %558 = math.exp %557 : vector<2x32xf32>
    %cst_129 = arith.constant 1.000000e+00 : f32
    %559 = vector.broadcast %cst_129 : f32 to vector<2x32xf32>
    %560 = arith.addf %559, %558 : vector<2x32xf32>
    %561 = arith.divf %559, %560 : vector<2x32xf32>
    %562 = vector.extract_strided_slice %549 {offsets = [0, 64], sizes = [2, 32], strides = [1, 1]} : vector<2x128xf32> to vector<2x32xf32>
    %563 = math.tanh %562 : vector<2x32xf32>
    %564 = vector.extract_strided_slice %549 {offsets = [0, 96], sizes = [2, 32], strides = [1, 1]} : vector<2x128xf32> to vector<2x32xf32>
    %565 = arith.negf %564 : vector<2x32xf32>
    %566 = math.exp %565 : vector<2x32xf32>
    %cst_130 = arith.constant 1.000000e+00 : f32
    %567 = vector.broadcast %cst_130 : f32 to vector<2x32xf32>
    %568 = arith.addf %567, %566 : vector<2x32xf32>
    %569 = arith.divf %567, %568 : vector<2x32xf32>
    %570 = arith.mulf %561, %501 : vector<2x32xf32>
    %571 = arith.mulf %555, %563 : vector<2x32xf32>
    %572 = arith.addf %570, %571 : vector<2x32xf32>
    %573 = math.tanh %572 : vector<2x32xf32>
    %574 = arith.mulf %569, %573 : vector<2x32xf32>
    %c8_i32 = arith.constant 8 : i32
    %575 = tpu.concatenate %538, %574 in 1 : vector<2x32xf32>, vector<2x32xf32> -> vector<2x64xf32>
    %c0_131 = arith.constant 0 : index
    %c0_132 = arith.constant 0 : index
    %576 = vector.load %arg7[%c0_131, %c0_132] : memref<1x64xf32, #tpu.memory_space<vmem>>, vector<1x64xf32>
    %577 = vector.broadcast %576 : vector<1x64xf32> to vector<2x64xf32>
    %578 = arith.mulf %575, %577 : vector<2x64xf32>
    %cst_133 = arith.constant dense<0.000000e+00> : vector<2xf32>
    %579 = vector.multi_reduction <add>, %578, %cst_133 [1] : vector<2x64xf32> to vector<2xf32>
    %580 = vector.shape_cast %579 : vector<2xf32> to vector<2x1xf32>
    %c0_134 = arith.constant 0 : index
    %c0_135 = arith.constant 0 : index
    %581 = vector.load %arg8[%c0_134, %c0_135] : memref<1x1xf32, #tpu.memory_space<vmem>>, vector<1x1xf32>
    %582 = vector.broadcast %581 : vector<1x1xf32> to vector<2x1xf32>
    %583 = arith.addf %580, %582 : vector<2x1xf32>
    %c0_136 = arith.constant 0 : index
    %c0_137 = arith.constant 0 : index
    %584 = vector.load %arg9[%c0_136, %c0_137] : memref<2x1xf32, #tpu.memory_space<vmem>>, vector<2x1xf32>
    tpu.vector_store %arg9[%c0_136, %c0_137], %583 {strides = array<i32>} : memref<2x1xf32, #tpu.memory_space<vmem>>, vector<2x1xf32>,
    return
  }
}

module attributes {stable_mosaic.version = 11 : i64} {
  func.func @_bert_layer_kernel(%arg0: memref<16x32xf32, #tpu.memory_space<vmem>>, %arg1: memref<2x8xf32, #tpu.memory_space<vmem>>, %arg2: memref<32x96xbf16, #tpu.memory_space<vmem>>, %arg3: memref<1x96xf32, #tpu.memory_space<vmem>>, %arg4: memref<32x32xbf16, #tpu.memory_space<vmem>>, %arg5: memref<1x32xf32, #tpu.memory_space<vmem>>, %arg6: memref<1x32xf32, #tpu.memory_space<vmem>>, %arg7: memref<1x32xf32, #tpu.memory_space<vmem>>, %arg8: memref<32x128xbf16, #tpu.memory_space<vmem>>, %arg9: memref<1x128xf32, #tpu.memory_space<vmem>>, %arg10: memref<128x32xbf16, #tpu.memory_space<vmem>>, %arg11: memref<1x32xf32, #tpu.memory_space<vmem>>, %arg12: memref<1x32xf32, #tpu.memory_space<vmem>>, %arg13: memref<1x32xf32, #tpu.memory_space<vmem>>, %arg14: memref<16x32xf32, #tpu.memory_space<vmem>>) attributes {dimension_semantics = [], scalar_prefetch = 0 : i64, scratch_operands = 0 : i64, tpu.core_type = #tpu.core_type<tc>} {
    %c0 = arith.constant 0 : index
    %c0_0 = arith.constant 0 : index
    %0 = vector.load %arg0[%c0, %c0_0] : memref<16x32xf32, #tpu.memory_space<vmem>>, vector<16x32xf32>
    %1 = arith.truncf %0 : vector<16x32xf32> to vector<16x32xbf16>
    %c0_1 = arith.constant 0 : index
    %c0_2 = arith.constant 0 : index
    %2 = vector.load %arg2[%c0_1, %c0_2] : memref<32x96xbf16, #tpu.memory_space<vmem>>, vector<32x96xbf16>
    %cst = arith.constant dense<0.000000e+00> : vector<16x96xf32>
    %3 = tpu.matmul %1, %2, %cst {dimension_numbers = #tpu.dot_dimension_numbers<[1], [0], [0], [1], [0, 0, 1, 1], [], []>} : vector<16x32xbf16>, vector<32x96xbf16>, vector<16x96xf32> -> vector<16x96xf32>
    %c0_3 = arith.constant 0 : index
    %c0_4 = arith.constant 0 : index
    %4 = vector.load %arg3[%c0_3, %c0_4] : memref<1x96xf32, #tpu.memory_space<vmem>>, vector<1x96xf32>
    %5 = vector.broadcast %4 : vector<1x96xf32> to vector<16x96xf32>
    %6 = arith.addf %3, %5 : vector<16x96xf32>
    %c0_5 = arith.constant 0 : index
    %c0_6 = arith.constant 0 : index
    %7 = vector.load %arg1[%c0_5, %c0_6] : memref<2x8xf32, #tpu.memory_space<vmem>>, vector<2x8xf32>
    %cst_7 = arith.constant 1.000000e+00 : f32
    %8 = vector.broadcast %cst_7 : f32 to vector<2x8xf32>
    %9 = arith.subf %8, %7 : vector<2x8xf32>
    %cst_8 = arith.constant -1.000000e+09 : f32
    %10 = vector.broadcast %cst_8 : f32 to vector<2x8xf32>
    %11 = arith.mulf %9, %10 : vector<2x8xf32>
    %12 = vector.extract_strided_slice %6 {offsets = [0, 0], sizes = [16, 32], strides = [1, 1]} : vector<16x96xf32> to vector<16x32xf32>
    %cst_9 = arith.constant 2.500000e-01 : f32
    %13 = vector.broadcast %cst_9 : f32 to vector<16x32xf32>
    %14 = arith.mulf %12, %13 : vector<16x32xf32>
    %15 = vector.shape_cast %14 : vector<16x32xf32> to vector<2x8x32xf32>
    %16 = vector.extract_strided_slice %6 {offsets = [0, 32], sizes = [16, 32], strides = [1, 1]} : vector<16x96xf32> to vector<16x32xf32>
    %17 = vector.shape_cast %16 : vector<16x32xf32> to vector<2x8x32xf32>
    %18 = vector.extract_strided_slice %6 {offsets = [0, 64], sizes = [16, 32], strides = [1, 1]} : vector<16x96xf32> to vector<16x32xf32>
    %19 = vector.shape_cast %18 : vector<16x32xf32> to vector<2x8x32xf32>
    %20 = vector.extract_strided_slice %15 {offsets = [0, 0, 0], sizes = [2, 8, 16], strides = [1, 1, 1]} : vector<2x8x32xf32> to vector<2x8x16xf32>
    %21 = arith.truncf %20 : vector<2x8x16xf32> to vector<2x8x16xbf16>
    %22 = vector.extract_strided_slice %17 {offsets = [0, 0, 0], sizes = [2, 8, 16], strides = [1, 1, 1]} : vector<2x8x32xf32> to vector<2x8x16xf32>
    %23 = arith.truncf %22 : vector<2x8x16xf32> to vector<2x8x16xbf16>
    %24 = vector.extract_strided_slice %19 {offsets = [0, 0, 0], sizes = [2, 8, 16], strides = [1, 1, 1]} : vector<2x8x32xf32> to vector<2x8x16xf32>
    %25 = arith.truncf %24 : vector<2x8x16xf32> to vector<2x8x16xbf16>
    "tpu.trace_start"() <{level = 10 : i32, message = "bqd,bkd->bqk"}> : () -> ()
    %cst_10 = arith.constant dense<0.000000e+00> : vector<2x8x8xf32>
    %26 = tpu.matmul %21, %23, %cst_10 {dimension_numbers = #tpu.dot_dimension_numbers<[2], [2], [1], [1], [0, 0, 0, 1, 1, 1], [0], [0]>} : vector<2x8x16xbf16>, vector<2x8x16xbf16>, vector<2x8x8xf32> -> vector<2x8x8xf32>
    "tpu.trace_stop"() : () -> ()
    %27 = vector.shape_cast %11 : vector<2x8xf32> to vector<2x1x8xf32>
    %28 = vector.broadcast %27 : vector<2x1x8xf32> to vector<2x8x8xf32>
    %29 = arith.addf %26, %28 : vector<2x8x8xf32>
    %cst_11 = arith.constant dense<0xFF800000> : vector<2x8xf32>
    %30 = vector.multi_reduction <maximumf>, %29, %cst_11 [2] : vector<2x8x8xf32> to vector<2x8xf32>
    %31 = vector.shape_cast %30 : vector<2x8xf32> to vector<2x8x1xf32>
    %32 = vector.broadcast %31 : vector<2x8x1xf32> to vector<2x8x8xf32>
    %33 = arith.subf %29, %32 : vector<2x8x8xf32>
    %34 = math.exp %33 : vector<2x8x8xf32>
    %cst_12 = arith.constant dense<0.000000e+00> : vector<2x8xf32>
    %35 = vector.multi_reduction <add>, %34, %cst_12 [2] : vector<2x8x8xf32> to vector<2x8xf32>
    %36 = vector.shape_cast %35 : vector<2x8xf32> to vector<2x8x1xf32>
    %37 = tpu.reciprocal %36 {approx = true} : vector<2x8x1xf32> -> vector<2x8x1xf32>
    %38 = vector.broadcast %37 : vector<2x8x1xf32> to vector<2x8x8xf32>
    %39 = arith.mulf %34, %38 : vector<2x8x8xf32>
    %40 = arith.truncf %39 : vector<2x8x8xf32> to vector<2x8x8xbf16>
    "tpu.trace_start"() <{level = 10 : i32, message = "bqk,bkd->bqd"}> : () -> ()
    %cst_13 = arith.constant dense<0.000000e+00> : vector<2x8x16xf32>
    %41 = tpu.matmul %40, %25, %cst_13 {dimension_numbers = #tpu.dot_dimension_numbers<[2], [1], [1], [2], [0, 0, 0, 1, 1, 2], [0], [0]>} : vector<2x8x8xbf16>, vector<2x8x16xbf16>, vector<2x8x16xf32> -> vector<2x8x16xf32>
    "tpu.trace_stop"() : () -> ()
    %42 = vector.extract_strided_slice %15 {offsets = [0, 0, 16], sizes = [2, 8, 16], strides = [1, 1, 1]} : vector<2x8x32xf32> to vector<2x8x16xf32>
    %43 = arith.truncf %42 : vector<2x8x16xf32> to vector<2x8x16xbf16>
    %44 = vector.extract_strided_slice %17 {offsets = [0, 0, 16], sizes = [2, 8, 16], strides = [1, 1, 1]} : vector<2x8x32xf32> to vector<2x8x16xf32>
    %45 = arith.truncf %44 : vector<2x8x16xf32> to vector<2x8x16xbf16>
    %46 = vector.extract_strided_slice %19 {offsets = [0, 0, 16], sizes = [2, 8, 16], strides = [1, 1, 1]} : vector<2x8x32xf32> to vector<2x8x16xf32>
    %47 = arith.truncf %46 : vector<2x8x16xf32> to vector<2x8x16xbf16>
    "tpu.trace_start"() <{level = 10 : i32, message = "bqd,bkd->bqk"}> : () -> ()
    %cst_14 = arith.constant dense<0.000000e+00> : vector<2x8x8xf32>
    %48 = tpu.matmul %43, %45, %cst_14 {dimension_numbers = #tpu.dot_dimension_numbers<[2], [2], [1], [1], [0, 0, 0, 1, 1, 1], [0], [0]>} : vector<2x8x16xbf16>, vector<2x8x16xbf16>, vector<2x8x8xf32> -> vector<2x8x8xf32>
    "tpu.trace_stop"() : () -> ()
    %49 = vector.shape_cast %11 : vector<2x8xf32> to vector<2x1x8xf32>
    %50 = vector.broadcast %49 : vector<2x1x8xf32> to vector<2x8x8xf32>
    %51 = arith.addf %48, %50 : vector<2x8x8xf32>
    %cst_15 = arith.constant dense<0xFF800000> : vector<2x8xf32>
    %52 = vector.multi_reduction <maximumf>, %51, %cst_15 [2] : vector<2x8x8xf32> to vector<2x8xf32>
    %53 = vector.shape_cast %52 : vector<2x8xf32> to vector<2x8x1xf32>
    %54 = vector.broadcast %53 : vector<2x8x1xf32> to vector<2x8x8xf32>
    %55 = arith.subf %51, %54 : vector<2x8x8xf32>
    %56 = math.exp %55 : vector<2x8x8xf32>
    %cst_16 = arith.constant dense<0.000000e+00> : vector<2x8xf32>
    %57 = vector.multi_reduction <add>, %56, %cst_16 [2] : vector<2x8x8xf32> to vector<2x8xf32>
    %58 = vector.shape_cast %57 : vector<2x8xf32> to vector<2x8x1xf32>
    %59 = tpu.reciprocal %58 {approx = true} : vector<2x8x1xf32> -> vector<2x8x1xf32>
    %60 = vector.broadcast %59 : vector<2x8x1xf32> to vector<2x8x8xf32>
    %61 = arith.mulf %56, %60 : vector<2x8x8xf32>
    %62 = arith.truncf %61 : vector<2x8x8xf32> to vector<2x8x8xbf16>
    "tpu.trace_start"() <{level = 10 : i32, message = "bqk,bkd->bqd"}> : () -> ()
    %cst_17 = arith.constant dense<0.000000e+00> : vector<2x8x16xf32>
    %63 = tpu.matmul %62, %47, %cst_17 {dimension_numbers = #tpu.dot_dimension_numbers<[2], [1], [1], [2], [0, 0, 0, 1, 1, 2], [0], [0]>} : vector<2x8x8xbf16>, vector<2x8x16xbf16>, vector<2x8x16xf32> -> vector<2x8x16xf32>
    "tpu.trace_stop"() : () -> ()
    %64 = tpu.concatenate %41, %63 in 2 : vector<2x8x16xf32>, vector<2x8x16xf32> -> vector<2x8x32xf32>
    %65 = vector.shape_cast %64 : vector<2x8x32xf32> to vector<16x32xf32>
    %66 = arith.truncf %65 : vector<16x32xf32> to vector<16x32xbf16>
    %c0_18 = arith.constant 0 : index
    %c0_19 = arith.constant 0 : index
    %67 = vector.load %arg4[%c0_18, %c0_19] : memref<32x32xbf16, #tpu.memory_space<vmem>>, vector<32x32xbf16>
    %cst_20 = arith.constant dense<0.000000e+00> : vector<16x32xf32>
    %68 = tpu.matmul %66, %67, %cst_20 {dimension_numbers = #tpu.dot_dimension_numbers<[1], [0], [0], [1], [0, 0, 1, 1], [], []>} : vector<16x32xbf16>, vector<32x32xbf16>, vector<16x32xf32> -> vector<16x32xf32>
    %c0_21 = arith.constant 0 : index
    %c0_22 = arith.constant 0 : index
    %69 = vector.load %arg5[%c0_21, %c0_22] : memref<1x32xf32, #tpu.memory_space<vmem>>, vector<1x32xf32>
    %70 = vector.broadcast %69 : vector<1x32xf32> to vector<16x32xf32>
    %71 = arith.addf %68, %70 : vector<16x32xf32>
    %72 = arith.addf %71, %0 : vector<16x32xf32>
    %c0_23 = arith.constant 0 : index
    %c0_24 = arith.constant 0 : index
    %73 = vector.load %arg6[%c0_23, %c0_24] : memref<1x32xf32, #tpu.memory_space<vmem>>, vector<1x32xf32>
    %c0_25 = arith.constant 0 : index
    %c0_26 = arith.constant 0 : index
    %74 = vector.load %arg7[%c0_25, %c0_26] : memref<1x32xf32, #tpu.memory_space<vmem>>, vector<1x32xf32>
    %cst_27 = arith.constant dense<0.000000e+00> : vector<16xf32>
    %75 = vector.multi_reduction <add>, %72, %cst_27 [1] : vector<16x32xf32> to vector<16xf32>
    %76 = vector.shape_cast %75 : vector<16xf32> to vector<16x1xf32>
    %cst_28 = arith.constant 3.200000e+01 : f32
    %77 = vector.broadcast %cst_28 : f32 to vector<16x1xf32>
    %78 = arith.divf %76, %77 : vector<16x1xf32>
    %79 = vector.broadcast %78 : vector<16x1xf32> to vector<16x32xf32>
    %80 = arith.subf %72, %79 : vector<16x32xf32>
    %81 = arith.mulf %80, %80 : vector<16x32xf32>
    %cst_29 = arith.constant dense<0.000000e+00> : vector<16xf32>
    %82 = vector.multi_reduction <add>, %81, %cst_29 [1] : vector<16x32xf32> to vector<16xf32>
    %83 = vector.shape_cast %82 : vector<16xf32> to vector<16x1xf32>
    %cst_30 = arith.constant 3.200000e+01 : f32
    %84 = vector.broadcast %cst_30 : f32 to vector<16x1xf32>
    %85 = arith.divf %83, %84 : vector<16x1xf32>
    %86 = vector.broadcast %78 : vector<16x1xf32> to vector<16x32xf32>
    %87 = arith.subf %72, %86 : vector<16x32xf32>
    %cst_31 = arith.constant 9.99999996E-13 : f32
    %88 = vector.broadcast %cst_31 : f32 to vector<16x1xf32>
    %89 = arith.addf %85, %88 : vector<16x1xf32>
    %90 = math.rsqrt %89 : vector<16x1xf32>
    %91 = vector.broadcast %90 : vector<16x1xf32> to vector<16x32xf32>
    %92 = arith.mulf %87, %91 : vector<16x32xf32>
    %93 = vector.broadcast %73 : vector<1x32xf32> to vector<16x32xf32>
    %94 = arith.mulf %92, %93 : vector<16x32xf32>
    %95 = vector.broadcast %74 : vector<1x32xf32> to vector<16x32xf32>
    %96 = arith.addf %94, %95 : vector<16x32xf32>
    %97 = arith.truncf %96 : vector<16x32xf32> to vector<16x32xbf16>
    %c0_32 = arith.constant 0 : index
    %c0_33 = arith.constant 0 : index
    %98 = vector.load %arg8[%c0_32, %c0_33] : memref<32x128xbf16, #tpu.memory_space<vmem>>, vector<32x128xbf16>
    %cst_34 = arith.constant dense<0.000000e+00> : vector<16x128xf32>
    %99 = tpu.matmul %97, %98, %cst_34 {dimension_numbers = #tpu.dot_dimension_numbers<[1], [0], [0], [1], [0, 0, 1, 1], [], []>} : vector<16x32xbf16>, vector<32x128xbf16>, vector<16x128xf32> -> vector<16x128xf32>
    %c0_35 = arith.constant 0 : index
    %c0_36 = arith.constant 0 : index
    %100 = vector.load %arg9[%c0_35, %c0_36] : memref<1x128xf32, #tpu.memory_space<vmem>>, vector<1x128xf32>
    %101 = vector.broadcast %100 : vector<1x128xf32> to vector<16x128xf32>
    %102 = arith.addf %99, %101 : vector<16x128xf32>
    %cst_37 = arith.constant 5.000000e-01 : f32
    %103 = vector.broadcast %cst_37 : f32 to vector<16x128xf32>
    %104 = arith.mulf %103, %102 : vector<16x128xf32>
    %cst_38 = arith.constant 4.471500e-02 : f32
    %105 = vector.broadcast %cst_38 : f32 to vector<16x128xf32>
    %106 = arith.mulf %105, %102 : vector<16x128xf32>
    %107 = arith.mulf %106, %102 : vector<16x128xf32>
    %108 = arith.mulf %107, %102 : vector<16x128xf32>
    %109 = arith.addf %102, %108 : vector<16x128xf32>
    %cst_39 = arith.constant 0.797884583 : f32
    %110 = vector.broadcast %cst_39 : f32 to vector<16x128xf32>
    %111 = arith.mulf %110, %109 : vector<16x128xf32>
    %112 = math.tanh %111 : vector<16x128xf32>
    %cst_40 = arith.constant 1.000000e+00 : f32
    %113 = vector.broadcast %cst_40 : f32 to vector<16x128xf32>
    %114 = arith.addf %113, %112 : vector<16x128xf32>
    %115 = arith.mulf %104, %114 : vector<16x128xf32>
    %116 = arith.truncf %115 : vector<16x128xf32> to vector<16x128xbf16>
    %c0_41 = arith.constant 0 : index
    %c0_42 = arith.constant 0 : index
    %117 = vector.load %arg10[%c0_41, %c0_42] : memref<128x32xbf16, #tpu.memory_space<vmem>>, vector<128x32xbf16>
    %cst_43 = arith.constant dense<0.000000e+00> : vector<16x32xf32>
    %118 = tpu.matmul %116, %117, %cst_43 {dimension_numbers = #tpu.dot_dimension_numbers<[1], [0], [0], [1], [0, 0, 1, 1], [], []>} : vector<16x128xbf16>, vector<128x32xbf16>, vector<16x32xf32> -> vector<16x32xf32>
    %c0_44 = arith.constant 0 : index
    %c0_45 = arith.constant 0 : index
    %119 = vector.load %arg11[%c0_44, %c0_45] : memref<1x32xf32, #tpu.memory_space<vmem>>, vector<1x32xf32>
    %120 = vector.broadcast %119 : vector<1x32xf32> to vector<16x32xf32>
    %121 = arith.addf %118, %120 : vector<16x32xf32>
    %122 = arith.addf %121, %96 : vector<16x32xf32>
    %c0_46 = arith.constant 0 : index
    %c0_47 = arith.constant 0 : index
    %123 = vector.load %arg12[%c0_46, %c0_47] : memref<1x32xf32, #tpu.memory_space<vmem>>, vector<1x32xf32>
    %c0_48 = arith.constant 0 : index
    %c0_49 = arith.constant 0 : index
    %124 = vector.load %arg13[%c0_48, %c0_49] : memref<1x32xf32, #tpu.memory_space<vmem>>, vector<1x32xf32>
    %cst_50 = arith.constant dense<0.000000e+00> : vector<16xf32>
    %125 = vector.multi_reduction <add>, %122, %cst_50 [1] : vector<16x32xf32> to vector<16xf32>
    %126 = vector.shape_cast %125 : vector<16xf32> to vector<16x1xf32>
    %cst_51 = arith.constant 3.200000e+01 : f32
    %127 = vector.broadcast %cst_51 : f32 to vector<16x1xf32>
    %128 = arith.divf %126, %127 : vector<16x1xf32>
    %129 = vector.broadcast %128 : vector<16x1xf32> to vector<16x32xf32>
    %130 = arith.subf %122, %129 : vector<16x32xf32>
    %131 = arith.mulf %130, %130 : vector<16x32xf32>
    %cst_52 = arith.constant dense<0.000000e+00> : vector<16xf32>
    %132 = vector.multi_reduction <add>, %131, %cst_52 [1] : vector<16x32xf32> to vector<16xf32>
    %133 = vector.shape_cast %132 : vector<16xf32> to vector<16x1xf32>
    %cst_53 = arith.constant 3.200000e+01 : f32
    %134 = vector.broadcast %cst_53 : f32 to vector<16x1xf32>
    %135 = arith.divf %133, %134 : vector<16x1xf32>
    %136 = vector.broadcast %128 : vector<16x1xf32> to vector<16x32xf32>
    %137 = arith.subf %122, %136 : vector<16x32xf32>
    %cst_54 = arith.constant 9.99999996E-13 : f32
    %138 = vector.broadcast %cst_54 : f32 to vector<16x1xf32>
    %139 = arith.addf %135, %138 : vector<16x1xf32>
    %140 = math.rsqrt %139 : vector<16x1xf32>
    %141 = vector.broadcast %140 : vector<16x1xf32> to vector<16x32xf32>
    %142 = arith.mulf %137, %141 : vector<16x32xf32>
    %143 = vector.broadcast %123 : vector<1x32xf32> to vector<16x32xf32>
    %144 = arith.mulf %142, %143 : vector<16x32xf32>
    %145 = vector.broadcast %124 : vector<1x32xf32> to vector<16x32xf32>
    %146 = arith.addf %144, %145 : vector<16x32xf32>
    %c0_55 = arith.constant 0 : index
    %c0_56 = arith.constant 0 : index
    %147 = vector.load %arg14[%c0_55, %c0_56] : memref<16x32xf32, #tpu.memory_space<vmem>>, vector<16x32xf32>
    tpu.vector_store %arg14[%c0_55, %c0_56], %146 {strides = array<i32>} : memref<16x32xf32, #tpu.memory_space<vmem>>, vector<16x32xf32>,
    return
  }
}

</mosaic_0001>

<llo_original>
// kernel: model_forward.4
$region0: #{model_forward.4}
  #allocation0 [shape = 'u32[]', space=smem, size = 0x4, offset = 0x4, fixed_abs, tag = 'smem constant byte address 0x4 - core index']
  #allocation1 [shape = 'u32[72,128]{1,0:T(1,128)}', space=vmem, size = 0x9000, scoped, tag = 'internal scratch']
  %s0 = inlined_call_operand.vmem [shape: f32[16,32], index: 0, kind: input, shape index: {}]
  %s1 = inlined_call_operand.vmem [shape: f32[1,32], index: 1, kind: input, shape index: {}]
  %s2 = inlined_call_operand.vmem [shape: f32[1,32], index: 2, kind: input, shape index: {}]
  %s3 = inlined_call_operand.vmem [shape: f32[16,32], index: 3, kind: output, shape index: {}]
  %s4 = sld [smem:[#allocation0]]
  $region22: #{model_forward.4} parent=0
    _
  %s6 = ssub.s32 1, %s4
  %s7 = scalar_select 0, %s6, %s4
  // Predicated region
  $region2: #{model_forward.4} parent=0 // pred_check
    _
  $region3: #{model_forward.4} parent=0 // pred_check_branch
    %9 = sbr.rel (0) target = $region5
  $region4: #{model_forward.4} parent=0 // pred_region
    _
  $region5: #{model_forward.4} parent=0 // pred_fallthru
    _
  // Predicated region
  $region6: #{model_forward.4} parent=0 // pred_check
    _
  $region7: #{model_forward.4} parent=0 // pred_check_branch
    %11 = sbr.rel (0) target = $region9
  $region8: #{model_forward.4} parent=0 // pred_region
    _
  $region9: #{model_forward.4} parent=0 // pred_fallthru
    _
  // Predicated region
  $region10: #{model_forward.4} parent=0 // pred_check
    _
  $region11: #{model_forward.4} parent=0 // pred_check_branch
    %13 = sbr.rel (0) target = $region13
  $region12: #{model_forward.4} parent=0 // pred_region
    _
  $region13: #{model_forward.4} parent=0 // pred_fallthru
    _
  %v14 = vld [vmem:[%s0] sm:$0xff]
  %v15 = vld [vmem:[%s0 + $0x8] sm:$0xff]
  %v16 = vld [vmem:[%s1] sm:$0x1]
  %v17 = vld [vmem:[%s2] sm:$0x1]
  %vm18 = vcmask 261120
  %v19 = vsel %vm18, %v14, 0.0
  %20 = vadd.xlane.f32.xlu0 %v19
  %v21 = vpop.xlane.xlu0 %20
  %v22 = vsel %vm18, %v15, 0.0
  %23 = vadd.xlane.f32.xlu0 %v22
  %v24 = vpop.xlane.xlu0 %23
  %v25 = vrcp.pop 32.0
  %v26 = vmul.f32 32.0, %v25
  %v27 = vsub.f32 1.0, %v26
  %v28 = vmul.f32 %v25, %v27
  %v29 = vadd.f32 %v25, %v28
  %vm30 = vweird.f32 %v25
  %v31 = vsel %vm30, %v25, %v29
  %v32 = vmul.f32 %v21, %v31
  %v33 = vmul.f32 %v24, %v31
  %v34 = vsub.f32 %v14, %v32
  %v35 = vsub.f32 %v15, %v33
  %v36 = vmul.f32 %v34, %v34
  %v37 = vmul.f32 %v35, %v35
  %v38 = vsel %vm18, %v36, 0.0
  %39 = vadd.xlane.f32.xlu0 %v38
  %v40 = vpop.xlane.xlu0 %39
  %v41 = vsel %vm18, %v37, 0.0
  %42 = vadd.xlane.f32.xlu0 %v41
  %v43 = vpop.xlane.xlu0 %42
  %v44 = vmul.f32 %v40, %v31
  %v45 = vmul.f32 %v43, %v31
  %v46 = vadd.f32 %v44, 1e-12
  %v47 = vadd.f32 %v45, 1e-12
  %v48 = vrsqrt.pop %v46
  %v49 = vmul.f32 %v48, %v46
  %v50 = vmul.f32 %v49, %v48
  %v51 = vmul.f32 0.5, %v50
  %v52 = vsub.f32 1.5, %v51
  %v53 = vmul.f32 %v48, %v52
  %vm54 = vweird.f32 %v46
  %vm55 = vweird.f32 %v48
  %vm56 = vmor %vm54, %vm55
  %v57 = vsel %vm56, %v48, %v53
  %v58 = vrsqrt.pop %v47
  %v59 = vmul.f32 %v58, %v47
  %v60 = vmul.f32 %v59, %v58
  %v61 = vmul.f32 0.5, %v60
  %v62 = vsub.f32 1.5, %v61
  %v63 = vmul.f32 %v58, %v62
  %vm64 = vweird.f32 %v47
  %vm65 = vweird.f32 %v58
  %vm66 = vmor %vm64, %vm65
  %v67 = vsel %vm66, %v58, %v63
  %v68 = vmul.f32 %v34, %v57
  %v69 = vmul.f32 %v35, %v67
  %v71 = vperm.slane %v16, 0
  %v73 = vmul.f32 %v68, %v71
  %v74 = vmul.f32 %v69, %v71
  %v76 = vperm.slane %v17, 0
  %v78 = vadd.f32 %v73, %v76
  %v79 = vadd.f32 %v74, %v76
  %80 = vst.msk [vmem:[%s3] sm:$0xff] %vm18, %v78
  %81 = vst.msk [vmem:[%s3 + $0x8] sm:$0xff] %vm18, %v79
  // Predicated region
  $region14: #{model_forward.4} parent=0 // pred_check
    _
  $region15: #{model_forward.4} parent=0 // pred_check_branch
    %83 = sbr.rel (0) target = $region17
  $region16: #{model_forward.4} parent=0 // pred_region
    _
  $region17: #{model_forward.4} parent=0 // pred_fallthru
    _
  // Predicated region
  $region18: #{model_forward.4} parent=0 // pred_check
    _
  $region19: #{model_forward.4} parent=0 // pred_check_branch
    %85 = sbr.rel (0) target = $region21
  $region20: #{model_forward.4} parent=0 // pred_region
    _
  $region21: #{model_forward.4} parent=0 // pred_fallthru
    _

// kernel: model_forward.7
$region0: #{model_forward.7}
  #allocation0 [shape = 'u32[]', space=smem, size = 0x4, offset = 0x4, fixed_abs, tag = 'smem constant byte address 0x4 - core index']
  #allocation1 [shape = 'u32[72,128]{1,0:T(1,128)}', space=vmem, size = 0x9000, scoped, tag = 'internal scratch']
  #allocation2 [shape = 'f32[1,1]{1,0:T(1,128)S(1)}', space=vmem, size = 0x200, scoped, tag = 'scoped memory for model_forward.7']
  %s0 = inlined_call_operand.vmem [shape: f32[8,2,32], index: 0, kind: input, shape index: {}]
  %s1 = inlined_call_operand.vmem [shape: bf16[32,128], index: 1, kind: input, shape index: {}]
  %s2 = inlined_call_operand.vmem [shape: bf16[32,128], index: 2, kind: input, shape index: {}]
  %s3 = inlined_call_operand.vmem [shape: f32[1,128], index: 3, kind: input, shape index: {}]
  %s4 = inlined_call_operand.vmem [shape: bf16[32,128], index: 4, kind: input, shape index: {}]
  %s5 = inlined_call_operand.vmem [shape: bf16[32,128], index: 5, kind: input, shape index: {}]
  %s6 = inlined_call_operand.vmem [shape: f32[1,128], index: 6, kind: input, shape index: {}]
  %s7 = inlined_call_operand.vmem [shape: f32[1,64], index: 7, kind: input, shape index: {}]
  %s8 = inlined_call_operand.<no memory space> [shape: f32[1,1], index: 8, kind: input, shape index: {}]
  %s9 = inlined_call_operand.vmem [shape: f32[2,1], index: 9, kind: output, shape index: {}]
  %s10 = sld [smem:[#allocation0]]
  $region46: #{model_forward.7} parent=0
    _
  %s12 = ssub.s32 1, %s10
  %s13 = scalar_select 0, %s12, %s10
  %v14 = vstv %s8
  %15 = vst [vmem:[#allocation2] sm:$0x1] %v14
  // Predicated region
  $region2: #{model_forward.7} parent=0 // pred_check
    _
  $region3: #{model_forward.7} parent=0 // pred_check_branch
    %17 = sbr.rel (0) target = $region5
  $region4: #{model_forward.7} parent=0 // pred_region
    _
  $region5: #{model_forward.7} parent=0 // pred_fallthru
    _
  // Predicated region
  $region6: #{model_forward.7} parent=0 // pred_check
    _
  $region7: #{model_forward.7} parent=0 // pred_check_branch
    %19 = sbr.rel (0) target = $region9
  $region8: #{model_forward.7} parent=0 // pred_region
    _
  $region9: #{model_forward.7} parent=0 // pred_fallthru
    _
  // Predicated region
  $region10: #{model_forward.7} parent=0 // pred_check
    _
  $region11: #{model_forward.7} parent=0 // pred_check_branch
    %21 = sbr.rel (0) target = $region13
  $region12: #{model_forward.7} parent=0 // pred_region
    _
  $region13: #{model_forward.7} parent=0 // pred_fallthru
    _
  // Predicated region
  $region14: #{model_forward.7} parent=0 // pred_check
    _
  $region15: #{model_forward.7} parent=0 // pred_check_branch
    %23 = sbr.rel (0) target = $region17
  $region16: #{model_forward.7} parent=0 // pred_region
    _
  $region17: #{model_forward.7} parent=0 // pred_fallthru
    _
  // Predicated region
  $region18: #{model_forward.7} parent=0 // pred_check
    _
  $region19: #{model_forward.7} parent=0 // pred_check_branch
    %25 = sbr.rel (0) target = $region21
  $region20: #{model_forward.7} parent=0 // pred_region
    _
  $region21: #{model_forward.7} parent=0 // pred_fallthru
    _
  // Predicated region
  $region22: #{model_forward.7} parent=0 // pred_check
    _
  $region23: #{model_forward.7} parent=0 // pred_check_branch
    %27 = sbr.rel (0) target = $region25
  $region24: #{model_forward.7} parent=0 // pred_region
    _
  $region25: #{model_forward.7} parent=0 // pred_fallthru
    _
  // Predicated region
  $region26: #{model_forward.7} parent=0 // pred_check
    _
  $region27: #{model_forward.7} parent=0 // pred_check_branch
    %29 = sbr.rel (0) target = $region29
  $region28: #{model_forward.7} parent=0 // pred_region
    _
  $region29: #{model_forward.7} parent=0 // pred_fallthru
    _
  // Predicated region
  $region30: #{model_forward.7} parent=0 // pred_check
    _
  $region31: #{model_forward.7} parent=0 // pred_check_branch
    %31 = sbr.rel (0) target = $region33
  $region32: #{model_forward.7} parent=0 // pred_region
    _
  $region33: #{model_forward.7} parent=0 // pred_fallthru
    _
  // Predicated region
  $region34: #{model_forward.7} parent=0 // pred_check
    _
  $region35: #{model_forward.7} parent=0 // pred_check_branch
    %33 = sbr.rel (0) target = $region37
  $region36: #{model_forward.7} parent=0 // pred_region
    _
  $region37: #{model_forward.7} parent=0 // pred_fallthru
    _
  %v35 = vld [vmem:[%s1] sm:$0xf]
  %v36 = vld [vmem:[%s1 + $0x4] sm:$0xf]
  %v37 = vld [vmem:[%s1 + $0x8] sm:$0xf]
  %v38 = vld [vmem:[%s1 + $0xc] sm:$0xf]
  %v39 = vld [vmem:[%s2] sm:$0xf]
  %v40 = vld [vmem:[%s2 + $0x4] sm:$0xf]
  %v41 = vld [vmem:[%s2 + $0x8] sm:$0xf]
  %v42 = vld [vmem:[%s2 + $0xc] sm:$0xf]
  %v43 = vld [vmem:[%s3] sm:$0x1]
  %v44 = vld [vmem:[%s4] sm:$0xf]
  %v45 = vld [vmem:[%s4 + $0x4] sm:$0xf]
  %v46 = vld [vmem:[%s4 + $0x8] sm:$0xf]
  %v47 = vld [vmem:[%s4 + $0xc] sm:$0xf]
  %v48 = vld [vmem:[%s5] sm:$0xf]
  %v49 = vld [vmem:[%s5 + $0x4] sm:$0xf]
  %v50 = vld [vmem:[%s5 + $0x8] sm:$0xf]
  %v51 = vld [vmem:[%s5 + $0xc] sm:$0xf]
  %v52 = vld [vmem:[%s6] sm:$0x1]
  %v53 = vld [vmem:[%s0] sm:$0x3]
  %v54 = vpack.c.bf16 %v53, %v53
  %v59 = vunpack.c.l.b16 %v39
  %v60 = vunpack.c.l.b16 %v40
  %v61 = vunpack.c.l.b16 %v41
  %v62 = vunpack.c.l.b16 %v42
  %v63 = vpack.c.b16 %v60, %v59
  %v64 = vpack.c.b16 %v62, %v61
  %vm67 = vcmask 261120
  %v69 = vsel %vm67, 0, 0
  %71 = vmatpush.bf16.msra.mxu0 0
  %72 = vmatpush.bf16.msra.mxu0 0
  %73 = vmatpush.bf16.msra.mxu0 0
  %74 = vmatpush.bf16.msra.mxu0 0
  %75 = vmatpush.bf16.msra.mxu0 0
  %76 = vmatpush.bf16.msra.mxu0 0
  %77 = vmatpush.bf16.msra.mxu0 %v64
  %78 = vmatpush.bf16.msra.mxu0 %v63
  %79 = vmatmul.bf16.gmra.mxu0 %v69
  %v80 = vpop.f32.mrf.mxu0
  %v81 = vadd.f32 0.0, %v80
  %v82 = vpop.f32.mrf.mxu0
  %83 = vdwg.mxu0
  %v88 = vunpack.c.l.b16 %v35
  %v89 = vunpack.c.l.b16 %v36
  %v90 = vunpack.c.l.b16 %v37
  %v91 = vunpack.c.l.b16 %v38
  %v92 = vpack.c.b16 %v89, %v88
  %v93 = vpack.c.b16 %v91, %v90
  %v97 = vsel %vm67, %v54, 0
  %99 = vmatpush.bf16.msra.mxu0 0
  %100 = vmatpush.bf16.msra.mxu0 0
  %101 = vmatpush.bf16.msra.mxu0 0
  %102 = vmatpush.bf16.msra.mxu0 0
  %103 = vmatpush.bf16.msra.mxu0 0
  %104 = vmatpush.bf16.msra.mxu0 0
  %105 = vmatpush.bf16.msra.mxu0 %v93
  %106 = vmatpush.bf16.msra.mxu0 %v92
  %107 = vmatmul.bf16.gmra.mxu0 %v97
  %v108 = vpop.f32.mrf.mxu0
  %v109 = vadd.f32 %v81, %v108
  %v110 = vpop.f32.mrf.mxu0
  %111 = vdwg.mxu0
  %v113 = vperm.slane %v43, 0
  %v115 = vadd.f32 %v109, %v113
  %v116 = vxor.u32 %v115, 2147483648
  %v117 = vmul.f32 %v116, 1.442695
  %v118 = vpow.pop %v117
  %v119 = vadd.f32 %v118, 1.0
  %v120 = vrcp.pop %v119
  %v121 = vmul.f32 %v119, %v120
  %v122 = vsub.f32 1.0, %v121
  %v123 = vmul.f32 %v120, %v122
  %v124 = vadd.f32 %v120, %v123
  %vm125 = vweird.f32 %v119
  %vm126 = vweird.f32 %v120
  %vm127 = vmor %vm125, %vm126
  %v128 = vsel %vm127, %v120, %v124
  %v129 = vand.u32 2147483647, %v119
  %vm130 = vcmp.eq.f32.partialorder %v129, 8.507059e+37
  %v131 = vand.u32 %v119, 2147483648
  %v132 = vor.u32 1.1754944e-38, %v131
  %v133 = vsel %vm130, %v132, %v128
  %v134 = vmul.f32 1.0, %v133
  %v135 = vtanh.pop %v115
  %v136 = vmul.f32 %v134, 0.0
  %138 = vrot.lane.b32.xlu0 %v135, 64
  %v139 = vpop.permute.xlu0 %138
  %v141 = vmul.f32 %v134, %v139
  %143 = vrot.lane.b32.xlu0 %v141, 32
  %v144 = vpop.permute.xlu0 %143
  %v146 = vadd.f32 %v136, %v144
  %v147 = vtanh.pop %v146
  %149 = vrot.lane.b32.xlu0 %v147, 64
  %v150 = vpop.permute.xlu0 %149
  %v152 = vmul.f32 %v134, %v150
  %s153 = scalar_lea.vmem %s0, 14
  %v154 = vld [vmem:[%s153] sm:$0x3]
  %v155 = vpack.c.bf16 %v154, %v154
  %v160 = vunpack.c.l.b16 %v48
  %v161 = vunpack.c.l.b16 %v49
  %v162 = vunpack.c.l.b16 %v50
  %v163 = vunpack.c.l.b16 %v51
  %v164 = vpack.c.b16 %v161, %v160
  %v165 = vpack.c.b16 %v163, %v162
  %168 = vmatpush.bf16.msra.mxu0 0
  %169 = vmatpush.bf16.msra.mxu0 0
  %170 = vmatpush.bf16.msra.mxu0 0
  %171 = vmatpush.bf16.msra.mxu0 0
  %172 = vmatpush.bf16.msra.mxu0 0
  %173 = vmatpush.bf16.msra.mxu0 0
  %174 = vmatpush.bf16.msra.mxu0 %v165
  %175 = vmatpush.bf16.msra.mxu0 %v164
  %176 = vmatmul.bf16.gmra.mxu0 %v69
  %v177 = vpop.f32.mrf.mxu0
  %v178 = vadd.f32 0.0, %v177
  %v179 = vpop.f32.mrf.mxu0
  %180 = vdwg.mxu0
  %v185 = vunpack.c.l.b16 %v44
  %v186 = vunpack.c.l.b16 %v45
  %v187 = vunpack.c.l.b16 %v46
  %v188 = vunpack.c.l.b16 %v47
  %v189 = vpack.c.b16 %v186, %v185
  %v190 = vpack.c.b16 %v188, %v187
  %v194 = vsel %vm67, %v155, 0
  %196 = vmatpush.bf16.msra.mxu0 0
  %197 = vmatpush.bf16.msra.mxu0 0
  %198 = vmatpush.bf16.msra.mxu0 0
  %199 = vmatpush.bf16.msra.mxu0 0
  %200 = vmatpush.bf16.msra.mxu0 0
  %201 = vmatpush.bf16.msra.mxu0 0
  %202 = vmatpush.bf16.msra.mxu0 %v190
  %203 = vmatpush.bf16.msra.mxu0 %v189
  %204 = vmatmul.bf16.gmra.mxu0 %v194
  %v205 = vpop.f32.mrf.mxu0
  %v206 = vadd.f32 %v178, %v205
  %v207 = vpop.f32.mrf.mxu0
  %208 = vdwg.mxu0
  %v210 = vperm.slane %v52, 0
  %v212 = vadd.f32 %v206, %v210
  %v213 = vxor.u32 %v212, 2147483648
  %v214 = vmul.f32 %v213, 1.442695
  %v215 = vpow.pop %v214
  %v216 = vadd.f32 %v215, 1.0
  %v217 = vrcp.pop %v216
  %v218 = vmul.f32 %v216, %v217
  %v219 = vsub.f32 1.0, %v218
  %v220 = vmul.f32 %v217, %v219
  %v221 = vadd.f32 %v217, %v220
  %vm222 = vweird.f32 %v216
  %vm223 = vweird.f32 %v217
  %vm224 = vmor %vm222, %vm223
  %v225 = vsel %vm224, %v217, %v221
  %v226 = vand.u32 2147483647, %v216
  %vm227 = vcmp.eq.f32.partialorder %v226, 8.507059e+37
  %v228 = vand.u32 %v216, 2147483648
  %v229 = vor.u32 1.1754944e-38, %v228
  %v230 = vsel %vm227, %v229, %v225
  %v231 = vmul.f32 1.0, %v230
  %v232 = vtanh.pop %v212
  %v233 = vmul.f32 %v231, 0.0
  %235 = vrot.lane.b32.xlu0 %v232, 64
  %v236 = vpop.permute.xlu0 %235
  %v238 = vmul.f32 %v231, %v236
  %240 = vrot.lane.b32.xlu0 %v238, 32
  %v241 = vpop.permute.xlu0 %240
  %v243 = vadd.f32 %v233, %v241
  %v244 = vtanh.pop %v243
  %246 = vrot.lane.b32.xlu0 %v244, 64
  %v247 = vpop.permute.xlu0 %246
  %v249 = vmul.f32 %v231, %v247
  %s250 = scalar_lea.vmem %s0, 2
  %v251 = vld [vmem:[%s250] sm:$0x3]
  %v252 = vpack.c.bf16 %v251, %v251
  %v253 = vpack.c.bf16 %v152, %v152
  %255 = vrot.lane.b32.xlu0 %v253, 32
  %v256 = vpop.permute.xlu0 %255
  %v258 = vsel %vm67, %v256, 0
  %260 = vmatpush.bf16.msra.mxu0 0
  %261 = vmatpush.bf16.msra.mxu0 0
  %262 = vmatpush.bf16.msra.mxu0 0
  %263 = vmatpush.bf16.msra.mxu0 0
  %264 = vmatpush.bf16.msra.mxu0 0
  %265 = vmatpush.bf16.msra.mxu0 0
  %266 = vmatpush.bf16.msra.mxu0 %v64
  %267 = vmatpush.bf16.msra.mxu0 %v63
  %268 = vmatmul.bf16.gmra.mxu0 %v258
  %v269 = vpop.f32.mrf.mxu0
  %v270 = vadd.f32 0.0, %v269
  %v271 = vpop.f32.mrf.mxu0
  %272 = vdwg.mxu0
  %v274 = vsel %vm67, %v252, 0
  %276 = vmatpush.bf16.msra.mxu0 0
  %277 = vmatpush.bf16.msra.mxu0 0
  %278 = vmatpush.bf16.msra.mxu0 0
  %279 = vmatpush.bf16.msra.mxu0 0
  %280 = vmatpush.bf16.msra.mxu0 0
  %281 = vmatpush.bf16.msra.mxu0 0
  %282 = vmatpush.bf16.msra.mxu0 %v93
  %283 = vmatpush.bf16.msra.mxu0 %v92
  %284 = vmatmul.bf16.gmra.mxu0 %v274
  %v285 = vpop.f32.mrf.mxu0
  %v286 = vadd.f32 %v270, %v285
  %v287 = vpop.f32.mrf.mxu0
  %288 = vdwg.mxu0
  %v289 = vadd.f32 %v286, %v113
  %v290 = vxor.u32 %v289, 2147483648
  %v291 = vmul.f32 %v290, 1.442695
  %v292 = vpow.pop %v291
  %v293 = vadd.f32 %v292, 1.0
  %v294 = vrcp.pop %v293
  %v295 = vmul.f32 %v293, %v294
  %v296 = vsub.f32 1.0, %v295
  %v297 = vmul.f32 %v294, %v296
  %v298 = vadd.f32 %v294, %v297
  %vm299 = vweird.f32 %v293
  %vm300 = vweird.f32 %v294
  %vm301 = vmor %vm299, %vm300
  %v302 = vsel %vm301, %v294, %v298
  %v303 = vand.u32 2147483647, %v293
  %vm304 = vcmp.eq.f32.partialorder %v303, 8.507059e+37
  %v305 = vand.u32 %v293, 2147483648
  %v306 = vor.u32 1.1754944e-38, %v305
  %v307 = vsel %vm304, %v306, %v302
  %v308 = vmul.f32 1.0, %v307
  %v309 = vtanh.pop %v289
  %v310 = vmul.f32 %v308, %v146
  %312 = vrot.lane.b32.xlu0 %v309, 64
  %v313 = vpop.permute.xlu0 %312
  %v315 = vmul.f32 %v308, %v313
  %317 = vrot.lane.b32.xlu0 %v315, 32
  %v318 = vpop.permute.xlu0 %317
  %v320 = vadd.f32 %v310, %v318
  %v321 = vtanh.pop %v320
  %323 = vrot.lane.b32.xlu0 %v321, 64
  %v324 = vpop.permute.xlu0 %323
  %v326 = vmul.f32 %v308, %v324
  %s327 = scalar_lea.vmem %s0, 12
  %v328 = vld [vmem:[%s327] sm:$0x3]
  %v329 = vpack.c.bf16 %v328, %v328
  %v330 = vpack.c.bf16 %v249, %v249
  %332 = vrot.lane.b32.xlu0 %v330, 32
  %v333 = vpop.permute.xlu0 %332
  %v335 = vsel %vm67, %v333, 0
  %337 = vmatpush.bf16.msra.mxu0 0
  %338 = vmatpush.bf16.msra.mxu0 0
  %339 = vmatpush.bf16.msra.mxu0 0
  %340 = vmatpush.bf16.msra.mxu0 0
  %341 = vmatpush.bf16.msra.mxu0 0
  %342 = vmatpush.bf16.msra.mxu0 0
  %343 = vmatpush.bf16.msra.mxu0 %v165
  %344 = vmatpush.bf16.msra.mxu0 %v164
  %345 = vmatmul.bf16.gmra.mxu0 %v335
  %v346 = vpop.f32.mrf.mxu0
  %v347 = vadd.f32 0.0, %v346
  %v348 = vpop.f32.mrf.mxu0
  %349 = vdwg.mxu0
  %v351 = vsel %vm67, %v329, 0
  %353 = vmatpush.bf16.msra.mxu0 0
  %354 = vmatpush.bf16.msra.mxu0 0
  %355 = vmatpush.bf16.msra.mxu0 0
  %356 = vmatpush.bf16.msra.mxu0 0
  %357 = vmatpush.bf16.msra.mxu0 0
  %358 = vmatpush.bf16.msra.mxu0 0
  %359 = vmatpush.bf16.msra.mxu0 %v190
  %360 = vmatpush.bf16.msra.mxu0 %v189
  %361 = vmatmul.bf16.gmra.mxu0 %v351
  %v362 = vpop.f32.mrf.mxu0
  %v363 = vadd.f32 %v347, %v362
  %v364 = vpop.f32.mrf.mxu0
  %365 = vdwg.mxu0
  %v366 = vadd.f32 %v363, %v210
  %v367 = vxor.u32 %v366, 2147483648
  %v368 = vmul.f32 %v367, 1.442695
  %v369 = vpow.pop %v368
  %v370 = vadd.f32 %v369, 1.0
  %v371 = vrcp.pop %v370
  %v372 = vmul.f32 %v370, %v371
  %v373 = vsub.f32 1.0, %v372
  %v374 = vmul.f32 %v371, %v373
  %v375 = vadd.f32 %v371, %v374
  %vm376 = vweird.f32 %v370
  %vm377 = vweird.f32 %v371
  %vm378 = vmor %vm376, %vm377
  %v379 = vsel %vm378, %v371, %v375
  %v380 = vand.u32 2147483647, %v370
  %vm381 = vcmp.eq.f32.partialorder %v380, 8.507059e+37
  %v382 = vand.u32 %v370, 2147483648
  %v383 = vor.u32 1.1754944e-38, %v382
  %v384 = vsel %vm381, %v383, %v379
  %v385 = vmul.f32 1.0, %v384
  %v386 = vtanh.pop %v366
  %v387 = vmul.f32 %v385, %v243
  %389 = vrot.lane.b32.xlu0 %v386, 64
  %v390 = vpop.permute.xlu0 %389
  %v392 = vmul.f32 %v385, %v390
  %394 = vrot.lane.b32.xlu0 %v392, 32
  %v395 = vpop.permute.xlu0 %394
  %v397 = vadd.f32 %v387, %v395
  %v398 = vtanh.pop %v397
  %400 = vrot.lane.b32.xlu0 %v398, 64
  %v401 = vpop.permute.xlu0 %400
  %v403 = vmul.f32 %v385, %v401
  %s404 = scalar_lea.vmem %s0, 4
  %v405 = vld [vmem:[%s404] sm:$0x3]
  %v406 = vpack.c.bf16 %v405, %v405
  %v407 = vpack.c.bf16 %v326, %v326
  %409 = vrot.lane.b32.xlu0 %v407, 32
  %v410 = vpop.permute.xlu0 %409
  %v412 = vsel %vm67, %v410, 0
  %414 = vmatpush.bf16.msra.mxu0 0
  %415 = vmatpush.bf16.msra.mxu0 0
  %416 = vmatpush.bf16.msra.mxu0 0
  %417 = vmatpush.bf16.msra.mxu0 0
  %418 = vmatpush.bf16.msra.mxu0 0
  %419 = vmatpush.bf16.msra.mxu0 0
  %420 = vmatpush.bf16.msra.mxu0 %v64
  %421 = vmatpush.bf16.msra.mxu0 %v63
  %422 = vmatmul.bf16.gmra.mxu0 %v412
  %v423 = vpop.f32.mrf.mxu0
  %v424 = vadd.f32 0.0, %v423
  %v425 = vpop.f32.mrf.mxu0
  %426 = vdwg.mxu0
  %v428 = vsel %vm67, %v406, 0
  %430 = vmatpush.bf16.msra.mxu0 0
  %431 = vmatpush.bf16.msra.mxu0 0
  %432 = vmatpush.bf16.msra.mxu0 0
  %433 = vmatpush.bf16.msra.mxu0 0
  %434 = vmatpush.bf16.msra.mxu0 0
  %435 = vmatpush.bf16.msra.mxu0 0
  %436 = vmatpush.bf16.msra.mxu0 %v93
  %437 = vmatpush.bf16.msra.mxu0 %v92
  %438 = vmatmul.bf16.gmra.mxu0 %v428
  %v439 = vpop.f32.mrf.mxu0
  %v440 = vadd.f32 %v424, %v439
  %v441 = vpop.f32.mrf.mxu0
  %442 = vdwg.mxu0
  %v443 = vadd.f32 %v440, %v113
  %v444 = vxor.u32 %v443, 2147483648
  %v445 = vmul.f32 %v444, 1.442695
  %v446 = vpow.pop %v445
  %v447 = vadd.f32 %v446, 1.0
  %v448 = vrcp.pop %v447
  %v449 = vmul.f32 %v447, %v448
  %v450 = vsub.f32 1.0, %v449
  %v451 = vmul.f32 %v448, %v450
  %v452 = vadd.f32 %v448, %v451
  %vm453 = vweird.f32 %v447
  %vm454 = vweird.f32 %v448
  %vm455 = vmor %vm453, %vm454
  %v456 = vsel %vm455, %v448, %v452
  %v457 = vand.u32 2147483647, %v447
  %vm458 = vcmp.eq.f32.partialorder %v457, 8.507059e+37
  %v459 = vand.u32 %v447, 2147483648
  %v460 = vor.u32 1.1754944e-38, %v459
  %v461 = vsel %vm458, %v460, %v456
  %v462 = vmul.f32 1.0, %v461
  %v463 = vtanh.pop %v443
  %v464 = vmul.f32 %v462, %v320
  %466 = vrot.lane.b32.xlu0 %v463, 64
  %v467 = vpop.permute.xlu0 %466
  %v469 = vmul.f32 %v462, %v467
  %471 = vrot.lane.b32.xlu0 %v469, 32
  %v472 = vpop.permute.xlu0 %471
  %v474 = vadd.f32 %v464, %v472
  %v475 = vtanh.pop %v474
  %477 = vrot.lane.b32.xlu0 %v475, 64
  %v478 = vpop.permute.xlu0 %477
  %v480 = vmul.f32 %v462, %v478
  %s481 = scalar_lea.vmem %s0, 10
  %v482 = vld [vmem:[%s481] sm:$0x3]
  %v483 = vpack.c.bf16 %v482, %v482
  %v484 = vpack.c.bf16 %v403, %v403
  %486 = vrot.lane.b32.xlu0 %v484, 32
  %v487 = vpop.permute.xlu0 %486
  %v489 = vsel %vm67, %v487, 0
  %491 = vmatpush.bf16.msra.mxu0 0
  %492 = vmatpush.bf16.msra.mxu0 0
  %493 = vmatpush.bf16.msra.mxu0 0
  %494 = vmatpush.bf16.msra.mxu0 0
  %495 = vmatpush.bf16.msra.mxu0 0
  %496 = vmatpush.bf16.msra.mxu0 0
  %497 = vmatpush.bf16.msra.mxu0 %v165
  %498 = vmatpush.bf16.msra.mxu0 %v164
  %499 = vmatmul.bf16.gmra.mxu0 %v489
  %v500 = vpop.f32.mrf.mxu0
  %v501 = vadd.f32 0.0, %v500
  %v502 = vpop.f32.mrf.mxu0
  %503 = vdwg.mxu0
  %v505 = vsel %vm67, %v483, 0
  %507 = vmatpush.bf16.msra.mxu0 0
  %508 = vmatpush.bf16.msra.mxu0 0
  %509 = vmatpush.bf16.msra.mxu0 0
  %510 = vmatpush.bf16.msra.mxu0 0
  %511 = vmatpush.bf16.msra.mxu0 0
  %512 = vmatpush.bf16.msra.mxu0 0
  %513 = vmatpush.bf16.msra.mxu0 %v190
  %514 = vmatpush.bf16.msra.mxu0 %v189
  %515 = vmatmul.bf16.gmra.mxu0 %v505
  %v516 = vpop.f32.mrf.mxu0
  %v517 = vadd.f32 %v501, %v516
  %v518 = vpop.f32.mrf.mxu0
  %519 = vdwg.mxu0
  %v520 = vadd.f32 %v517, %v210
  %v521 = vxor.u32 %v520, 2147483648
  %v522 = vmul.f32 %v521, 1.442695
  %v523 = vpow.pop %v522
  %v524 = vadd.f32 %v523, 1.0
  %v525 = vrcp.pop %v524
  %v526 = vmul.f32 %v524, %v525
  %v527 = vsub.f32 1.0, %v526
  %v528 = vmul.f32 %v525, %v527
  %v529 = vadd.f32 %v525, %v528
  %vm530 = vweird.f32 %v524
  %vm531 = vweird.f32 %v525
  %vm532 = vmor %vm530, %vm531
  %v533 = vsel %vm532, %v525, %v529
  %v534 = vand.u32 2147483647, %v524
  %vm535 = vcmp.eq.f32.partialorder %v534, 8.507059e+37
  %v536 = vand.u32 %v524, 2147483648
  %v537 = vor.u32 1.1754944e-38, %v536
  %v538 = vsel %vm535, %v537, %v533
  %v539 = vmul.f32 1.0, %v538
  %v540 = vtanh.pop %v520
  %v541 = vmul.f32 %v539, %v397
  %543 = vrot.lane.b32.xlu0 %v540, 64
  %v544 = vpop.permute.xlu0 %543
  %v546 = vmul.f32 %v539, %v544
  %548 = vrot.lane.b32.xlu0 %v546, 32
  %v549 = vpop.permute.xlu0 %548
  %v551 = vadd.f32 %v541, %v549
  %v552 = vtanh.pop %v551
  %554 = vrot.lane.b32.xlu0 %v552, 64
  %v555 = vpop.permute.xlu0 %554
  %v557 = vmul.f32 %v539, %v555
  %s558 = scalar_lea.vmem %s0, 6
  %v559 = vld [vmem:[%s558] sm:$0x3]
  %v560 = vpack.c.bf16 %v559, %v559
  %v561 = vpack.c.bf16 %v480, %v480
  %563 = vrot.lane.b32.xlu0 %v561, 32
  %v564 = vpop.permute.xlu0 %563
  %v566 = vsel %vm67, %v564, 0
  %568 = vmatpush.bf16.msra.mxu0 0
  %569 = vmatpush.bf16.msra.mxu0 0
  %570 = vmatpush.bf16.msra.mxu0 0
  %571 = vmatpush.bf16.msra.mxu0 0
  %572 = vmatpush.bf16.msra.mxu0 0
  %573 = vmatpush.bf16.msra.mxu0 0
  %574 = vmatpush.bf16.msra.mxu0 %v64
  %575 = vmatpush.bf16.msra.mxu0 %v63
  %576 = vmatmul.bf16.gmra.mxu0 %v566
  %v577 = vpop.f32.mrf.mxu0
  %v578 = vadd.f32 0.0, %v577
  %v579 = vpop.f32.mrf.mxu0
  %580 = vdwg.mxu0
  %v582 = vsel %vm67, %v560, 0
  %584 = vmatpush.bf16.msra.mxu0 0
  %585 = vmatpush.bf16.msra.mxu0 0
  %586 = vmatpush.bf16.msra.mxu0 0
  %587 = vmatpush.bf16.msra.mxu0 0
  %588 = vmatpush.bf16.msra.mxu0 0
  %589 = vmatpush.bf16.msra.mxu0 0
  %590 = vmatpush.bf16.msra.mxu0 %v93
  %591 = vmatpush.bf16.msra.mxu0 %v92
  %592 = vmatmul.bf16.gmra.mxu0 %v582
  %v593 = vpop.f32.mrf.mxu0
  %v594 = vadd.f32 %v578, %v593
  %v595 = vpop.f32.mrf.mxu0
  %596 = vdwg.mxu0
  %v597 = vadd.f32 %v594, %v113
  %v598 = vxor.u32 %v597, 2147483648
  %v599 = vmul.f32 %v598, 1.442695
  %v600 = vpow.pop %v599
  %v601 = vadd.f32 %v600, 1.0
  %v602 = vrcp.pop %v601
  %v603 = vmul.f32 %v601, %v602
  %v604 = vsub.f32 1.0, %v603
  %v605 = vmul.f32 %v602, %v604
  %v606 = vadd.f32 %v602, %v605
  %vm607 = vweird.f32 %v601
  %vm608 = vweird.f32 %v602
  %vm609 = vmor %vm607, %vm608
  %v610 = vsel %vm609, %v602, %v606
  %v611 = vand.u32 2147483647, %v601
  %vm612 = vcmp.eq.f32.partialorder %v611, 8.507059e+37
  %v613 = vand.u32 %v601, 2147483648
  %v614 = vor.u32 1.1754944e-38, %v613
  %v615 = vsel %vm612, %v614, %v610
  %v616 = vmul.f32 1.0, %v615
  %v617 = vtanh.pop %v597
  %v618 = vmul.f32 %v616, %v474
  %620 = vrot.lane.b32.xlu0 %v617, 64
  %v621 = vpop.permute.xlu0 %620
  %v623 = vmul.f32 %v616, %v621
  %625 = vrot.lane.b32.xlu0 %v623, 32
  %v626 = vpop.permute.xlu0 %625
  %v628 = vadd.f32 %v618, %v626
  %v629 = vtanh.pop %v628
  %631 = vrot.lane.b32.xlu0 %v629, 64
  %v632 = vpop.permute.xlu0 %631
  %v634 = vmul.f32 %v616, %v632
  %s635 = scalar_lea.vmem %s0, 8
  %v636 = vld [vmem:[%s635] sm:$0x3]
  %v637 = vpack.c.bf16 %v636, %v636
  %v638 = vpack.c.bf16 %v557, %v557
  %640 = vrot.lane.b32.xlu0 %v638, 32
  %v641 = vpop.permute.xlu0 %640
  %v643 = vsel %vm67, %v641, 0
  %645 = vmatpush.bf16.msra.mxu0 0
  %646 = vmatpush.bf16.msra.mxu0 0
  %647 = vmatpush.bf16.msra.mxu0 0
  %648 = vmatpush.bf16.msra.mxu0 0
  %649 = vmatpush.bf16.msra.mxu0 0
  %650 = vmatpush.bf16.msra.mxu0 0
  %651 = vmatpush.bf16.msra.mxu0 %v165
  %652 = vmatpush.bf16.msra.mxu0 %v164
  %653 = vmatmul.bf16.gmra.mxu0 %v643
  %v654 = vpop.f32.mrf.mxu0
  %v655 = vadd.f32 0.0, %v654
  %v656 = vpop.f32.mrf.mxu0
  %657 = vdwg.mxu0
  %v659 = vsel %vm67, %v637, 0
  %661 = vmatpush.bf16.msra.mxu0 0
  %662 = vmatpush.bf16.msra.mxu0 0
  %663 = vmatpush.bf16.msra.mxu0 0
  %664 = vmatpush.bf16.msra.mxu0 0
  %665 = vmatpush.bf16.msra.mxu0 0
  %666 = vmatpush.bf16.msra.mxu0 0
  %667 = vmatpush.bf16.msra.mxu0 %v190
  %668 = vmatpush.bf16.msra.mxu0 %v189
  %669 = vmatmul.bf16.gmra.mxu0 %v659
  %v670 = vpop.f32.mrf.mxu0
  %v671 = vadd.f32 %v655, %v670
  %v672 = vpop.f32.mrf.mxu0
  %673 = vdwg.mxu0
  %v674 = vadd.f32 %v671, %v210
  %v675 = vxor.u32 %v674, 2147483648
  %v676 = vmul.f32 %v675, 1.442695
  %v677 = vpow.pop %v676
  %v678 = vadd.f32 %v677, 1.0
  %v679 = vrcp.pop %v678
  %v680 = vmul.f32 %v678, %v679
  %v681 = vsub.f32 1.0, %v680
  %v682 = vmul.f32 %v679, %v681
  %v683 = vadd.f32 %v679, %v682
  %vm684 = vweird.f32 %v678
  %vm685 = vweird.f32 %v679
  %vm686 = vmor %vm684, %vm685
  %v687 = vsel %vm686, %v679, %v683
  %v688 = vand.u32 2147483647, %v678
  %vm689 = vcmp.eq.f32.partialorder %v688, 8.507059e+37
  %v690 = vand.u32 %v678, 2147483648
  %v691 = vor.u32 1.1754944e-38, %v690
  %v692 = vsel %vm689, %v691, %v687
  %v693 = vmul.f32 1.0, %v692
  %v694 = vtanh.pop %v674
  %v695 = vmul.f32 %v693, %v551
  %697 = vrot.lane.b32.xlu0 %v694, 64
  %v698 = vpop.permute.xlu0 %697
  %v700 = vmul.f32 %v693, %v698
  %702 = vrot.lane.b32.xlu0 %v700, 32
  %v703 = vpop.permute.xlu0 %702
  %v705 = vadd.f32 %v695, %v703
  %v706 = vtanh.pop %v705
  %708 = vrot.lane.b32.xlu0 %v706, 64
  %v709 = vpop.permute.xlu0 %708
  %v711 = vmul.f32 %v693, %v709
  %v712 = vpack.c.bf16 %v634, %v634
  %714 = vrot.lane.b32.xlu0 %v712, 32
  %v715 = vpop.permute.xlu0 %714
  %v717 = vsel %vm67, %v715, 0
  %719 = vmatpush.bf16.msra.mxu0 0
  %720 = vmatpush.bf16.msra.mxu0 0
  %721 = vmatpush.bf16.msra.mxu0 0
  %722 = vmatpush.bf16.msra.mxu0 0
  %723 = vmatpush.bf16.msra.mxu0 0
  %724 = vmatpush.bf16.msra.mxu0 0
  %725 = vmatpush.bf16.msra.mxu0 %v64
  %726 = vmatpush.bf16.msra.mxu0 %v63
  %727 = vmatmul.bf16.gmra.mxu0 %v717
  %v728 = vpop.f32.mrf.mxu0
  %v729 = vadd.f32 0.0, %v728
  %v730 = vpop.f32.mrf.mxu0
  %731 = vdwg.mxu0
  %732 = vmatpush.bf16.msra.mxu0 0
  %733 = vmatpush.bf16.msra.mxu0 0
  %734 = vmatpush.bf16.msra.mxu0 0
  %735 = vmatpush.bf16.msra.mxu0 0
  %736 = vmatpush.bf16.msra.mxu0 0
  %737 = vmatpush.bf16.msra.mxu0 0
  %738 = vmatpush.bf16.msra.mxu0 %v93
  %739 = vmatpush.bf16.msra.mxu0 %v92
  %740 = vmatmul.bf16.gmra.mxu0 %v659
  %v741 = vpop.f32.mrf.mxu0
  %v742 = vadd.f32 %v729, %v741
  %v743 = vpop.f32.mrf.mxu0
  %744 = vdwg.mxu0
  %v745 = vadd.f32 %v742, %v113
  %v746 = vxor.u32 %v745, 2147483648
  %v747 = vmul.f32 %v746, 1.442695
  %v748 = vpow.pop %v747
  %v749 = vadd.f32 %v748, 1.0
  %v750 = vrcp.pop %v749
  %v751 = vmul.f32 %v749, %v750
  %v752 = vsub.f32 1.0, %v751
  %v753 = vmul.f32 %v750, %v752
  %v754 = vadd.f32 %v750, %v753
  %vm755 = vweird.f32 %v749
  %vm756 = vweird.f32 %v750
  %vm757 = vmor %vm755, %vm756
  %v758 = vsel %vm757, %v750, %v754
  %v759 = vand.u32 2147483647, %v749
  %vm760 = vcmp.eq.f32.partialorder %v759, 8.507059e+37
  %v761 = vand.u32 %v749, 2147483648
  %v762 = vor.u32 1.1754944e-38, %v761
  %v763 = vsel %vm760, %v762, %v758
  %v764 = vmul.f32 1.0, %v763
  %v765 = vtanh.pop %v745
  %v766 = vmul.f32 %v764, %v628
  %768 = vrot.lane.b32.xlu0 %v765, 64
  %v769 = vpop.permute.xlu0 %768
  %v771 = vmul.f32 %v764, %v769
  %773 = vrot.lane.b32.xlu0 %v771, 32
  %v774 = vpop.permute.xlu0 %773
  %v776 = vadd.f32 %v766, %v774
  %v777 = vtanh.pop %v776
  %779 = vrot.lane.b32.xlu0 %v777, 64
  %v780 = vpop.permute.xlu0 %779
  %v782 = vmul.f32 %v764, %v780
  %v783 = vpack.c.bf16 %v711, %v711
  %785 = vrot.lane.b32.xlu0 %v783, 32
  %v786 = vpop.permute.xlu0 %785
  %v788 = vsel %vm67, %v786, 0
  %790 = vmatpush.bf16.msra.mxu0 0
  %791 = vmatpush.bf16.msra.mxu0 0
  %792 = vmatpush.bf16.msra.mxu0 0
  %793 = vmatpush.bf16.msra.mxu0 0
  %794 = vmatpush.bf16.msra.mxu0 0
  %795 = vmatpush.bf16.msra.mxu0 0
  %796 = vmatpush.bf16.msra.mxu0 %v165
  %797 = vmatpush.bf16.msra.mxu0 %v164
  %798 = vmatmul.bf16.gmra.mxu0 %v788
  %v799 = vpop.f32.mrf.mxu0
  %v800 = vadd.f32 0.0, %v799
  %v801 = vpop.f32.mrf.mxu0
  %802 = vdwg.mxu0
  %803 = vmatpush.bf16.msra.mxu0 0
  %804 = vmatpush.bf16.msra.mxu0 0
  %805 = vmatpush.bf16.msra.mxu0 0
  %806 = vmatpush.bf16.msra.mxu0 0
  %807 = vmatpush.bf16.msra.mxu0 0
  %808 = vmatpush.bf16.msra.mxu0 0
  %809 = vmatpush.bf16.msra.mxu0 %v190
  %810 = vmatpush.bf16.msra.mxu0 %v189
  %811 = vmatmul.bf16.gmra.mxu0 %v582
  %v812 = vpop.f32.mrf.mxu0
  %v813 = vadd.f32 %v800, %v812
  %v814 = vpop.f32.mrf.mxu0
  %815 = vdwg.mxu0
  %v816 = vadd.f32 %v813, %v210
  %v817 = vxor.u32 %v816, 2147483648
  %v818 = vmul.f32 %v817, 1.442695
  %v819 = vpow.pop %v818
  %v820 = vadd.f32 %v819, 1.0
  %v821 = vrcp.pop %v820
  %v822 = vmul.f32 %v820, %v821
  %v823 = vsub.f32 1.0, %v822
  %v824 = vmul.f32 %v821, %v823
  %v825 = vadd.f32 %v821, %v824
  %vm826 = vweird.f32 %v820
  %vm827 = vweird.f32 %v821
  %vm828 = vmor %vm826, %vm827
  %v829 = vsel %vm828, %v821, %v825
  %v830 = vand.u32 2147483647, %v820
  %vm831 = vcmp.eq.f32.partialorder %v830, 8.507059e+37
  %v832 = vand.u32 %v820, 2147483648
  %v833 = vor.u32 1.1754944e-38, %v832
  %v834 = vsel %vm831, %v833, %v829
  %v835 = vmul.f32 1.0, %v834
  %v836 = vtanh.pop %v816
  %v837 = vmul.f32 %v835, %v705
  %839 = vrot.lane.b32.xlu0 %v836, 64
  %v840 = vpop.permute.xlu0 %839
  %v842 = vmul.f32 %v835, %v840
  %844 = vrot.lane.b32.xlu0 %v842, 32
  %v845 = vpop.permute.xlu0 %844
  %v847 = vadd.f32 %v837, %v845
  %v848 = vtanh.pop %v847
  %850 = vrot.lane.b32.xlu0 %v848, 64
  %v851 = vpop.permute.xlu0 %850
  %v853 = vmul.f32 %v835, %v851
  %v854 = vpack.c.bf16 %v782, %v782
  %856 = vrot.lane.b32.xlu0 %v854, 32
  %v857 = vpop.permute.xlu0 %856
  %v859 = vsel %vm67, %v857, 0
  %861 = vmatpush.bf16.msra.mxu0 0
  %862 = vmatpush.bf16.msra.mxu0 0
  %863 = vmatpush.bf16.msra.mxu0 0
  %864 = vmatpush.bf16.msra.mxu0 0
  %865 = vmatpush.bf16.msra.mxu0 0
  %866 = vmatpush.bf16.msra.mxu0 0
  %867 = vmatpush.bf16.msra.mxu0 %v64
  %868 = vmatpush.bf16.msra.mxu0 %v63
  %869 = vmatmul.bf16.gmra.mxu0 %v859
  %v870 = vpop.f32.mrf.mxu0
  %v871 = vadd.f32 0.0, %v870
  %v872 = vpop.f32.mrf.mxu0
  %873 = vdwg.mxu0
  %874 = vmatpush.bf16.msra.mxu0 0
  %875 = vmatpush.bf16.msra.mxu0 0
  %876 = vmatpush.bf16.msra.mxu0 0
  %877 = vmatpush.bf16.msra.mxu0 0
  %878 = vmatpush.bf16.msra.mxu0 0
  %879 = vmatpush.bf16.msra.mxu0 0
  %880 = vmatpush.bf16.msra.mxu0 %v93
  %881 = vmatpush.bf16.msra.mxu0 %v92
  %882 = vmatmul.bf16.gmra.mxu0 %v505
  %v883 = vpop.f32.mrf.mxu0
  %v884 = vadd.f32 %v871, %v883
  %v885 = vpop.f32.mrf.mxu0
  %886 = vdwg.mxu0
  %v887 = vadd.f32 %v884, %v113
  %v888 = vxor.u32 %v887, 2147483648
  %v889 = vmul.f32 %v888, 1.442695
  %v890 = vpow.pop %v889
  %v891 = vadd.f32 %v890, 1.0
  %v892 = vrcp.pop %v891
  %v893 = vmul.f32 %v891, %v892
  %v894 = vsub.f32 1.0, %v893
  %v895 = vmul.f32 %v892, %v894
  %v896 = vadd.f32 %v892, %v895
  %vm897 = vweird.f32 %v891
  %vm898 = vweird.f32 %v892
  %vm899 = vmor %vm897, %vm898
  %v900 = vsel %vm899, %v892, %v896
  %v901 = vand.u32 2147483647, %v891
  %vm902 = vcmp.eq.f32.partialorder %v901, 8.507059e+37
  %v903 = vand.u32 %v891, 2147483648
  %v904 = vor.u32 1.1754944e-38, %v903
  %v905 = vsel %vm902, %v904, %v900
  %v906 = vmul.f32 1.0, %v905
  %v907 = vtanh.pop %v887
  %v908 = vmul.f32 %v906, %v776
  %910 = vrot.lane.b32.xlu0 %v907, 64
  %v911 = vpop.permute.xlu0 %910
  %v913 = vmul.f32 %v906, %v911
  %915 = vrot.lane.b32.xlu0 %v913, 32
  %v916 = vpop.permute.xlu0 %915
  %v918 = vadd.f32 %v908, %v916
  %v919 = vtanh.pop %v918
  %921 = vrot.lane.b32.xlu0 %v919, 64
  %v922 = vpop.permute.xlu0 %921
  %v924 = vmul.f32 %v906, %v922
  %v925 = vpack.c.bf16 %v853, %v853
  %927 = vrot.lane.b32.xlu0 %v925, 32
  %v928 = vpop.permute.xlu0 %927
  %v930 = vsel %vm67, %v928, 0
  %932 = vmatpush.bf16.msra.mxu0 0
  %933 = vmatpush.bf16.msra.mxu0 0
  %934 = vmatpush.bf16.msra.mxu0 0
  %935 = vmatpush.bf16.msra.mxu0 0
  %936 = vmatpush.bf16.msra.mxu0 0
  %937 = vmatpush.bf16.msra.mxu0 0
  %938 = vmatpush.bf16.msra.mxu0 %v165
  %939 = vmatpush.bf16.msra.mxu0 %v164
  %940 = vmatmul.bf16.gmra.mxu0 %v930
  %v941 = vpop.f32.mrf.mxu0
  %v942 = vadd.f32 0.0, %v941
  %v943 = vpop.f32.mrf.mxu0
  %944 = vdwg.mxu0
  %945 = vmatpush.bf16.msra.mxu0 0
  %946 = vmatpush.bf16.msra.mxu0 0
  %947 = vmatpush.bf16.msra.mxu0 0
  %948 = vmatpush.bf16.msra.mxu0 0
  %949 = vmatpush.bf16.msra.mxu0 0
  %950 = vmatpush.bf16.msra.mxu0 0
  %951 = vmatpush.bf16.msra.mxu0 %v190
  %952 = vmatpush.bf16.msra.mxu0 %v189
  %953 = vmatmul.bf16.gmra.mxu0 %v428
  %v954 = vpop.f32.mrf.mxu0
  %v955 = vadd.f32 %v942, %v954
  %v956 = vpop.f32.mrf.mxu0
  %957 = vdwg.mxu0
  %v958 = vadd.f32 %v955, %v210
  %v959 = vxor.u32 %v958, 2147483648
  %v960 = vmul.f32 %v959, 1.442695
  %v961 = vpow.pop %v960
  %v962 = vadd.f32 %v961, 1.0
  %v963 = vrcp.pop %v962
  %v964 = vmul.f32 %v962, %v963
  %v965 = vsub.f32 1.0, %v964
  %v966 = vmul.f32 %v963, %v965
  %v967 = vadd.f32 %v963, %v966
  %vm968 = vweird.f32 %v962
  %vm969 = vweird.f32 %v963
  %vm970 = vmor %vm968, %vm969
  %v971 = vsel %vm970, %v963, %v967
  %v972 = vand.u32 2147483647, %v962
  %vm973 = vcmp.eq.f32.partialorder %v972, 8.507059e+37
  %v974 = vand.u32 %v962, 2147483648
  %v975 = vor.u32 1.1754944e-38, %v974
  %v976 = vsel %vm973, %v975, %v971
  %v977 = vmul.f32 1.0, %v976
  %v978 = vtanh.pop %v958
  %v979 = vmul.f32 %v977, %v847
  %981 = vrot.lane.b32.xlu0 %v978, 64
  %v982 = vpop.permute.xlu0 %981
  %v984 = vmul.f32 %v977, %v982
  %986 = vrot.lane.b32.xlu0 %v984, 32
  %v987 = vpop.permute.xlu0 %986
  %v989 = vadd.f32 %v979, %v987
  %v990 = vtanh.pop %v989
  %992 = vrot.lane.b32.xlu0 %v990, 64
  %v993 = vpop.permute.xlu0 %992
  %v995 = vmul.f32 %v977, %v993
  %v996 = vpack.c.bf16 %v924, %v924
  %998 = vrot.lane.b32.xlu0 %v996, 32
  %v999 = vpop.permute.xlu0 %998
  %v1001 = vsel %vm67, %v999, 0
  %1003 = vmatpush.bf16.msra.mxu0 0
  %1004 = vmatpush.bf16.msra.mxu0 0
  %1005 = vmatpush.bf16.msra.mxu0 0
  %1006 = vmatpush.bf16.msra.mxu0 0
  %1007 = vmatpush.bf16.msra.mxu0 0
  %1008 = vmatpush.bf16.msra.mxu0 0
  %1009 = vmatpush.bf16.msra.mxu0 %v64
  %1010 = vmatpush.bf16.msra.mxu0 %v63
  %1011 = vmatmul.bf16.gmra.mxu0 %v1001
  %v1012 = vpop.f32.mrf.mxu0
  %v1013 = vadd.f32 0.0, %v1012
  %v1014 = vpop.f32.mrf.mxu0
  %1015 = vdwg.mxu0
  %1016 = vmatpush.bf16.msra.mxu0 0
  %1017 = vmatpush.bf16.msra.mxu0 0
  %1018 = vmatpush.bf16.msra.mxu0 0
  %1019 = vmatpush.bf16.msra.mxu0 0
  %1020 = vmatpush.bf16.msra.mxu0 0
  %1021 = vmatpush.bf16.msra.mxu0 0
  %1022 = vmatpush.bf16.msra.mxu0 %v93
  %1023 = vmatpush.bf16.msra.mxu0 %v92
  %1024 = vmatmul.bf16.gmra.mxu0 %v351
  %v1025 = vpop.f32.mrf.mxu0
  %v1026 = vadd.f32 %v1013, %v1025
  %v1027 = vpop.f32.mrf.mxu0
  %1028 = vdwg.mxu0
  %v1029 = vadd.f32 %v1026, %v113
  %v1030 = vxor.u32 %v1029, 2147483648
  %v1031 = vmul.f32 %v1030, 1.442695
  %v1032 = vpow.pop %v1031
  %v1033 = vadd.f32 %v1032, 1.0
  %v1034 = vrcp.pop %v1033
  %v1035 = vmul.f32 %v1033, %v1034
  %v1036 = vsub.f32 1.0, %v1035
  %v1037 = vmul.f32 %v1034, %v1036
  %v1038 = vadd.f32 %v1034, %v1037
  %vm1039 = vweird.f32 %v1033
  %vm1040 = vweird.f32 %v1034
  %vm1041 = vmor %vm1039, %vm1040
  %v1042 = vsel %vm1041, %v1034, %v1038
  %v1043 = vand.u32 2147483647, %v1033
  %vm1044 = vcmp.eq.f32.partialorder %v1043, 8.507059e+37
  %v1045 = vand.u32 %v1033, 2147483648
  %v1046 = vor.u32 1.1754944e-38, %v1045
  %v1047 = vsel %vm1044, %v1046, %v1042
  %v1048 = vmul.f32 1.0, %v1047
  %v1049 = vtanh.pop %v1029
  %v1050 = vmul.f32 %v1048, %v918
  %1052 = vrot.lane.b32.xlu0 %v1049, 64
  %v1053 = vpop.permute.xlu0 %1052
  %v1055 = vmul.f32 %v1048, %v1053
  %1057 = vrot.lane.b32.xlu0 %v1055, 32
  %v1058 = vpop.permute.xlu0 %1057
  %v1060 = vadd.f32 %v1050, %v1058
  %v1061 = vtanh.pop %v1060
  %1063 = vrot.lane.b32.xlu0 %v1061, 64
  %v1064 = vpop.permute.xlu0 %1063
  %v1066 = vmul.f32 %v1048, %v1064
  %v1067 = vpack.c.bf16 %v995, %v995
  %1069 = vrot.lane.b32.xlu0 %v1067, 32
  %v1070 = vpop.permute.xlu0 %1069
  %v1072 = vsel %vm67, %v1070, 0
  %1074 = vmatpush.bf16.msra.mxu0 0
  %1075 = vmatpush.bf16.msra.mxu0 0
  %1076 = vmatpush.bf16.msra.mxu0 0
  %1077 = vmatpush.bf16.msra.mxu0 0
  %1078 = vmatpush.bf16.msra.mxu0 0
  %1079 = vmatpush.bf16.msra.mxu0 0
  %1080 = vmatpush.bf16.msra.mxu0 %v165
  %1081 = vmatpush.bf16.msra.mxu0 %v164
  %1082 = vmatmul.bf16.gmra.mxu0 %v1072
  %v1083 = vpop.f32.mrf.mxu0
  %v1084 = vadd.f32 0.0, %v1083
  %v1085 = vpop.f32.mrf.mxu0
  %1086 = vdwg.mxu0
  %1087 = vmatpush.bf16.msra.mxu0 0
  %1088 = vmatpush.bf16.msra.mxu0 0
  %1089 = vmatpush.bf16.msra.mxu0 0
  %1090 = vmatpush.bf16.msra.mxu0 0
  %1091 = vmatpush.bf16.msra.mxu0 0
  %1092 = vmatpush.bf16.msra.mxu0 0
  %1093 = vmatpush.bf16.msra.mxu0 %v190
  %1094 = vmatpush.bf16.msra.mxu0 %v189
  %1095 = vmatmul.bf16.gmra.mxu0 %v274
  %v1096 = vpop.f32.mrf.mxu0
  %v1097 = vadd.f32 %v1084, %v1096
  %v1098 = vpop.f32.mrf.mxu0
  %1099 = vdwg.mxu0
  %v1100 = vadd.f32 %v1097, %v210
  %v1101 = vxor.u32 %v1100, 2147483648
  %v1102 = vmul.f32 %v1101, 1.442695
  %v1103 = vpow.pop %v1102
  %v1104 = vadd.f32 %v1103, 1.0
  %v1105 = vrcp.pop %v1104
  %v1106 = vmul.f32 %v1104, %v1105
  %v1107 = vsub.f32 1.0, %v1106
  %v1108 = vmul.f32 %v1105, %v1107
  %v1109 = vadd.f32 %v1105, %v1108
  %vm1110 = vweird.f32 %v1104
  %vm1111 = vweird.f32 %v1105
  %vm1112 = vmor %vm1110, %vm1111
  %v1113 = vsel %vm1112, %v1105, %v1109
  %v1114 = vand.u32 2147483647, %v1104
  %vm1115 = vcmp.eq.f32.partialorder %v1114, 8.507059e+37
  %v1116 = vand.u32 %v1104, 2147483648
  %v1117 = vor.u32 1.1754944e-38, %v1116
  %v1118 = vsel %vm1115, %v1117, %v1113
  %v1119 = vmul.f32 1.0, %v1118
  %v1120 = vtanh.pop %v1100
  %v1121 = vmul.f32 %v1119, %v989
  %1123 = vrot.lane.b32.xlu0 %v1120, 64
  %v1124 = vpop.permute.xlu0 %1123
  %v1126 = vmul.f32 %v1119, %v1124
  %1128 = vrot.lane.b32.xlu0 %v1126, 32
  %v1129 = vpop.permute.xlu0 %1128
  %v1131 = vadd.f32 %v1121, %v1129
  %v1132 = vtanh.pop %v1131
  %1134 = vrot.lane.b32.xlu0 %v1132, 64
  %v1135 = vpop.permute.xlu0 %1134
  %v1137 = vmul.f32 %v1119, %v1135
  %v1138 = vpack.c.bf16 %v1066, %v1066
  %1140 = vrot.lane.b32.xlu0 %v1138, 32
  %v1141 = vpop.permute.xlu0 %1140
  %v1143 = vsel %vm67, %v1141, 0
  %1145 = vmatpush.bf16.msra.mxu0 0
  %1146 = vmatpush.bf16.msra.mxu0 0
  %1147 = vmatpush.bf16.msra.mxu0 0
  %1148 = vmatpush.bf16.msra.mxu0 0
  %1149 = vmatpush.bf16.msra.mxu0 0
  %1150 = vmatpush.bf16.msra.mxu0 0
  %1151 = vmatpush.bf16.msra.mxu0 %v64
  %1152 = vmatpush.bf16.msra.mxu0 %v63
  %1153 = vmatmul.bf16.gmra.mxu0 %v1143
  %v1154 = vpop.f32.mrf.mxu0
  %v1155 = vadd.f32 0.0, %v1154
  %v1156 = vpop.f32.mrf.mxu0
  %1157 = vdwg.mxu0
  %1158 = vmatpush.bf16.msra.mxu0 0
  %1159 = vmatpush.bf16.msra.mxu0 0
  %1160 = vmatpush.bf16.msra.mxu0 0
  %1161 = vmatpush.bf16.msra.mxu0 0
  %1162 = vmatpush.bf16.msra.mxu0 0
  %1163 = vmatpush.bf16.msra.mxu0 0
  %1164 = vmatpush.bf16.msra.mxu0 %v93
  %1165 = vmatpush.bf16.msra.mxu0 %v92
  %1166 = vmatmul.bf16.gmra.mxu0 %v194
  %v1167 = vpop.f32.mrf.mxu0
  %v1168 = vadd.f32 %v1155, %v1167
  %v1169 = vpop.f32.mrf.mxu0
  %1170 = vdwg.mxu0
  %v1171 = vadd.f32 %v1168, %v113
  %v1172 = vxor.u32 %v1171, 2147483648
  %v1173 = vmul.f32 %v1172, 1.442695
  %v1174 = vpow.pop %v1173
  %v1175 = vadd.f32 %v1174, 1.0
  %v1176 = vrcp.pop %v1175
  %v1177 = vmul.f32 %v1175, %v1176
  %v1178 = vsub.f32 1.0, %v1177
  %v1179 = vmul.f32 %v1176, %v1178
  %v1180 = vadd.f32 %v1176, %v1179
  %vm1181 = vweird.f32 %v1175
  %vm1182 = vweird.f32 %v1176
  %vm1183 = vmor %vm1181, %vm1182
  %v1184 = vsel %vm1183, %v1176, %v1180
  %v1185 = vand.u32 2147483647, %v1175
  %vm1186 = vcmp.eq.f32.partialorder %v1185, 8.507059e+37
  %v1187 = vand.u32 %v1175, 2147483648
  %v1188 = vor.u32 1.1754944e-38, %v1187
  %v1189 = vsel %vm1186, %v1188, %v1184
  %v1190 = vmul.f32 1.0, %v1189
  %v1191 = vtanh.pop %v1171
  %v1192 = vmul.f32 %v1190, %v1060
  %1194 = vrot.lane.b32.xlu0 %v1191, 64
  %v1195 = vpop.permute.xlu0 %1194
  %v1197 = vmul.f32 %v1190, %v1195
  %1199 = vrot.lane.b32.xlu0 %v1197, 32
  %v1200 = vpop.permute.xlu0 %1199
  %v1202 = vadd.f32 %v1192, %v1200
  %v1203 = vtanh.pop %v1202
  %1205 = vrot.lane.b32.xlu0 %v1203, 64
  %v1206 = vpop.permute.xlu0 %1205
  %v1208 = vmul.f32 %v1190, %v1206
  %v1209 = vpack.c.bf16 %v1137, %v1137
  %1211 = vrot.lane.b32.xlu0 %v1209, 32
  %v1212 = vpop.permute.xlu0 %1211
  %v1214 = vsel %vm67, %v1212, 0
  %1216 = vmatpush.bf16.msra.mxu0 0
  %1217 = vmatpush.bf16.msra.mxu0 0
  %1218 = vmatpush.bf16.msra.mxu0 0
  %1219 = vmatpush.bf16.msra.mxu0 0
  %1220 = vmatpush.bf16.msra.mxu0 0
  %1221 = vmatpush.bf16.msra.mxu0 0
  %1222 = vmatpush.bf16.msra.mxu0 %v165
  %1223 = vmatpush.bf16.msra.mxu0 %v164
  %1224 = vmatmul.bf16.gmra.mxu0 %v1214
  %v1225 = vpop.f32.mrf.mxu0
  %v1226 = vadd.f32 0.0, %v1225
  %v1227 = vpop.f32.mrf.mxu0
  %1228 = vdwg.mxu0
  %1229 = vmatpush.bf16.msra.mxu0 0
  %1230 = vmatpush.bf16.msra.mxu0 0
  %1231 = vmatpush.bf16.msra.mxu0 0
  %1232 = vmatpush.bf16.msra.mxu0 0
  %1233 = vmatpush.bf16.msra.mxu0 0
  %1234 = vmatpush.bf16.msra.mxu0 0
  %1235 = vmatpush.bf16.msra.mxu0 %v190
  %1236 = vmatpush.bf16.msra.mxu0 %v189
  %1237 = vmatmul.bf16.gmra.mxu0 %v97
  %v1238 = vpop.f32.mrf.mxu0
  %v1239 = vadd.f32 %v1226, %v1238
  %v1240 = vpop.f32.mrf.mxu0
  %1241 = vdwg.mxu0
  %v1242 = vadd.f32 %v1239, %v210
  %v1243 = vxor.u32 %v1242, 2147483648
  %v1244 = vmul.f32 %v1243, 1.442695
  %v1245 = vpow.pop %v1244
  %v1246 = vadd.f32 %v1245, 1.0
  %v1247 = vrcp.pop %v1246
  %v1248 = vmul.f32 %v1246, %v1247
  %v1249 = vsub.f32 1.0, %v1248
  %v1250 = vmul.f32 %v1247, %v1249
  %v1251 = vadd.f32 %v1247, %v1250
  %vm1252 = vweird.f32 %v1246
  %vm1253 = vweird.f32 %v1247
  %vm1254 = vmor %vm1252, %vm1253
  %v1255 = vsel %vm1254, %v1247, %v1251
  %v1256 = vand.u32 2147483647, %v1246
  %vm1257 = vcmp.eq.f32.partialorder %v1256, 8.507059e+37
  %v1258 = vand.u32 %v1246, 2147483648
  %v1259 = vor.u32 1.1754944e-38, %v1258
  %v1260 = vsel %vm1257, %v1259, %v1255
  %v1261 = vmul.f32 1.0, %v1260
  %v1262 = vtanh.pop %v1242
  %v1263 = vmul.f32 %v1261, %v1131
  %1265 = vrot.lane.b32.xlu0 %v1262, 64
  %v1266 = vpop.permute.xlu0 %1265
  %v1268 = vmul.f32 %v1261, %v1266
  %1270 = vrot.lane.b32.xlu0 %v1268, 32
  %v1271 = vpop.permute.xlu0 %1270
  %v1273 = vadd.f32 %v1263, %v1271
  %v1274 = vtanh.pop %v1273
  %1276 = vrot.lane.b32.xlu0 %v1274, 64
  %v1277 = vpop.permute.xlu0 %1276
  %v1279 = vmul.f32 %v1261, %v1277
  %1281 = vrot.lane.b32.xlu0 %v1208, 32
  %v1282 = vpop.permute.xlu0 %1281
  %1285 = vrot.lane.b32.xlu0 %v1279, 64
  %v1286 = vpop.permute.xlu0 %1285
  %v1288 = vsel %vm67, %v1282, %v1286
  %v1289 = vld [vmem:[%s7] sm:$0x1]
  %v1291 = vperm.slane %v1289, 0
  %v1293 = vmul.f32 %v1288, %v1291
  %vm1294 = vcmask 517120
  %v1295 = vsel %vm1294, %v1293, 0.0
  %1296 = vadd.xlane.f32.xlu0 %v1295
  %v1297 = vpop.xlane.xlu0 %1296
  %v1298 = vld [vmem:[#allocation2] sm:$0x1]
  %v1300 = vperm.slane %v1298, 0
  %v1302 = vadd.f32 %v1297, %v1300
  %vm1303 = vcmask 1024
  %1304 = vst.msk [vmem:[%s9] sm:$0x3] %vm1303, %v1302
  // Predicated region
  $region38: #{model_forward.7} parent=0 // pred_check
    _
  $region39: #{model_forward.7} parent=0 // pred_check_branch
    %1306 = sbr.rel (0) target = $region41
  $region40: #{model_forward.7} parent=0 // pred_region
    _
  $region41: #{model_forward.7} parent=0 // pred_fallthru
    _
  // Predicated region
  $region42: #{model_forward.7} parent=0 // pred_check
    _
  $region43: #{model_forward.7} parent=0 // pred_check_branch
    %1308 = sbr.rel (0) target = $region45
  $region44: #{model_forward.7} parent=0 // pred_region
    _
  $region45: #{model_forward.7} parent=0 // pred_fallthru
    _

// kernel: model_forward.5
$region0: #{model_forward.5}
  #allocation0 [shape = 'u32[]', space=smem, size = 0x4, offset = 0x4, fixed_abs, tag = 'smem constant byte address 0x4 - core index']
  #allocation1 [shape = 'u32[72,128]{1,0:T(1,128)}', space=vmem, size = 0x9000, scoped, tag = 'internal scratch']
  %s0 = inlined_call_operand.vmem [shape: f32[16,32], index: 0, kind: input, shape index: {}]
  %s1 = inlined_call_operand.vmem [shape: f32[2,8], index: 1, kind: input, shape index: {}]
  %s2 = inlined_call_operand.vmem [shape: bf16[32,96], index: 2, kind: input, shape index: {}]
  %s3 = inlined_call_operand.vmem [shape: f32[1,96], index: 3, kind: input, shape index: {}]
  %s4 = inlined_call_operand.vmem [shape: bf16[32,32], index: 4, kind: input, shape index: {}]
  %s5 = inlined_call_operand.vmem [shape: f32[1,32], index: 5, kind: input, shape index: {}]
  %s6 = inlined_call_operand.vmem [shape: f32[1,32], index: 6, kind: input, shape index: {}]
  %s7 = inlined_call_operand.vmem [shape: f32[1,32], index: 7, kind: input, shape index: {}]
  %s8 = inlined_call_operand.vmem [shape: bf16[32,128], index: 8, kind: input, shape index: {}]
  %s9 = inlined_call_operand.vmem [shape: f32[1,128], index: 9, kind: input, shape index: {}]
  %s10 = inlined_call_operand.vmem [shape: bf16[128,32], index: 10, kind: input, shape index: {}]
  %s11 = inlined_call_operand.vmem [shape: f32[1,32], index: 11, kind: input, shape index: {}]
  %s12 = inlined_call_operand.vmem [shape: f32[1,32], index: 12, kind: input, shape index: {}]
  %s13 = inlined_call_operand.vmem [shape: f32[1,32], index: 13, kind: input, shape index: {}]
  %s14 = inlined_call_operand.vmem [shape: f32[16,32], index: 14, kind: output, shape index: {}]
  %s15 = sld [smem:[#allocation0]]
  $region66: #{model_forward.5} parent=0
    _
  %s17 = ssub.s32 1, %s15
  %s18 = scalar_select 0, %s17, %s15
  // Predicated region
  $region2: #{model_forward.5} parent=0 // pred_check
    _
  $region3: #{model_forward.5} parent=0 // pred_check_branch
    %20 = sbr.rel (0) target = $region5
  $region4: #{model_forward.5} parent=0 // pred_region
    _
  $region5: #{model_forward.5} parent=0 // pred_fallthru
    _
  // Predicated region
  $region6: #{model_forward.5} parent=0 // pred_check
    _
  $region7: #{model_forward.5} parent=0 // pred_check_branch
    %22 = sbr.rel (0) target = $region9
  $region8: #{model_forward.5} parent=0 // pred_region
    _
  $region9: #{model_forward.5} parent=0 // pred_fallthru
    _
  // Predicated region
  $region10: #{model_forward.5} parent=0 // pred_check
    _
  $region11: #{model_forward.5} parent=0 // pred_check_branch
    %24 = sbr.rel (0) target = $region13
  $region12: #{model_forward.5} parent=0 // pred_region
    _
  $region13: #{model_forward.5} parent=0 // pred_fallthru
    _
  // Predicated region
  $region14: #{model_forward.5} parent=0 // pred_check
    _
  $region15: #{model_forward.5} parent=0 // pred_check_branch
    %26 = sbr.rel (0) target = $region17
  $region16: #{model_forward.5} parent=0 // pred_region
    _
  $region17: #{model_forward.5} parent=0 // pred_fallthru
    _
  // Predicated region
  $region18: #{model_forward.5} parent=0 // pred_check
    _
  $region19: #{model_forward.5} parent=0 // pred_check_branch
    %28 = sbr.rel (0) target = $region21
  $region20: #{model_forward.5} parent=0 // pred_region
    _
  $region21: #{model_forward.5} parent=0 // pred_fallthru
    _
  // Predicated region
  $region22: #{model_forward.5} parent=0 // pred_check
    _
  $region23: #{model_forward.5} parent=0 // pred_check_branch
    %30 = sbr.rel (0) target = $region25
  $region24: #{model_forward.5} parent=0 // pred_region
    _
  $region25: #{model_forward.5} parent=0 // pred_fallthru
    _
  // Predicated region
  $region26: #{model_forward.5} parent=0 // pred_check
    _
  $region27: #{model_forward.5} parent=0 // pred_check_branch
    %32 = sbr.rel (0) target = $region29
  $region28: #{model_forward.5} parent=0 // pred_region
    _
  $region29: #{model_forward.5} parent=0 // pred_fallthru
    _
  // Predicated region
  $region30: #{model_forward.5} parent=0 // pred_check
    _
  $region31: #{model_forward.5} parent=0 // pred_check_branch
    %34 = sbr.rel (0) target = $region33
  $region32: #{model_forward.5} parent=0 // pred_region
    _
  $region33: #{model_forward.5} parent=0 // pred_fallthru
    _
  // Predicated region
  $region34: #{model_forward.5} parent=0 // pred_check
    _
  $region35: #{model_forward.5} parent=0 // pred_check_branch
    %36 = sbr.rel (0) target = $region37
  $region36: #{model_forward.5} parent=0 // pred_region
    _
  $region37: #{model_forward.5} parent=0 // pred_fallthru
    _
  // Predicated region
  $region38: #{model_forward.5} parent=0 // pred_check
    _
  $region39: #{model_forward.5} parent=0 // pred_check_branch
    %38 = sbr.rel (0) target = $region41
  $region40: #{model_forward.5} parent=0 // pred_region
    _
  $region41: #{model_forward.5} parent=0 // pred_fallthru
    _
  // Predicated region
  $region42: #{model_forward.5} parent=0 // pred_check
    _
  $region43: #{model_forward.5} parent=0 // pred_check_branch
    %40 = sbr.rel (0) target = $region45
  $region44: #{model_forward.5} parent=0 // pred_region
    _
  $region45: #{model_forward.5} parent=0 // pred_fallthru
    _
  // Predicated region
  $region46: #{model_forward.5} parent=0 // pred_check
    _
  $region47: #{model_forward.5} parent=0 // pred_check_branch
    %42 = sbr.rel (0) target = $region49
  $region48: #{model_forward.5} parent=0 // pred_region
    _
  $region49: #{model_forward.5} parent=0 // pred_fallthru
    _
  // Predicated region
  $region50: #{model_forward.5} parent=0 // pred_check
    _
  $region51: #{model_forward.5} parent=0 // pred_check_branch
    %44 = sbr.rel (0) target = $region53
  $region52: #{model_forward.5} parent=0 // pred_region
    _
  $region53: #{model_forward.5} parent=0 // pred_fallthru
    _
  // Predicated region
  $region54: #{model_forward.5} parent=0 // pred_check
    _
  $region55: #{model_forward.5} parent=0 // pred_check_branch
    %46 = sbr.rel (0) target = $region57
  $region56: #{model_forward.5} parent=0 // pred_region
    _
  $region57: #{model_forward.5} parent=0 // pred_fallthru
    _
  %v48 = vld [vmem:[%s0] sm:$0xff]
  %v49 = vld [vmem:[%s0 + $0x8] sm:$0xff]
  %v50 = vpack.c.bf16 %v49, %v48
  %v51 = vld [vmem:[%s2] sm:$0xf]
  %v52 = vld [vmem:[%s2 + $0x4] sm:$0xf]
  %v53 = vld [vmem:[%s2 + $0x8] sm:$0xf]
  %v54 = vld [vmem:[%s2 + $0xc] sm:$0xf]
  %v55 = vld [vmem:[%s3] sm:$0x1]
  %v57 = vperm.slane %v55, 0
  %v63 = vunpack.c.l.b16 %v51
  %v64 = vunpack.c.l.b16 %v52
  %v65 = vunpack.c.l.b16 %v53
  %v66 = vunpack.c.l.b16 %v54
  %v67 = vpack.c.b16 %v64, %v63
  %v68 = vpack.c.b16 %v66, %v65
  %vm71 = vcmask 261120
  %v73 = vsel %vm71, %v50, 0
  %75 = vmatpush.bf16.msra.mxu0 0
  %76 = vmatpush.bf16.msra.mxu0 0
  %77 = vmatpush.bf16.msra.mxu0 0
  %78 = vmatpush.bf16.msra.mxu0 0
  %79 = vmatpush.bf16.msra.mxu0 0
  %80 = vmatpush.bf16.msra.mxu0 0
  %81 = vmatpush.bf16.msra.mxu0 %v68
  %82 = vmatpush.bf16.msra.mxu0 %v67
  %83 = vmatmul.bf16.gmra.mxu0 %v73
  %v84 = vpop.f32.mrf.mxu0
  %v85 = vadd.f32 %v57, %v84
  %v86 = vpop.f32.mrf.mxu0
  %v87 = vadd.f32 %v57, %v86
  %88 = vdwg.mxu0
  %v89 = vld [vmem:[%s1] sm:$0x3]
  %v90 = vsub.f32 1.0, %v89
  %v91 = vmul.f32 %v90, -1e+09
  %v92 = vmul.f32 %v85, 0.25
  %v93 = vmul.f32 %v87, 0.25
  %v94 = vpack.c.bf16 %v92, %v92
  %v95 = vpack.c.bf16 %v93, %v93
  %v96 = vpack.c.bf16 %v85, %v85
  %v97 = vpack.c.bf16 %v87, %v87
  %v99 = vrot.slane %v91, 1
  %v100 = vperm.slane %v91, 0
  %v101 = vperm.slane %v99, 0
  %v105 = vunpack.c.l.b16 %v96
  %v106 = vpack.c.b16 %v105, %v105
  %107 = vrot.lane.b32.xlu0 %v106, 96
  %v108 = vpop.permute.xlu0 %107
  %vm109 = vcmask 130048
  %v111 = vsel %vm109, %v94, 0
  %v114 = vsel %vm109, %v108, 0
  %116 = vmatpush.bf16.xpose.msra.mxu0 0
  %117 = vmatpush.bf16.xpose.msra.mxu0 0
  %118 = vmatpush.bf16.xpose.msra.mxu0 0
  %119 = vmatpush.bf16.xpose.msra.mxu0 0
  %120 = vmatpush.bf16.xpose.msra.mxu0 0
  %121 = vmatpush.bf16.xpose.msra.mxu0 0
  %122 = vmatpush.bf16.xpose.msra.mxu0 0
  %123 = vmatpush.bf16.xpose.msra.mxu0 %v114
  %124 = vmatmul.bf16.gmra.mxu0 %v111
  %v125 = vpop.f32.mrf.mxu0
  %v126 = vadd.f32 %v100, %v125
  %v127 = vpop.f32.mrf.mxu0
  %128 = vdwg.mxu0
  %v130 = vunpack.c.l.b16 %v97
  %v131 = vpack.c.b16 %v130, %v130
  %132 = vrot.lane.b32.xlu0 %v131, 96
  %v133 = vpop.permute.xlu0 %132
  %v135 = vsel %vm109, %v95, 0
  %v138 = vsel %vm109, %v133, 0
  %140 = vmatpush.bf16.xpose.msra.mxu0 0
  %141 = vmatpush.bf16.xpose.msra.mxu0 0
  %142 = vmatpush.bf16.xpose.msra.mxu0 0
  %143 = vmatpush.bf16.xpose.msra.mxu0 0
  %144 = vmatpush.bf16.xpose.msra.mxu0 0
  %145 = vmatpush.bf16.xpose.msra.mxu0 0
  %146 = vmatpush.bf16.xpose.msra.mxu0 0
  %147 = vmatpush.bf16.xpose.msra.mxu0 %v138
  %148 = vmatmul.bf16.gmra.mxu0 %v135
  %v149 = vpop.f32.mrf.mxu0
  %v150 = vadd.f32 %v101, %v149
  %v151 = vpop.f32.mrf.mxu0
  %152 = vdwg.mxu0
  %vm153 = vcmask 64512
  %v154 = vsel %vm153, %v126, -inf
  %155 = vmax.xlane.f32.xlu0 %v154
  %v156 = vpop.xlane.xlu0 %155
  %v157 = vsel %vm153, %v150, -inf
  %158 = vmax.xlane.f32.xlu0 %v157
  %v159 = vpop.xlane.xlu0 %158
  %v160 = vsub.f32 %v126, %v156
  %v161 = vsub.f32 %v150, %v159
  %v162 = vmul.f32 %v160, 1.442695
  %v163 = vpow.pop %v162
  %v164 = vmul.f32 %v161, 1.442695
  %v165 = vpow.pop %v164
  %v166 = vsel %vm153, %v163, 0.0
  %167 = vadd.xlane.f32.xlu0 %v166
  %v168 = vpop.xlane.xlu0 %167
  %v169 = vsel %vm153, %v165, 0.0
  %170 = vadd.xlane.f32.xlu0 %v169
  %v171 = vpop.xlane.xlu0 %170
  %v172 = vrcp.pop %v168
  %v173 = vrcp.pop %v171
  %v174 = vmul.f32 %v163, %v172
  %v175 = vmul.f32 %v165, %v173
  %v176 = vpack.c.bf16 %v174, %v174
  %v177 = vpack.c.bf16 %v175, %v175
  %178 = vrot.lane.b32.xlu0 %v106, 64
  %v179 = vpop.permute.xlu0 %178
  %v181 = vsel %vm153, %v176, 0
  %vm183 = vcmask 1043456
  %v185 = vsel %vm183, %v179, 0
  %187 = vmatpush.bf16.msra.mxu0 0
  %188 = vmatpush.bf16.msra.mxu0 0
  %189 = vmatpush.bf16.msra.mxu0 0
  %190 = vmatpush.bf16.msra.mxu0 0
  %191 = vmatpush.bf16.msra.mxu0 0
  %192 = vmatpush.bf16.msra.mxu0 0
  %193 = vmatpush.bf16.msra.mxu0 0
  %194 = vmatpush.bf16.msra.mxu0 %v185
  %195 = vmatmul.bf16.gmra.mxu0 %v181
  %v196 = vpop.f32.mrf.mxu0
  %v197 = vadd.f32 0.0, %v196
  %v198 = vpop.f32.mrf.mxu0
  %199 = vdwg.mxu0
  %200 = vrot.lane.b32.xlu0 %v131, 64
  %v201 = vpop.permute.xlu0 %200
  %v203 = vsel %vm153, %v177, 0
  %v206 = vsel %vm183, %v201, 0
  %208 = vmatpush.bf16.msra.mxu0 0
  %209 = vmatpush.bf16.msra.mxu0 0
  %210 = vmatpush.bf16.msra.mxu0 0
  %211 = vmatpush.bf16.msra.mxu0 0
  %212 = vmatpush.bf16.msra.mxu0 0
  %213 = vmatpush.bf16.msra.mxu0 0
  %214 = vmatpush.bf16.msra.mxu0 0
  %215 = vmatpush.bf16.msra.mxu0 %v206
  %216 = vmatmul.bf16.gmra.mxu0 %v203
  %v217 = vpop.f32.mrf.mxu0
  %v218 = vadd.f32 0.0, %v217
  %v219 = vpop.f32.mrf.mxu0
  %220 = vdwg.mxu0
  %v222 = vunpack.c.l.b16 %v94
  %v223 = vpack.c.b16 %v222, %v222
  %224 = vrot.lane.b32.xlu0 %v223, 112
  %v225 = vpop.permute.xlu0 %224
  %226 = vrot.lane.b32.xlu0 %v106, 80
  %v227 = vpop.permute.xlu0 %226
  %v229 = vsel %vm109, %v225, 0
  %v232 = vsel %vm109, %v227, 0
  %234 = vmatpush.bf16.xpose.msra.mxu0 0
  %235 = vmatpush.bf16.xpose.msra.mxu0 0
  %236 = vmatpush.bf16.xpose.msra.mxu0 0
  %237 = vmatpush.bf16.xpose.msra.mxu0 0
  %238 = vmatpush.bf16.xpose.msra.mxu0 0
  %239 = vmatpush.bf16.xpose.msra.mxu0 0
  %240 = vmatpush.bf16.xpose.msra.mxu0 0
  %241 = vmatpush.bf16.xpose.msra.mxu0 %v232
  %242 = vmatmul.bf16.gmra.mxu0 %v229
  %v243 = vpop.f32.mrf.mxu0
  %v244 = vadd.f32 %v100, %v243
  %v245 = vpop.f32.mrf.mxu0
  %246 = vdwg.mxu0
  %v248 = vunpack.c.l.b16 %v95
  %v249 = vpack.c.b16 %v248, %v248
  %250 = vrot.lane.b32.xlu0 %v249, 112
  %v251 = vpop.permute.xlu0 %250
  %252 = vrot.lane.b32.xlu0 %v131, 80
  %v253 = vpop.permute.xlu0 %252
  %v255 = vsel %vm109, %v251, 0
  %v258 = vsel %vm109, %v253, 0
  %260 = vmatpush.bf16.xpose.msra.mxu0 0
  %261 = vmatpush.bf16.xpose.msra.mxu0 0
  %262 = vmatpush.bf16.xpose.msra.mxu0 0
  %263 = vmatpush.bf16.xpose.msra.mxu0 0
  %264 = vmatpush.bf16.xpose.msra.mxu0 0
  %265 = vmatpush.bf16.xpose.msra.mxu0 0
  %266 = vmatpush.bf16.xpose.msra.mxu0 0
  %267 = vmatpush.bf16.xpose.msra.mxu0 %v258
  %268 = vmatmul.bf16.gmra.mxu0 %v255
  %v269 = vpop.f32.mrf.mxu0
  %v270 = vadd.f32 %v101, %v269
  %v271 = vpop.f32.mrf.mxu0
  %272 = vdwg.mxu0
  %v273 = vsel %vm153, %v244, -inf
  %274 = vmax.xlane.f32.xlu0 %v273
  %v275 = vpop.xlane.xlu0 %274
  %v276 = vsel %vm153, %v270, -inf
  %277 = vmax.xlane.f32.xlu0 %v276
  %v278 = vpop.xlane.xlu0 %277
  %v279 = vsub.f32 %v244, %v275
  %v280 = vsub.f32 %v270, %v278
  %v281 = vmul.f32 %v279, 1.442695
  %v282 = vpow.pop %v281
  %v283 = vmul.f32 %v280, 1.442695
  %v284 = vpow.pop %v283
  %v285 = vsel %vm153, %v282, 0.0
  %286 = vadd.xlane.f32.xlu0 %v285
  %v287 = vpop.xlane.xlu0 %286
  %v288 = vsel %vm153, %v284, 0.0
  %289 = vadd.xlane.f32.xlu0 %v288
  %v290 = vpop.xlane.xlu0 %289
  %v291 = vrcp.pop %v287
  %v292 = vrcp.pop %v290
  %v293 = vmul.f32 %v282, %v291
  %v294 = vmul.f32 %v284, %v292
  %v295 = vpack.c.bf16 %v293, %v293
  %v296 = vpack.c.bf16 %v294, %v294
  %297 = vrot.lane.b32.xlu0 %v106, 48
  %v298 = vpop.permute.xlu0 %297
  %v300 = vsel %vm153, %v295, 0
  %v303 = vsel %vm183, %v298, 0
  %305 = vmatpush.bf16.msra.mxu0 0
  %306 = vmatpush.bf16.msra.mxu0 0
  %307 = vmatpush.bf16.msra.mxu0 0
  %308 = vmatpush.bf16.msra.mxu0 0
  %309 = vmatpush.bf16.msra.mxu0 0
  %310 = vmatpush.bf16.msra.mxu0 0
  %311 = vmatpush.bf16.msra.mxu0 0
  %312 = vmatpush.bf16.msra.mxu0 %v303
  %313 = vmatmul.bf16.gmra.mxu0 %v300
  %v314 = vpop.f32.mrf.mxu0
  %v315 = vadd.f32 0.0, %v314
  %v316 = vpop.f32.mrf.mxu0
  %317 = vdwg.mxu0
  %318 = vrot.lane.b32.xlu0 %v131, 48
  %v319 = vpop.permute.xlu0 %318
  %v321 = vsel %vm153, %v296, 0
  %v324 = vsel %vm183, %v319, 0
  %326 = vmatpush.bf16.msra.mxu0 0
  %327 = vmatpush.bf16.msra.mxu0 0
  %328 = vmatpush.bf16.msra.mxu0 0
  %329 = vmatpush.bf16.msra.mxu0 0
  %330 = vmatpush.bf16.msra.mxu0 0
  %331 = vmatpush.bf16.msra.mxu0 0
  %332 = vmatpush.bf16.msra.mxu0 0
  %333 = vmatpush.bf16.msra.mxu0 %v324
  %334 = vmatmul.bf16.gmra.mxu0 %v321
  %v335 = vpop.f32.mrf.mxu0
  %v336 = vadd.f32 0.0, %v335
  %v337 = vpop.f32.mrf.mxu0
  %338 = vdwg.mxu0
  %341 = vrot.lane.b32.xlu0 %v315, 16
  %v342 = vpop.permute.xlu0 %341
  %343 = vrot.lane.b32.xlu0 %v336, 16
  %v344 = vpop.permute.xlu0 %343
  %v347 = vsel %vm109, %v197, %v342
  %v348 = vsel %vm109, %v218, %v344
  %v349 = vpack.c.bf16 %v348, %v347
  %v350 = vld [vmem:[%s4] sm:$0xf]
  %v351 = vld [vmem:[%s4 + $0x4] sm:$0xf]
  %v352 = vld [vmem:[%s4 + $0x8] sm:$0xf]
  %v353 = vld [vmem:[%s4 + $0xc] sm:$0xf]
  %v354 = vld [vmem:[%s5] sm:$0x1]
  %v356 = vperm.slane %v354, 0
  %v362 = vunpack.c.l.b16 %v350
  %v363 = vunpack.c.l.b16 %v351
  %v364 = vunpack.c.l.b16 %v352
  %v365 = vunpack.c.l.b16 %v353
  %v366 = vpack.c.b16 %v363, %v362
  %v367 = vpack.c.b16 %v365, %v364
  %v371 = vsel %vm71, %v349, 0
  %373 = vmatpush.bf16.msra.mxu0 0
  %374 = vmatpush.bf16.msra.mxu0 0
  %375 = vmatpush.bf16.msra.mxu0 0
  %376 = vmatpush.bf16.msra.mxu0 0
  %377 = vmatpush.bf16.msra.mxu0 0
  %378 = vmatpush.bf16.msra.mxu0 0
  %379 = vmatpush.bf16.msra.mxu0 %v367
  %380 = vmatpush.bf16.msra.mxu0 %v366
  %381 = vmatmul.bf16.gmra.mxu0 %v371
  %v382 = vpop.f32.mrf.mxu0
  %v383 = vadd.f32 %v356, %v382
  %v384 = vpop.f32.mrf.mxu0
  %v385 = vadd.f32 %v356, %v384
  %386 = vdwg.mxu0
  %v387 = vadd.f32 %v383, %v48
  %v388 = vadd.f32 %v385, %v49
  %v389 = vld [vmem:[%s6] sm:$0x1]
  %v390 = vld [vmem:[%s7] sm:$0x1]
  %v391 = vsel %vm71, %v387, 0.0
  %392 = vadd.xlane.f32.xlu0 %v391
  %v393 = vpop.xlane.xlu0 %392
  %v394 = vsel %vm71, %v388, 0.0
  %395 = vadd.xlane.f32.xlu0 %v394
  %v396 = vpop.xlane.xlu0 %395
  %v397 = vrcp.pop 32.0
  %v398 = vmul.f32 32.0, %v397
  %v399 = vsub.f32 1.0, %v398
  %v400 = vmul.f32 %v397, %v399
  %v401 = vadd.f32 %v397, %v400
  %vm402 = vweird.f32 %v397
  %v403 = vsel %vm402, %v397, %v401
  %v404 = vmul.f32 %v393, %v403
  %v405 = vmul.f32 %v396, %v403
  %v406 = vsub.f32 %v387, %v404
  %v407 = vsub.f32 %v388, %v405
  %v408 = vmul.f32 %v406, %v406
  %v409 = vmul.f32 %v407, %v407
  %v410 = vsel %vm71, %v408, 0.0
  %411 = vadd.xlane.f32.xlu0 %v410
  %v412 = vpop.xlane.xlu0 %411
  %v413 = vsel %vm71, %v409, 0.0
  %414 = vadd.xlane.f32.xlu0 %v413
  %v415 = vpop.xlane.xlu0 %414
  %v416 = vmul.f32 %v412, %v403
  %v417 = vmul.f32 %v415, %v403
  %v418 = vadd.f32 %v416, 1e-12
  %v419 = vadd.f32 %v417, 1e-12
  %v420 = vrsqrt.pop %v418
  %v421 = vmul.f32 %v420, %v418
  %v422 = vmul.f32 %v421, %v420
  %v423 = vmul.f32 0.5, %v422
  %v424 = vsub.f32 1.5, %v423
  %v425 = vmul.f32 %v420, %v424
  %vm426 = vweird.f32 %v418
  %vm427 = vweird.f32 %v420
  %vm428 = vmor %vm426, %vm427
  %v429 = vsel %vm428, %v420, %v425
  %v430 = vrsqrt.pop %v419
  %v431 = vmul.f32 %v430, %v419
  %v432 = vmul.f32 %v431, %v430
  %v433 = vmul.f32 0.5, %v432
  %v434 = vsub.f32 1.5, %v433
  %v435 = vmul.f32 %v430, %v434
  %vm436 = vweird.f32 %v419
  %vm437 = vweird.f32 %v430
  %vm438 = vmor %vm436, %vm437
  %v439 = vsel %vm438, %v430, %v435
  %v440 = vmul.f32 %v406, %v429
  %v441 = vmul.f32 %v407, %v439
  %v443 = vperm.slane %v389, 0
  %v445 = vmul.f32 %v440, %v443
  %v446 = vmul.f32 %v441, %v443
  %v448 = vperm.slane %v390, 0
  %v450 = vadd.f32 %v445, %v448
  %v451 = vadd.f32 %v446, %v448
  %v452 = vpack.c.bf16 %v451, %v450
  %v453 = vld [vmem:[%s8] sm:$0xf]
  %v454 = vld [vmem:[%s8 + $0x4] sm:$0xf]
  %v455 = vld [vmem:[%s8 + $0x8] sm:$0xf]
  %v456 = vld [vmem:[%s8 + $0xc] sm:$0xf]
  %v457 = vld [vmem:[%s9] sm:$0x1]
  %v459 = vperm.slane %v457, 0
  %v465 = vunpack.c.l.b16 %v453
  %v466 = vunpack.c.l.b16 %v454
  %v467 = vunpack.c.l.b16 %v455
  %v468 = vunpack.c.l.b16 %v456
  %v469 = vpack.c.b16 %v466, %v465
  %v470 = vpack.c.b16 %v468, %v467
  %v474 = vsel %vm71, %v452, 0
  %476 = vmatpush.bf16.msra.mxu0 0
  %477 = vmatpush.bf16.msra.mxu0 0
  %478 = vmatpush.bf16.msra.mxu0 0
  %479 = vmatpush.bf16.msra.mxu0 0
  %480 = vmatpush.bf16.msra.mxu0 0
  %481 = vmatpush.bf16.msra.mxu0 0
  %482 = vmatpush.bf16.msra.mxu0 %v470
  %483 = vmatpush.bf16.msra.mxu0 %v469
  %484 = vmatmul.bf16.gmra.mxu0 %v474
  %v485 = vpop.f32.mrf.mxu0
  %v486 = vadd.f32 %v459, %v485
  %v487 = vpop.f32.mrf.mxu0
  %v488 = vadd.f32 %v459, %v487
  %489 = vdwg.mxu0
  %v490 = vmul.f32 %v486, 0.5
  %v491 = vmul.f32 %v488, 0.5
  %v492 = vmul.f32 %v486, 0.044715
  %v493 = vmul.f32 %v488, 0.044715
  %v494 = vmul.f32 %v492, %v486
  %v495 = vmul.f32 %v493, %v488
  %v496 = vmul.f32 %v494, %v486
  %v497 = vmul.f32 %v495, %v488
  %v498 = vadd.f32 %v486, %v496
  %v499 = vadd.f32 %v488, %v497
  %v500 = vmul.f32 %v498, 0.7978846
  %v501 = vmul.f32 %v499, 0.7978846
  %v502 = vtanh.pop %v500
  %v503 = vtanh.pop %v501
  %v504 = vadd.f32 %v502, 1.0
  %v505 = vadd.f32 %v503, 1.0
  %v506 = vmul.f32 %v490, %v504
  %v507 = vmul.f32 %v491, %v505
  %v508 = vpack.c.bf16 %v507, %v506
  %v509 = vld [vmem:[%s10] sm:$0xf]
  %v510 = vld [vmem:[%s10 + $0x4] sm:$0xf]
  %v511 = vld [vmem:[%s10 + $0x8] sm:$0xf]
  %v512 = vld [vmem:[%s10 + $0xc] sm:$0xf]
  %v513 = vld [vmem:[%s10 + $0x10] sm:$0xf]
  %v514 = vld [vmem:[%s10 + $0x14] sm:$0xf]
  %v515 = vld [vmem:[%s10 + $0x18] sm:$0xf]
  %v516 = vld [vmem:[%s10 + $0x1c] sm:$0xf]
  %v517 = vld [vmem:[%s10 + $0x20] sm:$0xf]
  %v518 = vld [vmem:[%s10 + $0x24] sm:$0xf]
  %v519 = vld [vmem:[%s10 + $0x28] sm:$0xf]
  %v520 = vld [vmem:[%s10 + $0x2c] sm:$0xf]
  %v521 = vld [vmem:[%s10 + $0x30] sm:$0xf]
  %v522 = vld [vmem:[%s10 + $0x34] sm:$0xf]
  %v523 = vld [vmem:[%s10 + $0x38] sm:$0xf]
  %v524 = vld [vmem:[%s10 + $0x3c] sm:$0xf]
  %v525 = vld [vmem:[%s11] sm:$0x1]
  %v527 = vperm.slane %v525, 0
  %v545 = vunpack.c.l.b16 %v509
  %v546 = vunpack.c.l.b16 %v510
  %v547 = vunpack.c.l.b16 %v511
  %v548 = vunpack.c.l.b16 %v512
  %v549 = vunpack.c.l.b16 %v513
  %v550 = vunpack.c.l.b16 %v514
  %v551 = vunpack.c.l.b16 %v515
  %v552 = vunpack.c.l.b16 %v516
  %v553 = vunpack.c.l.b16 %v517
  %v554 = vunpack.c.l.b16 %v518
  %v555 = vunpack.c.l.b16 %v519
  %v556 = vunpack.c.l.b16 %v520
  %v557 = vunpack.c.l.b16 %v521
  %v558 = vunpack.c.l.b16 %v522
  %v559 = vunpack.c.l.b16 %v523
  %v560 = vunpack.c.l.b16 %v524
  %v561 = vpack.c.b16 %v546, %v545
  %v562 = vpack.c.b16 %v548, %v547
  %v563 = vpack.c.b16 %v550, %v549
  %v564 = vpack.c.b16 %v552, %v551
  %v565 = vpack.c.b16 %v554, %v553
  %v566 = vpack.c.b16 %v556, %v555
  %v567 = vpack.c.b16 %v558, %v557
  %v568 = vpack.c.b16 %v560, %v559
  %577 = vmatpush.bf16.msra.mxu0 %v568
  %578 = vmatpush.bf16.msra.mxu0 %v567
  %579 = vmatpush.bf16.msra.mxu0 %v566
  %580 = vmatpush.bf16.msra.mxu0 %v565
  %581 = vmatpush.bf16.msra.mxu0 %v564
  %582 = vmatpush.bf16.msra.mxu0 %v563
  %583 = vmatpush.bf16.msra.mxu0 %v562
  %584 = vmatpush.bf16.msra.mxu0 %v561
  %585 = vmatmul.bf16.gmra.mxu0 %v508
  %v586 = vpop.f32.mrf.mxu0
  %v587 = vadd.f32 %v527, %v586
  %v588 = vpop.f32.mrf.mxu0
  %v589 = vadd.f32 %v527, %v588
  %590 = vdwg.mxu0
  %v591 = vadd.f32 %v587, %v450
  %v592 = vadd.f32 %v589, %v451
  %v593 = vld [vmem:[%s12] sm:$0x1]
  %v594 = vld [vmem:[%s13] sm:$0x1]
  %v595 = vsel %vm71, %v591, 0.0
  %596 = vadd.xlane.f32.xlu0 %v595
  %v597 = vpop.xlane.xlu0 %596
  %v598 = vsel %vm71, %v592, 0.0
  %599 = vadd.xlane.f32.xlu0 %v598
  %v600 = vpop.xlane.xlu0 %599
  %v601 = vmul.f32 %v597, %v403
  %v602 = vmul.f32 %v600, %v403
  %v603 = vsub.f32 %v591, %v601
  %v604 = vsub.f32 %v592, %v602
  %v605 = vmul.f32 %v603, %v603
  %v606 = vmul.f32 %v604, %v604
  %v607 = vsel %vm71, %v605, 0.0
  %608 = vadd.xlane.f32.xlu0 %v607
  %v609 = vpop.xlane.xlu0 %608
  %v610 = vsel %vm71, %v606, 0.0
  %611 = vadd.xlane.f32.xlu0 %v610
  %v612 = vpop.xlane.xlu0 %611
  %v613 = vmul.f32 %v609, %v403
  %v614 = vmul.f32 %v612, %v403
  %v615 = vadd.f32 %v613, 1e-12
  %v616 = vadd.f32 %v614, 1e-12
  %v617 = vrsqrt.pop %v615
  %v618 = vmul.f32 %v617, %v615
  %v619 = vmul.f32 %v618, %v617
  %v620 = vmul.f32 0.5, %v619
  %v621 = vsub.f32 1.5, %v620
  %v622 = vmul.f32 %v617, %v621
  %vm623 = vweird.f32 %v615
  %vm624 = vweird.f32 %v617
  %vm625 = vmor %vm623, %vm624
  %v626 = vsel %vm625, %v617, %v622
  %v627 = vrsqrt.pop %v616
  %v628 = vmul.f32 %v627, %v616
  %v629 = vmul.f32 %v628, %v627
  %v630 = vmul.f32 0.5, %v629
  %v631 = vsub.f32 1.5, %v630
  %v632 = vmul.f32 %v627, %v631
  %vm633 = vweird.f32 %v616
  %vm634 = vweird.f32 %v627
  %vm635 = vmor %vm633, %vm634
  %v636 = vsel %vm635, %v627, %v632
  %v637 = vmul.f32 %v603, %v626
  %v638 = vmul.f32 %v604, %v636
  %v640 = vperm.slane %v593, 0
  %v642 = vmul.f32 %v637, %v640
  %v643 = vmul.f32 %v638, %v640
  %v645 = vperm.slane %v594, 0
  %v647 = vadd.f32 %v642, %v645
  %v648 = vadd.f32 %v643, %v645
  %649 = vst.msk [vmem:[%s14] sm:$0xff] %vm71, %v647
  %650 = vst.msk [vmem:[%s14 + $0x8] sm:$0xff] %vm71, %v648
  // Predicated region
  $region58: #{model_forward.5} parent=0 // pred_check
    _
  $region59: #{model_forward.5} parent=0 // pred_check_branch
    %652 = sbr.rel (0) target = $region61
  $region60: #{model_forward.5} parent=0 // pred_region
    _
  $region61: #{model_forward.5} parent=0 // pred_fallthru
    _
  // Predicated region
  $region62: #{model_forward.5} parent=0 // pred_check
    _
  $region63: #{model_forward.5} parent=0 // pred_check_branch
    %654 = sbr.rel (0) target = $region65
  $region64: #{model_forward.5} parent=0 // pred_region
    _
  $region65: #{model_forward.5} parent=0 // pred_fallthru
    _

</llo_original>
